<compile_context>
chip_gen: v6e
topology: v6e:2x2x1
jax: 0.10.0
libtpu: 0.0.40
codegen_flags: <defaults>
</compile_context>

<pallas_src>
import jax
import jax.numpy as jnp
from jax.experimental import pallas as pl
from jax.experimental.pallas import tpu as pltpu

EPS = 1e-5
LANE = 128


def _ceil_to(x, m):
    return (x + m - 1) // m * m


def _choose_row_tile(H, wp2, max_rows):
    """Largest divisor th of H with th*wp2 <= max_rows (and 8-aligned rows)."""
    for th in range(H, 0, -1):
        if H % th:
            continue
        if th == H:
            if th * wp2 <= max_rows:
                return th
            continue
        if th * wp2 <= max_rows and (th * wp2) % 8 == 0:
            return th
    return H  # fall back to the full extent (always a legal block)


# ------------------------------ Pallas kernel ------------------------------ #

def _make_stage_kernel(th, wp2, has_res, activation):
    m = th * wp2                   # matmul rows per grid step (incl. 2 junk cols/row)
    band = (th + 2) * wp2 + 2      # haloed input rows DMA'd per step

    def kernel(*refs):
        if has_res:
            x_hbm, w_ref, b_ref, res_ref, o_ref, xbuf, sem = refs
        else:
            x_hbm, w_ref, b_ref, o_ref, xbuf, sem = refs

        n = pl.program_id(0)
        i = pl.program_id(1)

        # Haloed row band of the zero-padded input for this (image, row-tile).
        copy = pltpu.make_async_copy(
            x_hbm.at[n, pl.ds(i * m, band)], xbuf, sem)
        copy.start()
        copy.wait()

        # 3x3 conv as 9 accumulated matmuls over row-shifted slabs of the band.
        acc = None
        for kh in range(3):
            for kw in range(3):
                slab = xbuf[pl.ds(kh * wp2 + kw, m), :]
                part = jnp.dot(slab, w_ref[kh * 3 + kw],
                               preferred_element_type=jnp.float32)
                acc = part if acc is None else acc + part

        y = acc + b_ref[...]                         # folded BN bias
        if has_res:
            y = y + res_ref[0].astype(jnp.float32)   # residual add
        y = jnp.maximum(y, 0.0) if activation == "relu" else jnp.tanh(y)
        o_ref[0] = y.astype(o_ref.dtype)

    return kernel


# ------------------------------- glue (JAX) -------------------------------- #

def _fold_bn(gamma, beta, mean, var):
    scale = gamma / jnp.sqrt(var + EPS)
    return scale, beta - mean * scale


def _prep_weight(w_ct, scale, cin_p, cout_p, dtype):
    """PyTorch ConvTranspose2d weight (Cin, Cout, 3, 3) -> (9, cin_p, cout_p)
    conv-equivalent taps (spatial flip, channel swap, BN scale folded)."""
    cin, cout = w_ct.shape[0], w_ct.shape[1]
    w_conv = jnp.transpose(w_ct[:, :, ::-1, ::-1], (2, 3, 0, 1))   # (3,3,Cin,Cout)
    w_conv = w_conv * scale[None, None, None, :]
    w_full = jnp.zeros((3, 3, cin_p, cout_p), jnp.float32)
    w_full = w_full.at[:, :, :cin, :cout].set(w_conv.astype(jnp.float32))
    return w_full.reshape(9, cin_p, cout_p).astype(dtype)


def _conv_t3x3_bn_act(x_nhwc, w_ct, scale, bias, res_nhwc, activation,
                      max_tile_rows, compute_dtype):
    """One stage: ConvTranspose2d(3x3, s=1, p=1, no bias) + folded BN +
    optional residual + activation.  NHWC in/out."""
    N, H, W, Cin = x_nhwc.shape
    Cout = w_ct.shape[1]
    cin_p = _ceil_to(Cin, LANE)
    cout_p = _ceil_to(Cout, LANE)
    wp2 = W + 2
    th = _choose_row_tile(H, wp2, max_tile_rows)
    n_h = H // th
    m = th * wp2
    band = (th + 2) * wp2 + 2

    # Zero-padded input flattened to (N, rows, cin_p).  The extra bottom pad
    # row gives the last row-tile's halo DMA (and corner taps) 2 rows of slack.
    x_pad = jnp.pad(x_nhwc, ((0, 0), (1, 2), (1, 1), (0, cin_p - Cin)))
    x_flat = x_pad.reshape(N, (H + 3) * wp2, cin_p).astype(compute_dtype)

    w_taps = _prep_weight(w_ct, scale, cin_p, cout_p, compute_dtype)
    b_row = jnp.zeros((1, cout_p), jnp.float32).at[0, :Cout].set(
        bias.astype(jnp.float32))

    inputs = [x_flat, w_taps, b_row]
    in_specs = [
        pl.BlockSpec(memory_space=pl.ANY),                        # manual halo DMA
        pl.BlockSpec((9, cin_p, cout_p), lambda n, i: (0, 0, 0)),
        pl.BlockSpec((1, cout_p), lambda n, i: (0, 0)),
    ]
    has_res = res_nhwc is not None
    if has_res:
        r_pad = jnp.pad(res_nhwc, ((0, 0), (0, 0), (0, 2), (0, cout_p - Cout)))
        inputs.append(r_pad.reshape(N, H * wp2, cout_p))
        in_specs.append(pl.BlockSpec((1, m, cout_p), lambda n, i: (n, i, 0)))

    out_flat = pl.pallas_call(
        _make_stage_kernel(th, wp2, has_res, activation),
        out_shape=jax.ShapeDtypeStruct((N, H * wp2, cout_p), x_nhwc.dtype),
        grid=(N, n_h),
        in_specs=in_specs,
        out_specs=pl.BlockSpec((1, m, cout_p), lambda n, i: (n, i, 0)),
        scratch_shapes=[
            pltpu.VMEM((band, cin_p), compute_dtype),
            pltpu.SemaphoreType.DMA,
        ],
        compiler_params=pltpu.CompilerParams(
            dimension_semantics=("parallel", "parallel"),
            vmem_limit_bytes=32 * 1024 * 1024,
        ),
    )(*inputs)

    # Drop the 2 junk width columns per row and the channel padding.
    return out_flat.reshape(N, H, wp2, cout_p)[:, :, :W, :Cout]


def up_basic_block_forward(x_nchw, params, activation="relu",
                           max_tile_rows=1024, compute_dtype=jnp.float32):
    """UpBasicBlock.forward (stride=1, upsample=None).  NCHW in/out."""
    x = jnp.transpose(x_nchw, (0, 2, 3, 1))               # NCHW -> NHWC
    s1, b1 = _fold_bn(params["bn1_gamma"], params["bn1_beta"],
                      params["bn1_mean"], params["bn1_var"])
    s2, b2 = _fold_bn(params["bn2_gamma"], params["bn2_beta"],
                      params["bn2_mean"], params["bn2_var"])
    h = _conv_t3x3_bn_act(x, params["convT1_w"], s1, b1, None,
                          activation, max_tile_rows, compute_dtype)
    out = _conv_t3x3_bn_act(h, params["convT2_w"], s2, b2, x,
                            activation, max_tile_rows, compute_dtype)
    return jnp.transpose(out, (0, 3, 1, 2))                # NHWC -> NCHW


# ----------------------------- reference (XLA) ------------------------------ #

def _reference_forward(x_nchw, params, activation="relu"):
    act = jax.nn.relu if activation == "relu" else jnp.tanh

    def conv_t(x, w_ct):
        # ConvTranspose2d(k=3, s=1, p=1, output_padding=0, bias=False)
        w_flip = w_ct[:, :, ::-1, ::-1]
        return jax.lax.conv_general_dilated(
            x, w_flip, window_strides=(1, 1), padding=((1, 1), (1, 1)),
            dimension_numbers=("NCHW", "IOHW", "NCHW"))

    def bn(x, g, b, m, v):
        g, b, m, v = (t.reshape(1, -1, 1, 1) for t in (g, b, m, v))
        return (x - m) / jnp.sqrt(v + EPS) * g + b

    out = act(bn(conv_t(x_nchw, params["convT1_w"]),
                 params["bn1_gamma"], params["bn1_beta"],
                 params["bn1_mean"], params["bn1_var"]))
    out = bn(conv_t(out, params["convT2_w"]),
             params["bn2_gamma"], params["bn2_beta"],
             params["bn2_mean"], params["bn2_var"])
    return act(out + x_nchw)


# ---------------------------------- main ------------------------------------ #

if __name__ == "__main__":
    N, C, H, W = 2, 8, 16, 16       # inplanes == planes, stride=1, upsample=None
    planes = C

    key = jax.random.PRNGKey(0)
    ks = jax.random.split(key, 9)
    params = {
        # ConvTranspose2d weights: (in_channels, out_channels, kH, kW)
        "convT1_w": 0.1 * jax.random.normal(ks[0], (C, planes, 3, 3), jnp.float32),
        "convT2_w": 0.1 * jax.random.normal(ks[1], (planes, planes, 3, 3), jnp.float32),
        "bn1_gamma": 1.0 + 0.1 * jax.random.normal(ks[2], (planes,), jnp.float32),
        "bn1_beta": 0.1 * jax.random.normal(ks[3], (planes,), jnp.float32),
        "bn1_mean": 0.1 * jax.random.normal(ks[4], (planes,), jnp.float32),
        "bn1_var": jnp.abs(jax.random.normal(ks[5], (planes,), jnp.float32)) + 0.5,
        "bn2_gamma": 1.0 + 0.1 * jax.random.normal(ks[6], (planes,), jnp.float32),
        "bn2_beta": 0.1 * jax.random.normal(ks[7], (planes,), jnp.float32),
        "bn2_mean": jnp.zeros((planes,), jnp.float32),
        "bn2_var": jnp.ones((planes,), jnp.float32),
    }

    x = jax.random.normal(ks[8], (N, C, H, W), jnp.float32)

    # max_tile_rows=160 -> 8 image rows per tile -> grid (2 images x 2 row-tiles).
    fwd = jax.jit(lambda xx: up_basic_block_forward(xx, params, max_tile_rows=160))
    out = jax.block_until_ready(fwd(x))
    ref = jax.block_until_ready(_reference_forward(x, params))

    assert out.shape == (N, planes, H, W), out.shape
    max_err = float(jnp.max(jnp.abs(out - ref)))
    assert jnp.allclose(out, ref, atol=3e-2, rtol=3e-2), max_err
    print("KERNEL_OK")
</pallas_src>

<mosaic_0001>
module attributes {stable_mosaic.version = 11 : i64} {
  func.func @kernel(%arg0: i32, %arg1: i32, %arg2: memref<2x342x128xf32, #tpu.memory_space<any>>, %arg3: memref<9x128x128xf32, #tpu.memory_space<vmem>>, %arg4: memref<1x128xf32, #tpu.memory_space<vmem>>, %arg5: memref<1x144x128xf32, #tpu.memory_space<vmem>>, %arg6: memref<182x128xf32, #tpu.memory_space<vmem>>, %arg7: memref<!tpu.dma_semaphore, #tpu.memory_space<semaphore_mem>>) attributes {dimension_semantics = [#tpu.dimension_semantics<parallel>, #tpu.dimension_semantics<parallel>], iteration_bounds = array<i64: 2, 2>, scalar_prefetch = 0 : i64, scratch_operands = 2 : i64, tpu.core_type = #tpu.core_type<tc>, window_params = [{}, {pipeline_mode = #tpu.pipeline_mode<synchronous>, transform_indices = @transform_1, window_bounds = array<i64: 9, 128, 128>}, {pipeline_mode = #tpu.pipeline_mode<synchronous>, transform_indices = @transform_2, window_bounds = array<i64: 1, 128>}, {transform_indices = @transform_3, window_bounds = array<i64: 1, 144, 128>}]} {
    %c144_i32 = arith.constant 144 : i32
    %0 = arith.muli %arg1, %c144_i32 : i32
    %c0_i32 = arith.constant 0 : i32
    %1 = tpu.memref_slice %arg2[%arg0, %0, %c0_i32] : memref<2x342x128xf32, #tpu.memory_space<any>> -> memref<1x182x128xf32, #tpu.memory_space<any>>
    %2 = tpu.memref_squeeze %1 : memref<1x182x128xf32, #tpu.memory_space<any>> -> memref<182x128xf32, #tpu.memory_space<any>>
    tpu.enqueue_dma source(%2 : memref<182x128xf32, #tpu.memory_space<any>>) target(%arg6 : memref<182x128xf32, #tpu.memory_space<vmem>>) target_semaphore(%arg7 : memref<!tpu.dma_semaphore, #tpu.memory_space<semaphore_mem>>)
    %c0_i32_0 = arith.constant 0 : i32
    %3 = tpu.memref_slice %arg2[%arg0, %0, %c0_i32_0] : memref<2x342x128xf32, #tpu.memory_space<any>> -> memref<1x182x128xf32, #tpu.memory_space<any>>
    %4 = tpu.memref_squeeze %3 : memref<1x182x128xf32, #tpu.memory_space<any>> -> memref<182x128xf32, #tpu.memory_space<any>>
    tpu.wait_dma2 semaphore(%arg7 : memref<!tpu.dma_semaphore, #tpu.memory_space<semaphore_mem>>) src(%4 : memref<182x128xf32, #tpu.memory_space<any>>) dst(%arg6 : memref<182x128xf32, #tpu.memory_space<vmem>>)
    %c0 = arith.constant 0 : index
    %c0_1 = arith.constant 0 : index
    %5 = vector.load %arg6[%c0, %c0_1] : memref<182x128xf32, #tpu.memory_space<vmem>>, vector<144x128xf32>
    %c0_2 = arith.constant 0 : index
    %c0_3 = arith.constant 0 : index
    %c0_4 = arith.constant 0 : index
    %6 = vector.load %arg3[%c0_2, %c0_3, %c0_4] : memref<9x128x128xf32, #tpu.memory_space<vmem>>, vector<1x128x128xf32>
    %7 = vector.shape_cast %6 : vector<1x128x128xf32> to vector<128x128xf32>
    %cst = arith.constant dense<0.000000e+00> : vector<144x128xf32>
    %8 = tpu.matmul %5, %7, %cst {dimension_numbers = #tpu.dot_dimension_numbers<[1], [0], [0], [1], [0, 0, 1, 1], [], []>} : vector<144x128xf32>, vector<128x128xf32>, vector<144x128xf32> -> vector<144x128xf32>
    %c1 = arith.constant 1 : index
    %c0_5 = arith.constant 0 : index
    %9 = vector.load %arg6[%c1, %c0_5] : memref<182x128xf32, #tpu.memory_space<vmem>>, vector<144x128xf32>
    %c1_6 = arith.constant 1 : index
    %c0_7 = arith.constant 0 : index
    %c0_8 = arith.constant 0 : index
    %10 = vector.load %arg3[%c1_6, %c0_7, %c0_8] : memref<9x128x128xf32, #tpu.memory_space<vmem>>, vector<1x128x128xf32>
    %11 = vector.shape_cast %10 : vector<1x128x128xf32> to vector<128x128xf32>
    %cst_9 = arith.constant dense<0.000000e+00> : vector<144x128xf32>
    %12 = tpu.matmul %9, %11, %cst_9 {dimension_numbers = #tpu.dot_dimension_numbers<[1], [0], [0], [1], [0, 0, 1, 1], [], []>} : vector<144x128xf32>, vector<128x128xf32>, vector<144x128xf32> -> vector<144x128xf32>
    %13 = arith.addf %8, %12 : vector<144x128xf32>
    %c2 = arith.constant 2 : index
    %c0_10 = arith.constant 0 : index
    %14 = vector.load %arg6[%c2, %c0_10] : memref<182x128xf32, #tpu.memory_space<vmem>>, vector<144x128xf32>
    %c2_11 = arith.constant 2 : index
    %c0_12 = arith.constant 0 : index
    %c0_13 = arith.constant 0 : index
    %15 = vector.load %arg3[%c2_11, %c0_12, %c0_13] : memref<9x128x128xf32, #tpu.memory_space<vmem>>, vector<1x128x128xf32>
    %16 = vector.shape_cast %15 : vector<1x128x128xf32> to vector<128x128xf32>
    %cst_14 = arith.constant dense<0.000000e+00> : vector<144x128xf32>
    %17 = tpu.matmul %14, %16, %cst_14 {dimension_numbers = #tpu.dot_dimension_numbers<[1], [0], [0], [1], [0, 0, 1, 1], [], []>} : vector<144x128xf32>, vector<128x128xf32>, vector<144x128xf32> -> vector<144x128xf32>
    %18 = arith.addf %13, %17 : vector<144x128xf32>
    %c18 = arith.constant 18 : index
    %c0_15 = arith.constant 0 : index
    %19 = vector.load %arg6[%c18, %c0_15] : memref<182x128xf32, #tpu.memory_space<vmem>>, vector<144x128xf32>
    %c3 = arith.constant 3 : index
    %c0_16 = arith.constant 0 : index
    %c0_17 = arith.constant 0 : index
    %20 = vector.load %arg3[%c3, %c0_16, %c0_17] : memref<9x128x128xf32, #tpu.memory_space<vmem>>, vector<1x128x128xf32>
    %21 = vector.shape_cast %20 : vector<1x128x128xf32> to vector<128x128xf32>
    %cst_18 = arith.constant dense<0.000000e+00> : vector<144x128xf32>
    %22 = tpu.matmul %19, %21, %cst_18 {dimension_numbers = #tpu.dot_dimension_numbers<[1], [0], [0], [1], [0, 0, 1, 1], [], []>} : vector<144x128xf32>, vector<128x128xf32>, vector<144x128xf32> -> vector<144x128xf32>
    %23 = arith.addf %18, %22 : vector<144x128xf32>
    %c19 = arith.constant 19 : index
    %c0_19 = arith.constant 0 : index
    %24 = vector.load %arg6[%c19, %c0_19] : memref<182x128xf32, #tpu.memory_space<vmem>>, vector<144x128xf32>
    %c4 = arith.constant 4 : index
    %c0_20 = arith.constant 0 : index
    %c0_21 = arith.constant 0 : index
    %25 = vector.load %arg3[%c4, %c0_20, %c0_21] : memref<9x128x128xf32, #tpu.memory_space<vmem>>, vector<1x128x128xf32>
    %26 = vector.shape_cast %25 : vector<1x128x128xf32> to vector<128x128xf32>
    %cst_22 = arith.constant dense<0.000000e+00> : vector<144x128xf32>
    %27 = tpu.matmul %24, %26, %cst_22 {dimension_numbers = #tpu.dot_dimension_numbers<[1], [0], [0], [1], [0, 0, 1, 1], [], []>} : vector<144x128xf32>, vector<128x128xf32>, vector<144x128xf32> -> vector<144x128xf32>
    %28 = arith.addf %23, %27 : vector<144x128xf32>
    %c20 = arith.constant 20 : index
    %c0_23 = arith.constant 0 : index
    %29 = vector.load %arg6[%c20, %c0_23] : memref<182x128xf32, #tpu.memory_space<vmem>>, vector<144x128xf32>
    %c5 = arith.constant 5 : index
    %c0_24 = arith.constant 0 : index
    %c0_25 = arith.constant 0 : index
    %30 = vector.load %arg3[%c5, %c0_24, %c0_25] : memref<9x128x128xf32, #tpu.memory_space<vmem>>, vector<1x128x128xf32>
    %31 = vector.shape_cast %30 : vector<1x128x128xf32> to vector<128x128xf32>
    %cst_26 = arith.constant dense<0.000000e+00> : vector<144x128xf32>
    %32 = tpu.matmul %29, %31, %cst_26 {dimension_numbers = #tpu.dot_dimension_numbers<[1], [0], [0], [1], [0, 0, 1, 1], [], []>} : vector<144x128xf32>, vector<128x128xf32>, vector<144x128xf32> -> vector<144x128xf32>
    %33 = arith.addf %28, %32 : vector<144x128xf32>
    %c36 = arith.constant 36 : index
    %c0_27 = arith.constant 0 : index
    %34 = vector.load %arg6[%c36, %c0_27] : memref<182x128xf32, #tpu.memory_space<vmem>>, vector<144x128xf32>
    %c6 = arith.constant 6 : index
    %c0_28 = arith.constant 0 : index
    %c0_29 = arith.constant 0 : index
    %35 = vector.load %arg3[%c6, %c0_28, %c0_29] : memref<9x128x128xf32, #tpu.memory_space<vmem>>, vector<1x128x128xf32>
    %36 = vector.shape_cast %35 : vector<1x128x128xf32> to vector<128x128xf32>
    %cst_30 = arith.constant dense<0.000000e+00> : vector<144x128xf32>
    %37 = tpu.matmul %34, %36, %cst_30 {dimension_numbers = #tpu.dot_dimension_numbers<[1], [0], [0], [1], [0, 0, 1, 1], [], []>} : vector<144x128xf32>, vector<128x128xf32>, vector<144x128xf32> -> vector<144x128xf32>
    %38 = arith.addf %33, %37 : vector<144x128xf32>
    %c37 = arith.constant 37 : index
    %c0_31 = arith.constant 0 : index
    %39 = vector.load %arg6[%c37, %c0_31] : memref<182x128xf32, #tpu.memory_space<vmem>>, vector<144x128xf32>
    %c7 = arith.constant 7 : index
    %c0_32 = arith.constant 0 : index
    %c0_33 = arith.constant 0 : index
    %40 = vector.load %arg3[%c7, %c0_32, %c0_33] : memref<9x128x128xf32, #tpu.memory_space<vmem>>, vector<1x128x128xf32>
    %41 = vector.shape_cast %40 : vector<1x128x128xf32> to vector<128x128xf32>
    %cst_34 = arith.constant dense<0.000000e+00> : vector<144x128xf32>
    %42 = tpu.matmul %39, %41, %cst_34 {dimension_numbers = #tpu.dot_dimension_numbers<[1], [0], [0], [1], [0, 0, 1, 1], [], []>} : vector<144x128xf32>, vector<128x128xf32>, vector<144x128xf32> -> vector<144x128xf32>
    %43 = arith.addf %38, %42 : vector<144x128xf32>
    %c38 = arith.constant 38 : index
    %c0_35 = arith.constant 0 : index
    %44 = vector.load %arg6[%c38, %c0_35] : memref<182x128xf32, #tpu.memory_space<vmem>>, vector<144x128xf32>
    %c8 = arith.constant 8 : index
    %c0_36 = arith.constant 0 : index
    %c0_37 = arith.constant 0 : index
    %45 = vector.load %arg3[%c8, %c0_36, %c0_37] : memref<9x128x128xf32, #tpu.memory_space<vmem>>, vector<1x128x128xf32>
    %46 = vector.shape_cast %45 : vector<1x128x128xf32> to vector<128x128xf32>
    %cst_38 = arith.constant dense<0.000000e+00> : vector<144x128xf32>
    %47 = tpu.matmul %44, %46, %cst_38 {dimension_numbers = #tpu.dot_dimension_numbers<[1], [0], [0], [1], [0, 0, 1, 1], [], []>} : vector<144x128xf32>, vector<128x128xf32>, vector<144x128xf32> -> vector<144x128xf32>
    %48 = arith.addf %43, %47 : vector<144x128xf32>
    %c0_39 = arith.constant 0 : index
    %c0_40 = arith.constant 0 : index
    %49 = vector.load %arg4[%c0_39, %c0_40] : memref<1x128xf32, #tpu.memory_space<vmem>>, vector<1x128xf32>
    %50 = vector.broadcast %49 : vector<1x128xf32> to vector<144x128xf32>
    %51 = arith.addf %48, %50 : vector<144x128xf32>
    %cst_41 = arith.constant 0.000000e+00 : f32
    %52 = vector.broadcast %cst_41 : f32 to vector<144x128xf32>
    %53 = arith.maximumf %51, %52 : vector<144x128xf32>
    %c0_42 = arith.constant 0 : index
    %c0_43 = arith.constant 0 : index
    %c0_44 = arith.constant 0 : index
    %54 = vector.load %arg5[%c0_42, %c0_43, %c0_44] : memref<1x144x128xf32, #tpu.memory_space<vmem>>, vector<1x144x128xf32>
    %55 = vector.shape_cast %54 : vector<1x144x128xf32> to vector<144x128xf32>
    %56 = vector.shape_cast %53 : vector<144x128xf32> to vector<1x144x128xf32>
    tpu.vector_store %arg5[%c0_42, %c0_43, %c0_44], %56 {strides = array<i32>} : memref<1x144x128xf32, #tpu.memory_space<vmem>>, vector<1x144x128xf32>,
    return
  }
  func.func @transform_1(%arg0: i32, %arg1: i32) -> (i32, i32, i32) {
    %c0_i32 = arith.constant 0 : i32
    %c0_i32_0 = arith.constant 0 : i32
    %c0_i32_1 = arith.constant 0 : i32
    %c0_i32_2 = arith.constant 0 : i32
    return %c0_i32, %c0_i32_0, %c0_i32_1 : i32, i32, i32
  }
  func.func @transform_2(%arg0: i32, %arg1: i32) -> (i32, i32) {
    %c0_i32 = arith.constant 0 : i32
    %c0_i32_0 = arith.constant 0 : i32
    %c0_i32_1 = arith.constant 0 : i32
    return %c0_i32, %c0_i32_0 : i32, i32
  }
  func.func @transform_3(%arg0: i32, %arg1: i32) -> (i32, i32, i32) {
    %c0_i32 = arith.constant 0 : i32
    %c0_i32_0 = arith.constant 0 : i32
    return %arg0, %arg1, %c0_i32 : i32, i32, i32
  }
}

module attributes {stable_mosaic.version = 11 : i64} {
  func.func @kernel(%arg0: i32, %arg1: i32, %arg2: memref<2x342x128xf32, #tpu.memory_space<any>>, %arg3: memref<9x128x128xf32, #tpu.memory_space<vmem>>, %arg4: memref<1x128xf32, #tpu.memory_space<vmem>>, %arg5: memref<1x144x128xf32, #tpu.memory_space<vmem>>, %arg6: memref<1x144x128xf32, #tpu.memory_space<vmem>>, %arg7: memref<182x128xf32, #tpu.memory_space<vmem>>, %arg8: memref<!tpu.dma_semaphore, #tpu.memory_space<semaphore_mem>>) attributes {dimension_semantics = [#tpu.dimension_semantics<parallel>, #tpu.dimension_semantics<parallel>], iteration_bounds = array<i64: 2, 2>, scalar_prefetch = 0 : i64, scratch_operands = 2 : i64, tpu.core_type = #tpu.core_type<tc>, window_params = [{}, {pipeline_mode = #tpu.pipeline_mode<synchronous>, transform_indices = @transform_1, window_bounds = array<i64: 9, 128, 128>}, {pipeline_mode = #tpu.pipeline_mode<synchronous>, transform_indices = @transform_2, window_bounds = array<i64: 1, 128>}, {transform_indices = @transform_3, window_bounds = array<i64: 1, 144, 128>}, {transform_indices = @transform_4, window_bounds = array<i64: 1, 144, 128>}]} {
    %c144_i32 = arith.constant 144 : i32
    %0 = arith.muli %arg1, %c144_i32 : i32
    %c0_i32 = arith.constant 0 : i32
    %1 = tpu.memref_slice %arg2[%arg0, %0, %c0_i32] : memref<2x342x128xf32, #tpu.memory_space<any>> -> memref<1x182x128xf32, #tpu.memory_space<any>>
    %2 = tpu.memref_squeeze %1 : memref<1x182x128xf32, #tpu.memory_space<any>> -> memref<182x128xf32, #tpu.memory_space<any>>
    tpu.enqueue_dma source(%2 : memref<182x128xf32, #tpu.memory_space<any>>) target(%arg7 : memref<182x128xf32, #tpu.memory_space<vmem>>) target_semaphore(%arg8 : memref<!tpu.dma_semaphore, #tpu.memory_space<semaphore_mem>>)
    %c0_i32_0 = arith.constant 0 : i32
    %3 = tpu.memref_slice %arg2[%arg0, %0, %c0_i32_0] : memref<2x342x128xf32, #tpu.memory_space<any>> -> memref<1x182x128xf32, #tpu.memory_space<any>>
    %4 = tpu.memref_squeeze %3 : memref<1x182x128xf32, #tpu.memory_space<any>> -> memref<182x128xf32, #tpu.memory_space<any>>
    tpu.wait_dma2 semaphore(%arg8 : memref<!tpu.dma_semaphore, #tpu.memory_space<semaphore_mem>>) src(%4 : memref<182x128xf32, #tpu.memory_space<any>>) dst(%arg7 : memref<182x128xf32, #tpu.memory_space<vmem>>)
    %c0 = arith.constant 0 : index
    %c0_1 = arith.constant 0 : index
    %5 = vector.load %arg7[%c0, %c0_1] : memref<182x128xf32, #tpu.memory_space<vmem>>, vector<144x128xf32>
    %c0_2 = arith.constant 0 : index
    %c0_3 = arith.constant 0 : index
    %c0_4 = arith.constant 0 : index
    %6 = vector.load %arg3[%c0_2, %c0_3, %c0_4] : memref<9x128x128xf32, #tpu.memory_space<vmem>>, vector<1x128x128xf32>
    %7 = vector.shape_cast %6 : vector<1x128x128xf32> to vector<128x128xf32>
    %cst = arith.constant dense<0.000000e+00> : vector<144x128xf32>
    %8 = tpu.matmul %5, %7, %cst {dimension_numbers = #tpu.dot_dimension_numbers<[1], [0], [0], [1], [0, 0, 1, 1], [], []>} : vector<144x128xf32>, vector<128x128xf32>, vector<144x128xf32> -> vector<144x128xf32>
    %c1 = arith.constant 1 : index
    %c0_5 = arith.constant 0 : index
    %9 = vector.load %arg7[%c1, %c0_5] : memref<182x128xf32, #tpu.memory_space<vmem>>, vector<144x128xf32>
    %c1_6 = arith.constant 1 : index
    %c0_7 = arith.constant 0 : index
    %c0_8 = arith.constant 0 : index
    %10 = vector.load %arg3[%c1_6, %c0_7, %c0_8] : memref<9x128x128xf32, #tpu.memory_space<vmem>>, vector<1x128x128xf32>
    %11 = vector.shape_cast %10 : vector<1x128x128xf32> to vector<128x128xf32>
    %cst_9 = arith.constant dense<0.000000e+00> : vector<144x128xf32>
    %12 = tpu.matmul %9, %11, %cst_9 {dimension_numbers = #tpu.dot_dimension_numbers<[1], [0], [0], [1], [0, 0, 1, 1], [], []>} : vector<144x128xf32>, vector<128x128xf32>, vector<144x128xf32> -> vector<144x128xf32>
    %13 = arith.addf %8, %12 : vector<144x128xf32>
    %c2 = arith.constant 2 : index
    %c0_10 = arith.constant 0 : index
    %14 = vector.load %arg7[%c2, %c0_10] : memref<182x128xf32, #tpu.memory_space<vmem>>, vector<144x128xf32>
    %c2_11 = arith.constant 2 : index
    %c0_12 = arith.constant 0 : index
    %c0_13 = arith.constant 0 : index
    %15 = vector.load %arg3[%c2_11, %c0_12, %c0_13] : memref<9x128x128xf32, #tpu.memory_space<vmem>>, vector<1x128x128xf32>
    %16 = vector.shape_cast %15 : vector<1x128x128xf32> to vector<128x128xf32>
    %cst_14 = arith.constant dense<0.000000e+00> : vector<144x128xf32>
    %17 = tpu.matmul %14, %16, %cst_14 {dimension_numbers = #tpu.dot_dimension_numbers<[1], [0], [0], [1], [0, 0, 1, 1], [], []>} : vector<144x128xf32>, vector<128x128xf32>, vector<144x128xf32> -> vector<144x128xf32>
    %18 = arith.addf %13, %17 : vector<144x128xf32>
    %c18 = arith.constant 18 : index
    %c0_15 = arith.constant 0 : index
    %19 = vector.load %arg7[%c18, %c0_15] : memref<182x128xf32, #tpu.memory_space<vmem>>, vector<144x128xf32>
    %c3 = arith.constant 3 : index
    %c0_16 = arith.constant 0 : index
    %c0_17 = arith.constant 0 : index
    %20 = vector.load %arg3[%c3, %c0_16, %c0_17] : memref<9x128x128xf32, #tpu.memory_space<vmem>>, vector<1x128x128xf32>
    %21 = vector.shape_cast %20 : vector<1x128x128xf32> to vector<128x128xf32>
    %cst_18 = arith.constant dense<0.000000e+00> : vector<144x128xf32>
    %22 = tpu.matmul %19, %21, %cst_18 {dimension_numbers = #tpu.dot_dimension_numbers<[1], [0], [0], [1], [0, 0, 1, 1], [], []>} : vector<144x128xf32>, vector<128x128xf32>, vector<144x128xf32> -> vector<144x128xf32>
    %23 = arith.addf %18, %22 : vector<144x128xf32>
    %c19 = arith.constant 19 : index
    %c0_19 = arith.constant 0 : index
    %24 = vector.load %arg7[%c19, %c0_19] : memref<182x128xf32, #tpu.memory_space<vmem>>, vector<144x128xf32>
    %c4 = arith.constant 4 : index
    %c0_20 = arith.constant 0 : index
    %c0_21 = arith.constant 0 : index
    %25 = vector.load %arg3[%c4, %c0_20, %c0_21] : memref<9x128x128xf32, #tpu.memory_space<vmem>>, vector<1x128x128xf32>
    %26 = vector.shape_cast %25 : vector<1x128x128xf32> to vector<128x128xf32>
    %cst_22 = arith.constant dense<0.000000e+00> : vector<144x128xf32>
    %27 = tpu.matmul %24, %26, %cst_22 {dimension_numbers = #tpu.dot_dimension_numbers<[1], [0], [0], [1], [0, 0, 1, 1], [], []>} : vector<144x128xf32>, vector<128x128xf32>, vector<144x128xf32> -> vector<144x128xf32>
    %28 = arith.addf %23, %27 : vector<144x128xf32>
    %c20 = arith.constant 20 : index
    %c0_23 = arith.constant 0 : index
    %29 = vector.load %arg7[%c20, %c0_23] : memref<182x128xf32, #tpu.memory_space<vmem>>, vector<144x128xf32>
    %c5 = arith.constant 5 : index
    %c0_24 = arith.constant 0 : index
    %c0_25 = arith.constant 0 : index
    %30 = vector.load %arg3[%c5, %c0_24, %c0_25] : memref<9x128x128xf32, #tpu.memory_space<vmem>>, vector<1x128x128xf32>
    %31 = vector.shape_cast %30 : vector<1x128x128xf32> to vector<128x128xf32>
    %cst_26 = arith.constant dense<0.000000e+00> : vector<144x128xf32>
    %32 = tpu.matmul %29, %31, %cst_26 {dimension_numbers = #tpu.dot_dimension_numbers<[1], [0], [0], [1], [0, 0, 1, 1], [], []>} : vector<144x128xf32>, vector<128x128xf32>, vector<144x128xf32> -> vector<144x128xf32>
    %33 = arith.addf %28, %32 : vector<144x128xf32>
    %c36 = arith.constant 36 : index
    %c0_27 = arith.constant 0 : index
    %34 = vector.load %arg7[%c36, %c0_27] : memref<182x128xf32, #tpu.memory_space<vmem>>, vector<144x128xf32>
    %c6 = arith.constant 6 : index
    %c0_28 = arith.constant 0 : index
    %c0_29 = arith.constant 0 : index
    %35 = vector.load %arg3[%c6, %c0_28, %c0_29] : memref<9x128x128xf32, #tpu.memory_space<vmem>>, vector<1x128x128xf32>
    %36 = vector.shape_cast %35 : vector<1x128x128xf32> to vector<128x128xf32>
    %cst_30 = arith.constant dense<0.000000e+00> : vector<144x128xf32>
    %37 = tpu.matmul %34, %36, %cst_30 {dimension_numbers = #tpu.dot_dimension_numbers<[1], [0], [0], [1], [0, 0, 1, 1], [], []>} : vector<144x128xf32>, vector<128x128xf32>, vector<144x128xf32> -> vector<144x128xf32>
    %38 = arith.addf %33, %37 : vector<144x128xf32>
    %c37 = arith.constant 37 : index
    %c0_31 = arith.constant 0 : index
    %39 = vector.load %arg7[%c37, %c0_31] : memref<182x128xf32, #tpu.memory_space<vmem>>, vector<144x128xf32>
    %c7 = arith.constant 7 : index
    %c0_32 = arith.constant 0 : index
    %c0_33 = arith.constant 0 : index
    %40 = vector.load %arg3[%c7, %c0_32, %c0_33] : memref<9x128x128xf32, #tpu.memory_space<vmem>>, vector<1x128x128xf32>
    %41 = vector.shape_cast %40 : vector<1x128x128xf32> to vector<128x128xf32>
    %cst_34 = arith.constant dense<0.000000e+00> : vector<144x128xf32>
    %42 = tpu.matmul %39, %41, %cst_34 {dimension_numbers = #tpu.dot_dimension_numbers<[1], [0], [0], [1], [0, 0, 1, 1], [], []>} : vector<144x128xf32>, vector<128x128xf32>, vector<144x128xf32> -> vector<144x128xf32>
    %43 = arith.addf %38, %42 : vector<144x128xf32>
    %c38 = arith.constant 38 : index
    %c0_35 = arith.constant 0 : index
    %44 = vector.load %arg7[%c38, %c0_35] : memref<182x128xf32, #tpu.memory_space<vmem>>, vector<144x128xf32>
    %c8 = arith.constant 8 : index
    %c0_36 = arith.constant 0 : index
    %c0_37 = arith.constant 0 : index
    %45 = vector.load %arg3[%c8, %c0_36, %c0_37] : memref<9x128x128xf32, #tpu.memory_space<vmem>>, vector<1x128x128xf32>
    %46 = vector.shape_cast %45 : vector<1x128x128xf32> to vector<128x128xf32>
    %cst_38 = arith.constant dense<0.000000e+00> : vector<144x128xf32>
    %47 = tpu.matmul %44, %46, %cst_38 {dimension_numbers = #tpu.dot_dimension_numbers<[1], [0], [0], [1], [0, 0, 1, 1], [], []>} : vector<144x128xf32>, vector<128x128xf32>, vector<144x128xf32> -> vector<144x128xf32>
    %48 = arith.addf %43, %47 : vector<144x128xf32>
    %c0_39 = arith.constant 0 : index
    %c0_40 = arith.constant 0 : index
    %49 = vector.load %arg4[%c0_39, %c0_40] : memref<1x128xf32, #tpu.memory_space<vmem>>, vector<1x128xf32>
    %50 = vector.broadcast %49 : vector<1x128xf32> to vector<144x128xf32>
    %51 = arith.addf %48, %50 : vector<144x128xf32>
    %c0_41 = arith.constant 0 : index
    %c0_42 = arith.constant 0 : index
    %c0_43 = arith.constant 0 : index
    %52 = vector.load %arg5[%c0_41, %c0_42, %c0_43] : memref<1x144x128xf32, #tpu.memory_space<vmem>>, vector<1x144x128xf32>
    %53 = vector.shape_cast %52 : vector<1x144x128xf32> to vector<144x128xf32>
    %54 = arith.addf %51, %53 : vector<144x128xf32>
    %cst_44 = arith.constant 0.000000e+00 : f32
    %55 = vector.broadcast %cst_44 : f32 to vector<144x128xf32>
    %56 = arith.maximumf %54, %55 : vector<144x128xf32>
    %c0_45 = arith.constant 0 : index
    %c0_46 = arith.constant 0 : index
    %c0_47 = arith.constant 0 : index
    %57 = vector.load %arg6[%c0_45, %c0_46, %c0_47] : memref<1x144x128xf32, #tpu.memory_space<vmem>>, vector<1x144x128xf32>
    %58 = vector.shape_cast %57 : vector<1x144x128xf32> to vector<144x128xf32>
    %59 = vector.shape_cast %56 : vector<144x128xf32> to vector<1x144x128xf32>
    tpu.vector_store %arg6[%c0_45, %c0_46, %c0_47], %59 {strides = array<i32>} : memref<1x144x128xf32, #tpu.memory_space<vmem>>, vector<1x144x128xf32>,
    return
  }
  func.func @transform_1(%arg0: i32, %arg1: i32) -> (i32, i32, i32) {
    %c0_i32 = arith.constant 0 : i32
    %c0_i32_0 = arith.constant 0 : i32
    %c0_i32_1 = arith.constant 0 : i32
    %c0_i32_2 = arith.constant 0 : i32
    return %c0_i32, %c0_i32_0, %c0_i32_1 : i32, i32, i32
  }
  func.func @transform_2(%arg0: i32, %arg1: i32) -> (i32, i32) {
    %c0_i32 = arith.constant 0 : i32
    %c0_i32_0 = arith.constant 0 : i32
    %c0_i32_1 = arith.constant 0 : i32
    return %c0_i32, %c0_i32_0 : i32, i32
  }
  func.func @transform_3(%arg0: i32, %arg1: i32) -> (i32, i32, i32) {
    %c0_i32 = arith.constant 0 : i32
    %c0_i32_0 = arith.constant 0 : i32
    return %arg0, %arg1, %c0_i32 : i32, i32, i32
  }
  func.func @transform_4(%arg0: i32, %arg1: i32) -> (i32, i32, i32) {
    %c0_i32 = arith.constant 0 : i32
    %c0_i32_0 = arith.constant 0 : i32
    return %arg0, %arg1, %c0_i32 : i32, i32, i32
  }
}

</mosaic_0001>

<llo_original>
// kernel: _lambda_.2
$region0: #{_lambda_.2}
  #allocation0 [shape = 'u32[]', space=smem, size = 0x4, offset = 0x4, fixed_abs, tag = 'smem constant byte address 0x4 - core index']
  #allocation1 [shape = 'u32[144,128]{1,0:T(1,128)}', space=vmem, size = 0x12000, scoped, tag = 'internal scratch']
  #allocation2 [shape = 'f32[182,128]{1,0:T(8,128)}', space=vmem, size = 0x17000, scoped, tag = 'scratch operand']
  #allocation3 [shape = 's32[1]{0}', space=sflag, size = 0x4, scoped, tag = 'scratch operand']
  #allocation4 [shape = 's32[]', space=sflag, size = 0x4, offset = 0, fixed_abs, tag = 'sflag constant byte address 0x0 - dummy sync flag']
  %s0 = inlined_call_operand.vmem [shape: f32[2,342,128], index: 0, kind: input, shape index: {}]
  %s1 = inlined_call_operand.vmem [shape: f32[9,128,128], index: 1, kind: input, shape index: {}]
  %s2 = inlined_call_operand.vmem [shape: f32[1,128], index: 2, kind: input, shape index: {}]
  %s3 = inlined_call_operand.vmem [shape: f32[2,288,128], index: 3, kind: output, shape index: {}]
  %s4 = sld [smem:[#allocation0]]
  $region78: #{_lambda_.2} parent=0
    _
  %s6 = ssub.s32 1, %s4
  %s7 = scalar_select 0, %s6, %s4
  loop: start=0, step=1, limit=6
  $region2: #{_lambda_.2} parent=0 // loop_pre_header
    _
  $region3: #{_lambda_.2} parent=0 // loop_header
    %s9 = sphi 0, %s13
    %p10 = scmp.ge.s32.totalorder %s9, 6
    %s16 = sphi 0, %s28
    %s17 = sphi 0, %s24
    %s18 = sphi 0, %s16
    %s19 = sphi 0, %s17
    %s20 = sphi 0, %s18
    %s21 = sphi 0, %s19
    %s29 = sphi 0, %s29
    %s31 = sphi 0, %s29
    %s32 = sphi 0, %s31
    %s46 = sphi 0, %s32
    %s50 = sphi 0, %s50
    %s52 = sphi 0, %s50
    %s53 = sphi 0, %s52
    %s67 = sphi 0, %s53
    %s75 = sphi 0, %s77
    %s78 = sphi 0, %s75
    %s79 = sphi 0, %s78
    %s95 = sphi 0, %s79
  $region4: #{_lambda_.2} parent=0 // loop_header_branch
    %12 = sbr.rel (%p10) target = $region8
  $region5: #{_lambda_.2} parent=0 // loop_body
    %s14 = ssub.s32 %s9, 1
    %s15 = ssub.s32 %s9, 2
    %s22 = sadd.s32 1, %s17
    %p23 = scmp.ge.s32.totalorder %s22, 2
    %s24 = scalar_select %p23, 0, %s22
    %s25 = sadd.s32 1, %s16
    %s26 = scalar_select %p23, %s25, %s16
    %p27 = scmp.ge.s32.totalorder %s26, 2
    %s28 = scalar_select %p27, 0, %s26
    %s30 = sadd.s32 %s29, 1
    %p33 = scmp.eq.s32.totalorder %s9, 3
    %p34 = scmp.ne.s32.totalorder %s29, %s31
    %p35 = scmp.eq.s32.totalorder %s9, 0
    %p36 = por %p34, %p35
    %p37 = scmp.ne.s32.totalorder %s29, %s31
    %p38 = scmp.eq.s32.totalorder %s14, 3
    %p39 = por %p37, %p38
    %p40 = scmp.ne.s32.totalorder %s31, %s32
    %p41 = scmp.eq.s32.totalorder %s14, 0
    %p42 = por %p40, %p41
    %p43 = scmp.ne.s32.totalorder %s31, %s32
    %p44 = scmp.eq.s32.totalorder %s15, 3
    %p45 = por %p43, %p44
    %p47 = scmp.ne.s32.totalorder %s32, %s46
    %p48 = scmp.eq.s32.totalorder %s15, 0
    %p49 = por %p47, %p48
    %s51 = sadd.s32 %s50, 1
    %p54 = scmp.eq.s32.totalorder %s9, 3
    %p55 = scmp.ne.s32.totalorder %s50, %s52
    %p56 = scmp.eq.s32.totalorder %s9, 0
    %p57 = por %p55, %p56
    %p58 = scmp.ne.s32.totalorder %s50, %s52
    %p59 = scmp.eq.s32.totalorder %s14, 3
    %p60 = por %p58, %p59
    %p61 = scmp.ne.s32.totalorder %s52, %s53
    %p62 = scmp.eq.s32.totalorder %s14, 0
    %p63 = por %p61, %p62
    %p64 = scmp.ne.s32.totalorder %s52, %s53
    %p65 = scmp.eq.s32.totalorder %s15, 3
    %p66 = por %p64, %p65
    %p68 = scmp.ne.s32.totalorder %s53, %s67
    %p69 = scmp.eq.s32.totalorder %s15, 0
    %p70 = por %p68, %p69
    %s71 = ssub.s32 %s16, %s28
    %s72 = ssub.s32 %s17, %s24
    %s73 = sor.u32 %s71, %s72
    %p74 = scmp.eq.s32.totalorder %s73, 0
    %s76 = sadd.s32 %s75, 1
    %s77 = scalar_select %p74, %s75, %s76
    %p80 = pneg %p74
    %p81 = scmp.eq.s32.totalorder %s9, 3
    %p82 = por %p80, %p81
    %p83 = scmp.ne.s32.totalorder %s75, %s78
    %p84 = scmp.eq.s32.totalorder %s9, 0
    %p85 = por %p83, %p84
    %p86 = scmp.ne.s32.totalorder %s75, %s78
    %p87 = scmp.eq.s32.totalorder %s14, 3
    %p88 = por %p86, %p87
    %p89 = scmp.ne.s32.totalorder %s78, %s79
    %p90 = scmp.eq.s32.totalorder %s14, 0
    %p91 = por %p89, %p90
    %p92 = scmp.ne.s32.totalorder %s78, %s79
    %p93 = scmp.eq.s32.totalorder %s15, 3
    %p94 = por %p92, %p93
    %p96 = scmp.ne.s32.totalorder %s79, %s95
    %p97 = scmp.eq.s32.totalorder %s15, 0
    %p98 = por %p96, %p97
    %p99 = scmp.le.s32.totalorder 1, %s9
    %p100 = scmp.lt.s32.totalorder %s9, 5
    %p101 = pnand %p99, %p100
    %p102 = pneg %p101
    // Predicated region
    $region9: #{_lambda_.2} parent=5 // pred_check
      _
    $region10: #{_lambda_.2} parent=5 // pred_check_branch
      %104 = sbr.rel (%p101) target = $region12
    $region11: #{_lambda_.2} parent=5 // pred_region
      %s105 = ssub.s32 %s9, 1
      // Predicated region
      $region13: #{_lambda_.2} parent=11 // pred_check
        %p106 = pneg %p42
      $region14: #{_lambda_.2} parent=11 // pred_check_branch
        %108 = sbr.rel (%p106) target = $region16
      $region15: #{_lambda_.2} parent=11 // pred_region
        _
      $region16: #{_lambda_.2} parent=11 // pred_fallthru
        _
      // Predicated region
      $region17: #{_lambda_.2} parent=11 // pred_check
        %p109 = pneg %p63
      $region18: #{_lambda_.2} parent=11 // pred_check_branch
        %111 = sbr.rel (%p109) target = $region20
      $region19: #{_lambda_.2} parent=11 // pred_region
        _
      $region20: #{_lambda_.2} parent=11 // pred_fallthru
        _
    $region12: #{_lambda_.2} parent=5 // pred_fallthru
      _
    %p112 = scmp.lt.s32.totalorder %s9, 4
    // Predicated region
    $region21: #{_lambda_.2} parent=5 // pred_check
      %p113 = pneg %p112
    $region22: #{_lambda_.2} parent=5 // pred_check_branch
      %115 = sbr.rel (%p113) target = $region24
    $region23: #{_lambda_.2} parent=5 // pred_region
      _
    $region24: #{_lambda_.2} parent=5 // pred_fallthru
      _
    %p116 = scmp.le.s32.totalorder 1, %s9
    %p117 = scmp.lt.s32.totalorder %s9, 5
    %p118 = pnand %p116, %p117
    %p119 = pneg %p118
    // Predicated region
    $region25: #{_lambda_.2} parent=5 // pred_check
      _
    $region26: #{_lambda_.2} parent=5 // pred_check_branch
      %121 = sbr.rel (%p118) target = $region28
    $region27: #{_lambda_.2} parent=5 // pred_region
      %s122 = ssub.s32 %s9, 1
      %p123 = pneg %p42
      %p124 = pneg %p39
      %p125 = pneg %p63
      %p126 = pneg %p60
      %p127 = pneg %p91
      %p128 = pneg %p88
      %s129 = smul.u32 18, %s19
      %p130 = scmp.lt.s32.totalorder %s18, 1
      %s131 = scalar_select %p130, %s18, 1
      %p132 = scmp.lt.s32.totalorder %s129, 35
      %s133 = scalar_select %p132, %s129, 35
      %s134 = smul.addr %s131, 36
      %s135 = sadd.s32 %s133, %s134
      %s136 = smul.addr %s135, 8
      %s137 = scalar_lea.vmem %s3, %s136
      %s138 = smul.u32 18, %s19
      %p139 = scmp.lt.s32.totalorder %s18, 1
      %s140 = scalar_select %p139, %s18, 1
      %p141 = scmp.lt.s32.totalorder %s138, 35
      %s142 = scalar_select %p141, %s138, 35
      %s143 = smul.addr %s140, 36
      %s144 = sadd.s32 %s142, %s143
      %s145 = smul.addr %s144, 8
      %s146 = scalar_lea.vmem %s3, %s145
      %s147 = smul.u32 18, %s19
      %s148 = smul.u32 %s19, 144
      %s149 = smul.u32 %s18, 344
      %s150 = sadd.s32 %s148, %s149
      %s151 = scalar_lea.vmem %s0, %s150
      %p153 = scmp.lt.u32.totalorder 182, 8
      %p154 = pneg %p153
      // Predicated region
      $region29: #{_lambda_.2} parent=27 // pred_check
        _
      $region30: #{_lambda_.2} parent=27 // pred_check_branch
        %156 = sbr.rel (%p153) target = $region32
      $region31: #{_lambda_.2} parent=27 // pred_region
        %s172 = sand.u32 182, 7
        %p173 = scmp.eq.s32.totalorder %s172, 0
        %p174 = pneg %p173
        // Predicated region
        $region44: #{_lambda_.2} parent=31 // pred_check
          _
        $region45: #{_lambda_.2} parent=31 // pred_check_branch
          %176 = sbr.rel (%p173) target = $region47
        $region46: #{_lambda_.2} parent=31 // pred_region
          %s177 = sand.u32 182, 7
          %s178 = ssub.s32 182, %s177
          %s179 = scalar_lea.vmem %s151, %s178
          %s180 = ssub.s32 182, %s177
          %s181 = scalar_lea.vmem [#allocation2], %s180
          loop: start=0, step=1, limit=1
          $region48: #{_lambda_.2} parent=46 // loop_pre_header
            _
          $region49: #{_lambda_.2} parent=46 // loop_header
            %s183 = sphi 0, %s187
            %p184 = scmp.ge.s32.totalorder %s183, 1
            %s188 = sphi %s151, %s151
            %s189 = sphi [#allocation2], [#allocation2]
          $region50: #{_lambda_.2} parent=46 // loop_header_branch
            %186 = sbr.rel (%p184) target = $region54
          $region51: #{_lambda_.2} parent=46 // loop_body
            %v190 = vld [vmem:[%s188] sm:$0xff]
            %191 = vst [vmem:[%s189] sm:$0xff] %v190
            %v192 = vld [vmem:[%s188 + $0x8] sm:$0xff]
            %193 = vst [vmem:[%s189 + $0x8] sm:$0xff] %v192
            %v194 = vld [vmem:[%s188 + $0x10] sm:$0xff]
            %195 = vst [vmem:[%s189 + $0x10] sm:$0xff] %v194
            %v196 = vld [vmem:[%s188 + $0x18] sm:$0xff]
            %197 = vst [vmem:[%s189 + $0x18] sm:$0xff] %v196
            %v198 = vld [vmem:[%s188 + $0x20] sm:$0xff]
            %199 = vst [vmem:[%s189 + $0x20] sm:$0xff] %v198
            %v200 = vld [vmem:[%s188 + $0x28] sm:$0xff]
            %201 = vst [vmem:[%s189 + $0x28] sm:$0xff] %v200
            %v202 = vld [vmem:[%s188 + $0x30] sm:$0xff]
            %203 = vst [vmem:[%s189 + $0x30] sm:$0xff] %v202
            %v204 = vld [vmem:[%s188 + $0x38] sm:$0xff]
            %205 = vst [vmem:[%s189 + $0x38] sm:$0xff] %v204
            %v206 = vld [vmem:[%s188 + $0x40] sm:$0xff]
            %207 = vst [vmem:[%s189 + $0x40] sm:$0xff] %v206
            %v208 = vld [vmem:[%s188 + $0x48] sm:$0xff]
            %209 = vst [vmem:[%s189 + $0x48] sm:$0xff] %v208
            %v210 = vld [vmem:[%s188 + $0x50] sm:$0xff]
            %211 = vst [vmem:[%s189 + $0x50] sm:$0xff] %v210
            %v212 = vld [vmem:[%s188 + $0x58] sm:$0xff]
            %213 = vst [vmem:[%s189 + $0x58] sm:$0xff] %v212
            %v214 = vld [vmem:[%s188 + $0x60] sm:$0xff]
            %215 = vst [vmem:[%s189 + $0x60] sm:$0xff] %v214
            %v216 = vld [vmem:[%s188 + $0x68] sm:$0xff]
            %217 = vst [vmem:[%s189 + $0x68] sm:$0xff] %v216
            %v218 = vld [vmem:[%s188 + $0x70] sm:$0xff]
            %219 = vst [vmem:[%s189 + $0x70] sm:$0xff] %v218
            %v220 = vld [vmem:[%s188 + $0x78] sm:$0xff]
            %221 = vst [vmem:[%s189 + $0x78] sm:$0xff] %v220
            %v222 = vld [vmem:[%s188 + $0x80] sm:$0xff]
            %223 = vst [vmem:[%s189 + $0x80] sm:$0xff] %v222
            %v224 = vld [vmem:[%s188 + $0x88] sm:$0xff]
            %225 = vst [vmem:[%s189 + $0x88] sm:$0xff] %v224
            %v226 = vld [vmem:[%s188 + $0x90] sm:$0xff]
            %227 = vst [vmem:[%s189 + $0x90] sm:$0xff] %v226
            %v228 = vld [vmem:[%s188 + $0x98] sm:$0xff]
            %229 = vst [vmem:[%s189 + $0x98] sm:$0xff] %v228
            %v230 = vld [vmem:[%s188 + $0xa0] sm:$0xff]
            %231 = vst [vmem:[%s189 + $0xa0] sm:$0xff] %v230
            %v232 = vld [vmem:[%s188 + $0xa8] sm:$0xff]
            %233 = vst [vmem:[%s189 + $0xa8] sm:$0xff] %v232
          $region52: #{_lambda_.2} parent=46 // loop_footer
            %s187 = sadd.s32 1, %s183
          $region53: #{_lambda_.2} parent=46 // loop_footer_branch
            %182 = sbr.rel target = $region49
          $region54: #{_lambda_.2} parent=46 // loop_exit
            _
          %s234 = sshll.u32 1, %s177
          %s235 = ssub.s32 %s234, 1
          loop: start=0, step=1, limit=1
          $region55: #{_lambda_.2} parent=46 // loop_pre_header
            _
          $region56: #{_lambda_.2} parent=46 // loop_header
            %s237 = sphi 0, %s241
            %p238 = scmp.ge.s32.totalorder %s237, 1
            %s242 = sphi %s179, %s179
            %s243 = sphi %s181, %s181
          $region57: #{_lambda_.2} parent=46 // loop_header_branch
            %240 = sbr.rel (%p238) target = $region61
          $region58: #{_lambda_.2} parent=46 // loop_body
            %v244 = vld [vmem:[%s242] sm:%s235]
            %245 = vst [vmem:[%s243] sm:%s235] %v244
          $region59: #{_lambda_.2} parent=46 // loop_footer
            %s241 = sadd.s32 1, %s237
          $region60: #{_lambda_.2} parent=46 // loop_footer_branch
            %236 = sbr.rel target = $region56
          $region61: #{_lambda_.2} parent=46 // loop_exit
            _
        $region47: #{_lambda_.2} parent=31 // pred_fallthru
          _
      $region32: #{_lambda_.2} parent=27 // pred_fallthru
        _
      // Predicated region
      $region33: #{_lambda_.2} parent=27 // pred_check
        %p157 = pneg %p153
      $region34: #{_lambda_.2} parent=27 // pred_check_branch
        %159 = sbr.rel (%p157) target = $region36
      $region35: #{_lambda_.2} parent=27 // pred_region
        %s160 = sshll.u32 1, 182
        %s161 = ssub.s32 %s160, 1
        loop: start=0, step=1, limit=1
        $region37: #{_lambda_.2} parent=35 // loop_pre_header
          _
        $region38: #{_lambda_.2} parent=35 // loop_header
          %s163 = sphi 0, %s167
          %p164 = scmp.ge.s32.totalorder %s163, 1
          %s168 = sphi %s151, %s151
          %s169 = sphi [#allocation2], [#allocation2]
        $region39: #{_lambda_.2} parent=35 // loop_header_branch
          %166 = sbr.rel (%p164) target = $region43
        $region40: #{_lambda_.2} parent=35 // loop_body
          %v170 = vld [vmem:[%s168] sm:%s161]
          %171 = vst [vmem:[%s169] sm:%s161] %v170
        $region41: #{_lambda_.2} parent=35 // loop_footer
          %s167 = sadd.s32 1, %s163
        $region42: #{_lambda_.2} parent=35 // loop_footer_branch
          %162 = sbr.rel target = $region38
        $region43: #{_lambda_.2} parent=35 // loop_exit
          _
      $region36: #{_lambda_.2} parent=27 // pred_fallthru
        _
      // Predicated region
      $region62: #{_lambda_.2} parent=27 // pred_check
        _
      $region63: #{_lambda_.2} parent=27 // pred_check_branch
        %248 = sbr.rel (0) target = $region65
      $region64: #{_lambda_.2} parent=27 // pred_region
        %249 = vsyncadd [#allocation3], 2912
      $region65: #{_lambda_.2} parent=27 // pred_fallthru
        _
      %s250 = smul.u32 182, 1
      %s251 = sshll.u32 %s250, 4
      %252 = dma.done [#allocation3], %s251
      %v253 = vld [vmem:[#allocation2] sm:$0xff]
      %v254 = vld [vmem:[#allocation2 + $0x8] sm:$0xff]
      %v255 = vld [vmem:[#allocation2 + $0x10] sm:$0xff]
      %v256 = vld [vmem:[#allocation2 + $0x18] sm:$0xff]
      %v257 = vld [vmem:[#allocation2 + $0x20] sm:$0xff]
      %v258 = vld [vmem:[#allocation2 + $0x28] sm:$0xff]
      %v259 = vld [vmem:[#allocation2 + $0x30] sm:$0xff]
      %v260 = vld [vmem:[#allocation2 + $0x38] sm:$0xff]
      %v261 = vld [vmem:[#allocation2 + $0x40] sm:$0xff]
      %v262 = vld [vmem:[#allocation2 + $0x48] sm:$0xff]
      %v263 = vld [vmem:[#allocation2 + $0x50] sm:$0xff]
      %v264 = vld [vmem:[#allocation2 + $0x58] sm:$0xff]
      %v265 = vld [vmem:[#allocation2 + $0x60] sm:$0xff]
      %v266 = vld [vmem:[#allocation2 + $0x68] sm:$0xff]
      %v267 = vld [vmem:[#allocation2 + $0x70] sm:$0xff]
      %v268 = vld [vmem:[#allocation2 + $0x78] sm:$0xff]
      %v269 = vld [vmem:[#allocation2 + $0x80] sm:$0xff]
      %v270 = vld [vmem:[#allocation2 + $0x88] sm:$0xff]
      %v271 = vld [vmem:[%s1] sm:$0xff]
      %v272 = vld [vmem:[%s1 + $0x8] sm:$0xff]
      %v273 = vld [vmem:[%s1 + $0x10] sm:$0xff]
      %v274 = vld [vmem:[%s1 + $0x18] sm:$0xff]
      %v275 = vld [vmem:[%s1 + $0x20] sm:$0xff]
      %v276 = vld [vmem:[%s1 + $0x28] sm:$0xff]
      %v277 = vld [vmem:[%s1 + $0x30] sm:$0xff]
      %v278 = vld [vmem:[%s1 + $0x38] sm:$0xff]
      %v279 = vld [vmem:[%s1 + $0x40] sm:$0xff]
      %v280 = vld [vmem:[%s1 + $0x48] sm:$0xff]
      %v281 = vld [vmem:[%s1 + $0x50] sm:$0xff]
      %v282 = vld [vmem:[%s1 + $0x58] sm:$0xff]
      %v283 = vld [vmem:[%s1 + $0x60] sm:$0xff]
      %v284 = vld [vmem:[%s1 + $0x68] sm:$0xff]
      %v285 = vld [vmem:[%s1 + $0x70] sm:$0xff]
      %v286 = vld [vmem:[%s1 + $0x78] sm:$0xff]
      %v287 = vld [vmem:[#allocation2 + $0x1] sm:$0xff]
      %v288 = vld [vmem:[#allocation2 + $0x9] sm:$0xff]
      %v289 = vld [vmem:[#allocation2 + $0x11] sm:$0xff]
      %v290 = vld [vmem:[#allocation2 + $0x19] sm:$0xff]
      %v291 = vld [vmem:[#allocation2 + $0x21] sm:$0xff]
      %v292 = vld [vmem:[#allocation2 + $0x29] sm:$0xff]
      %v293 = vld [vmem:[#allocation2 + $0x31] sm:$0xff]
      %v294 = vld [vmem:[#allocation2 + $0x39] sm:$0xff]
      %v295 = vld [vmem:[#allocation2 + $0x41] sm:$0xff]
      %v296 = vld [vmem:[#allocation2 + $0x49] sm:$0xff]
      %v297 = vld [vmem:[#allocation2 + $0x51] sm:$0xff]
      %v298 = vld [vmem:[#allocation2 + $0x59] sm:$0xff]
      %v299 = vld [vmem:[#allocation2 + $0x61] sm:$0xff]
      %v300 = vld [vmem:[#allocation2 + $0x69] sm:$0xff]
      %v301 = vld [vmem:[#allocation2 + $0x71] sm:$0xff]
      %v302 = vld [vmem:[#allocation2 + $0x79] sm:$0xff]
      %v303 = vld [vmem:[#allocation2 + $0x81] sm:$0xff]
      %v304 = vld [vmem:[#allocation2 + $0x89] sm:$0xff]
      %s305 = scalar_lea.vmem %s1, 128
      %v306 = vld [vmem:[%s305] sm:$0xff]
      %v307 = vld [vmem:[%s305 + $0x8] sm:$0xff]
      %v308 = vld [vmem:[%s305 + $0x10] sm:$0xff]
      %v309 = vld [vmem:[%s305 + $0x18] sm:$0xff]
      %v310 = vld [vmem:[%s305 + $0x20] sm:$0xff]
      %v311 = vld [vmem:[%s305 + $0x28] sm:$0xff]
      %v312 = vld [vmem:[%s305 + $0x30] sm:$0xff]
      %v313 = vld [vmem:[%s305 + $0x38] sm:$0xff]
      %v314 = vld [vmem:[%s305 + $0x40] sm:$0xff]
      %v315 = vld [vmem:[%s305 + $0x48] sm:$0xff]
      %v316 = vld [vmem:[%s305 + $0x50] sm:$0xff]
      %v317 = vld [vmem:[%s305 + $0x58] sm:$0xff]
      %v318 = vld [vmem:[%s305 + $0x60] sm:$0xff]
      %v319 = vld [vmem:[%s305 + $0x68] sm:$0xff]
      %v320 = vld [vmem:[%s305 + $0x70] sm:$0xff]
      %v321 = vld [vmem:[%s305 + $0x78] sm:$0xff]
      %322 = vmatprep.subr.mxu0 0.0
      %323 = vmatpush1.msra.mxu0 %v321
      %324 = vmatprep.subr.mxu0 0.0
      %325 = vmatpush1.msra.mxu0 %v320
      %326 = vmatprep.subr.mxu0 0.0
      %327 = vmatpush1.msra.mxu0 %v319
      %328 = vmatprep.subr.mxu0 0.0
      %329 = vmatpush1.msra.mxu0 %v318
      %330 = vmatprep.subr.mxu0 0.0
      %331 = vmatpush1.msra.mxu0 %v317
      %332 = vmatprep.subr.mxu0 0.0
      %333 = vmatpush1.msra.mxu0 %v316
      %334 = vmatprep.subr.mxu0 0.0
      %335 = vmatpush1.msra.mxu0 %v315
      %336 = vmatprep.subr.mxu0 0.0
      %337 = vmatpush1.msra.mxu0 %v314
      %338 = vmatprep.subr.mxu0 0.0
      %339 = vmatpush1.msra.mxu0 %v313
      %340 = vmatprep.subr.mxu0 0.0
      %341 = vmatpush1.msra.mxu0 %v312
      %342 = vmatprep.subr.mxu0 0.0
      %343 = vmatpush1.msra.mxu0 %v311
      %344 = vmatprep.subr.mxu0 0.0
      %345 = vmatpush1.msra.mxu0 %v310
      %346 = vmatprep.subr.mxu0 0.0
      %347 = vmatpush1.msra.mxu0 %v309
      %348 = vmatprep.subr.mxu0 0.0
      %349 = vmatpush1.msra.mxu0 %v308
      %350 = vmatprep.subr.mxu0 0.0
      %351 = vmatpush1.msra.mxu0 %v307
      %352 = vmatprep.subr.mxu0 0.0
      %353 = vmatpush1.msra.mxu0 %v306
      %354 = vmatprep.subr.mxu0 0.0
      %355 = vmatpush2.msra.mxu0 0.0
      %356 = vmatprep.subr.mxu0 0.0
      %357 = vmatpush2.msra.mxu0 0.0
      %358 = vmatprep.subr.mxu0 0.0
      %359 = vmatpush2.msra.mxu0 0.0
      %360 = vmatprep.subr.mxu0 0.0
      %361 = vmatpush2.msra.mxu0 0.0
      %362 = vmatprep.subr.mxu0 0.0
      %363 = vmatpush2.msra.mxu0 0.0
      %364 = vmatprep.subr.mxu0 0.0
      %365 = vmatpush2.msra.mxu0 0.0
      %366 = vmatprep.subr.mxu0 0.0
      %367 = vmatpush2.msra.mxu0 0.0
      %368 = vmatprep.subr.mxu0 0.0
      %369 = vmatpush2.msra.mxu0 0.0
      %370 = vmatprep.subr.mxu0 0.0
      %371 = vmatpush2.msra.mxu0 0.0
      %372 = vmatprep.subr.mxu0 0.0
      %373 = vmatpush2.msra.mxu0 0.0
      %374 = vmatprep.subr.mxu0 0.0
      %375 = vmatpush2.msra.mxu0 0.0
      %376 = vmatprep.subr.mxu0 0.0
      %377 = vmatpush2.msra.mxu0 0.0
      %378 = vmatprep.subr.mxu0 0.0
      %379 = vmatpush2.msra.mxu0 0.0
      %380 = vmatprep.subr.mxu0 0.0
      %381 = vmatpush2.msra.mxu0 0.0
      %382 = vmatprep.subr.mxu0 0.0
      %383 = vmatpush2.msra.mxu0 0.0
      %384 = vmatprep.subr.mxu0 0.0
      %385 = vmatpush2.msra.mxu0 0.0
      %386 = vmatprep.mubr.f32.mxu0 0.0
      %387 = vmatmul.mubr.f32.gmra.mxu0 %v287
      %v388 = vpop.f32.mrf.mxu0
      %v389 = vadd.f32 0.0, %v388
      %v390 = vpop.f32.mrf.mxu0
      %391 = vmatprep.mubr.f32.mxu0 0.0
      %392 = vmatmul.mubr.f32.gmra.mxu0 %v288
      %v393 = vpop.f32.mrf.mxu0
      %v394 = vadd.f32 0.0, %v393
      %v395 = vpop.f32.mrf.mxu0
      %396 = vmatprep.mubr.f32.mxu0 0.0
      %397 = vmatmul.mubr.f32.gmra.mxu0 %v289
      %v398 = vpop.f32.mrf.mxu0
      %v399 = vadd.f32 0.0, %v398
      %v400 = vpop.f32.mrf.mxu0
      %401 = vmatprep.mubr.f32.mxu0 0.0
      %402 = vmatmul.mubr.f32.gmra.mxu0 %v290
      %v403 = vpop.f32.mrf.mxu0
      %v404 = vadd.f32 0.0, %v403
      %v405 = vpop.f32.mrf.mxu0
      %406 = vmatprep.mubr.f32.mxu0 0.0
      %407 = vmatmul.mubr.f32.gmra.mxu0 %v291
      %v408 = vpop.f32.mrf.mxu0
      %v409 = vadd.f32 0.0, %v408
      %v410 = vpop.f32.mrf.mxu0
      %411 = vmatprep.mubr.f32.mxu0 0.0
      %412 = vmatmul.mubr.f32.gmra.mxu0 %v292
      %v413 = vpop.f32.mrf.mxu0
      %v414 = vadd.f32 0.0, %v413
      %v415 = vpop.f32.mrf.mxu0
      %416 = vmatprep.mubr.f32.mxu0 0.0
      %417 = vmatmul.mubr.f32.gmra.mxu0 %v293
      %v418 = vpop.f32.mrf.mxu0
      %v419 = vadd.f32 0.0, %v418
      %v420 = vpop.f32.mrf.mxu0
      %421 = vmatprep.mubr.f32.mxu0 0.0
      %422 = vmatmul.mubr.f32.gmra.mxu0 %v294
      %v423 = vpop.f32.mrf.mxu0
      %v424 = vadd.f32 0.0, %v423
      %v425 = vpop.f32.mrf.mxu0
      %426 = vmatprep.mubr.f32.mxu0 0.0
      %427 = vmatmul.mubr.f32.gmra.mxu0 %v295
      %v428 = vpop.f32.mrf.mxu0
      %v429 = vadd.f32 0.0, %v428
      %v430 = vpop.f32.mrf.mxu0
      %431 = vmatprep.mubr.f32.mxu0 0.0
      %432 = vmatmul.mubr.f32.gmra.mxu0 %v296
      %v433 = vpop.f32.mrf.mxu0
      %v434 = vadd.f32 0.0, %v433
      %v435 = vpop.f32.mrf.mxu0
      %436 = vmatprep.mubr.f32.mxu0 0.0
      %437 = vmatmul.mubr.f32.gmra.mxu0 %v297
      %v438 = vpop.f32.mrf.mxu0
      %v439 = vadd.f32 0.0, %v438
      %v440 = vpop.f32.mrf.mxu0
      %441 = vmatprep.mubr.f32.mxu0 0.0
      %442 = vmatmul.mubr.f32.gmra.mxu0 %v298
      %v443 = vpop.f32.mrf.mxu0
      %v444 = vadd.f32 0.0, %v443
      %v445 = vpop.f32.mrf.mxu0
      %446 = vmatprep.mubr.f32.mxu0 0.0
      %447 = vmatmul.mubr.f32.gmra.mxu0 %v299
      %v448 = vpop.f32.mrf.mxu0
      %v449 = vadd.f32 0.0, %v448
      %v450 = vpop.f32.mrf.mxu0
      %451 = vmatprep.mubr.f32.mxu0 0.0
      %452 = vmatmul.mubr.f32.gmra.mxu0 %v300
      %v453 = vpop.f32.mrf.mxu0
      %v454 = vadd.f32 0.0, %v453
      %v455 = vpop.f32.mrf.mxu0
      %456 = vmatprep.mubr.f32.mxu0 0.0
      %457 = vmatmul.mubr.f32.gmra.mxu0 %v301
      %v458 = vpop.f32.mrf.mxu0
      %v459 = vadd.f32 0.0, %v458
      %v460 = vpop.f32.mrf.mxu0
      %461 = vmatprep.mubr.f32.mxu0 0.0
      %462 = vmatmul.mubr.f32.gmra.mxu0 %v302
      %v463 = vpop.f32.mrf.mxu0
      %v464 = vadd.f32 0.0, %v463
      %v465 = vpop.f32.mrf.mxu0
      %466 = vmatprep.mubr.f32.mxu0 0.0
      %467 = vmatmul.mubr.f32.gmra.mxu0 %v303
      %v468 = vpop.f32.mrf.mxu0
      %v469 = vadd.f32 0.0, %v468
      %v470 = vpop.f32.mrf.mxu0
      %471 = vmatprep.mubr.f32.mxu0 0.0
      %472 = vmatmul.mubr.f32.gmra.mxu0 %v304
      %v473 = vpop.f32.mrf.mxu0
      %v474 = vadd.f32 0.0, %v473
      %v475 = vpop.f32.mrf.mxu0
      %476 = vdwg.mxu0
      %477 = vmatprep.subr.mxu0 0.0
      %478 = vmatpush1.msra.mxu0 %v286
      %479 = vmatprep.subr.mxu0 0.0
      %480 = vmatpush1.msra.mxu0 %v285
      %481 = vmatprep.subr.mxu0 0.0
      %482 = vmatpush1.msra.mxu0 %v284
      %483 = vmatprep.subr.mxu0 0.0
      %484 = vmatpush1.msra.mxu0 %v283
      %485 = vmatprep.subr.mxu0 0.0
      %486 = vmatpush1.msra.mxu0 %v282
      %487 = vmatprep.subr.mxu0 0.0
      %488 = vmatpush1.msra.mxu0 %v281
      %489 = vmatprep.subr.mxu0 0.0
      %490 = vmatpush1.msra.mxu0 %v280
      %491 = vmatprep.subr.mxu0 0.0
      %492 = vmatpush1.msra.mxu0 %v279
      %493 = vmatprep.subr.mxu0 0.0
      %494 = vmatpush1.msra.mxu0 %v278
      %495 = vmatprep.subr.mxu0 0.0
      %496 = vmatpush1.msra.mxu0 %v277
      %497 = vmatprep.subr.mxu0 0.0
      %498 = vmatpush1.msra.mxu0 %v276
      %499 = vmatprep.subr.mxu0 0.0
      %500 = vmatpush1.msra.mxu0 %v275
      %501 = vmatprep.subr.mxu0 0.0
      %502 = vmatpush1.msra.mxu0 %v274
      %503 = vmatprep.subr.mxu0 0.0
      %504 = vmatpush1.msra.mxu0 %v273
      %505 = vmatprep.subr.mxu0 0.0
      %506 = vmatpush1.msra.mxu0 %v272
      %507 = vmatprep.subr.mxu0 0.0
      %508 = vmatpush1.msra.mxu0 %v271
      %509 = vmatprep.subr.mxu0 0.0
      %510 = vmatpush2.msra.mxu0 0.0
      %511 = vmatprep.subr.mxu0 0.0
      %512 = vmatpush2.msra.mxu0 0.0
      %513 = vmatprep.subr.mxu0 0.0
      %514 = vmatpush2.msra.mxu0 0.0
      %515 = vmatprep.subr.mxu0 0.0
      %516 = vmatpush2.msra.mxu0 0.0
      %517 = vmatprep.subr.mxu0 0.0
      %518 = vmatpush2.msra.mxu0 0.0
      %519 = vmatprep.subr.mxu0 0.0
      %520 = vmatpush2.msra.mxu0 0.0
      %521 = vmatprep.subr.mxu0 0.0
      %522 = vmatpush2.msra.mxu0 0.0
      %523 = vmatprep.subr.mxu0 0.0
      %524 = vmatpush2.msra.mxu0 0.0
      %525 = vmatprep.subr.mxu0 0.0
      %526 = vmatpush2.msra.mxu0 0.0
      %527 = vmatprep.subr.mxu0 0.0
      %528 = vmatpush2.msra.mxu0 0.0
      %529 = vmatprep.subr.mxu0 0.0
      %530 = vmatpush2.msra.mxu0 0.0
      %531 = vmatprep.subr.mxu0 0.0
      %532 = vmatpush2.msra.mxu0 0.0
      %533 = vmatprep.subr.mxu0 0.0
      %534 = vmatpush2.msra.mxu0 0.0
      %535 = vmatprep.subr.mxu0 0.0
      %536 = vmatpush2.msra.mxu0 0.0
      %537 = vmatprep.subr.mxu0 0.0
      %538 = vmatpush2.msra.mxu0 0.0
      %539 = vmatprep.subr.mxu0 0.0
      %540 = vmatpush2.msra.mxu0 0.0
      %541 = vmatprep.mubr.f32.mxu0 0.0
      %542 = vmatmul.mubr.f32.gmra.mxu0 %v253
      %v543 = vpop.f32.mrf.mxu0
      %v544 = vadd.f32 %v389, %v543
      %v545 = vpop.f32.mrf.mxu0
      %546 = vmatprep.mubr.f32.mxu0 0.0
      %547 = vmatmul.mubr.f32.gmra.mxu0 %v254
      %v548 = vpop.f32.mrf.mxu0
      %v549 = vadd.f32 %v394, %v548
      %v550 = vpop.f32.mrf.mxu0
      %551 = vmatprep.mubr.f32.mxu0 0.0
      %552 = vmatmul.mubr.f32.gmra.mxu0 %v255
      %v553 = vpop.f32.mrf.mxu0
      %v554 = vadd.f32 %v399, %v553
      %v555 = vpop.f32.mrf.mxu0
      %556 = vmatprep.mubr.f32.mxu0 0.0
      %557 = vmatmul.mubr.f32.gmra.mxu0 %v256
      %v558 = vpop.f32.mrf.mxu0
      %v559 = vadd.f32 %v404, %v558
      %v560 = vpop.f32.mrf.mxu0
      %561 = vmatprep.mubr.f32.mxu0 0.0
      %562 = vmatmul.mubr.f32.gmra.mxu0 %v257
      %v563 = vpop.f32.mrf.mxu0
      %v564 = vadd.f32 %v409, %v563
      %v565 = vpop.f32.mrf.mxu0
      %566 = vmatprep.mubr.f32.mxu0 0.0
      %567 = vmatmul.mubr.f32.gmra.mxu0 %v258
      %v568 = vpop.f32.mrf.mxu0
      %v569 = vadd.f32 %v414, %v568
      %v570 = vpop.f32.mrf.mxu0
      %571 = vmatprep.mubr.f32.mxu0 0.0
      %572 = vmatmul.mubr.f32.gmra.mxu0 %v259
      %v573 = vpop.f32.mrf.mxu0
      %v574 = vadd.f32 %v419, %v573
      %v575 = vpop.f32.mrf.mxu0
      %576 = vmatprep.mubr.f32.mxu0 0.0
      %577 = vmatmul.mubr.f32.gmra.mxu0 %v260
      %v578 = vpop.f32.mrf.mxu0
      %v579 = vadd.f32 %v424, %v578
      %v580 = vpop.f32.mrf.mxu0
      %581 = vmatprep.mubr.f32.mxu0 0.0
      %582 = vmatmul.mubr.f32.gmra.mxu0 %v261
      %v583 = vpop.f32.mrf.mxu0
      %v584 = vadd.f32 %v429, %v583
      %v585 = vpop.f32.mrf.mxu0
      %586 = vmatprep.mubr.f32.mxu0 0.0
      %587 = vmatmul.mubr.f32.gmra.mxu0 %v262
      %v588 = vpop.f32.mrf.mxu0
      %v589 = vadd.f32 %v434, %v588
      %v590 = vpop.f32.mrf.mxu0
      %591 = vmatprep.mubr.f32.mxu0 0.0
      %592 = vmatmul.mubr.f32.gmra.mxu0 %v263
      %v593 = vpop.f32.mrf.mxu0
      %v594 = vadd.f32 %v439, %v593
      %v595 = vpop.f32.mrf.mxu0
      %596 = vmatprep.mubr.f32.mxu0 0.0
      %597 = vmatmul.mubr.f32.gmra.mxu0 %v264
      %v598 = vpop.f32.mrf.mxu0
      %v599 = vadd.f32 %v444, %v598
      %v600 = vpop.f32.mrf.mxu0
      %601 = vmatprep.mubr.f32.mxu0 0.0
      %602 = vmatmul.mubr.f32.gmra.mxu0 %v265
      %v603 = vpop.f32.mrf.mxu0
      %v604 = vadd.f32 %v449, %v603
      %v605 = vpop.f32.mrf.mxu0
      %606 = vmatprep.mubr.f32.mxu0 0.0
      %607 = vmatmul.mubr.f32.gmra.mxu0 %v266
      %v608 = vpop.f32.mrf.mxu0
      %v609 = vadd.f32 %v454, %v608
      %v610 = vpop.f32.mrf.mxu0
      %611 = vmatprep.mubr.f32.mxu0 0.0
      %612 = vmatmul.mubr.f32.gmra.mxu0 %v267
      %v613 = vpop.f32.mrf.mxu0
      %v614 = vadd.f32 %v459, %v613
      %v615 = vpop.f32.mrf.mxu0
      %616 = vmatprep.mubr.f32.mxu0 0.0
      %617 = vmatmul.mubr.f32.gmra.mxu0 %v268
      %v618 = vpop.f32.mrf.mxu0
      %v619 = vadd.f32 %v464, %v618
      %v620 = vpop.f32.mrf.mxu0
      %621 = vmatprep.mubr.f32.mxu0 0.0
      %622 = vmatmul.mubr.f32.gmra.mxu0 %v269
      %v623 = vpop.f32.mrf.mxu0
      %v624 = vadd.f32 %v469, %v623
      %v625 = vpop.f32.mrf.mxu0
      %626 = vmatprep.mubr.f32.mxu0 0.0
      %627 = vmatmul.mubr.f32.gmra.mxu0 %v270
      %v628 = vpop.f32.mrf.mxu0
      %v629 = vadd.f32 %v474, %v628
      %v630 = vpop.f32.mrf.mxu0
      %631 = vdwg.mxu0
      %v632 = vld [vmem:[#allocation2 + $0x2] sm:$0xff]
      %v633 = vld [vmem:[#allocation2 + $0xa] sm:$0xff]
      %v634 = vld [vmem:[#allocation2 + $0x12] sm:$0xff]
      %v635 = vld [vmem:[#allocation2 + $0x1a] sm:$0xff]
      %v636 = vld [vmem:[#allocation2 + $0x22] sm:$0xff]
      %v637 = vld [vmem:[#allocation2 + $0x2a] sm:$0xff]
      %v638 = vld [vmem:[#allocation2 + $0x32] sm:$0xff]
      %v639 = vld [vmem:[#allocation2 + $0x3a] sm:$0xff]
      %v640 = vld [vmem:[#allocation2 + $0x42] sm:$0xff]
      %v641 = vld [vmem:[#allocation2 + $0x4a] sm:$0xff]
      %v642 = vld [vmem:[#allocation2 + $0x52] sm:$0xff]
      %v643 = vld [vmem:[#allocation2 + $0x5a] sm:$0xff]
      %v644 = vld [vmem:[#allocation2 + $0x62] sm:$0xff]
      %v645 = vld [vmem:[#allocation2 + $0x6a] sm:$0xff]
      %v646 = vld [vmem:[#allocation2 + $0x72] sm:$0xff]
      %v647 = vld [vmem:[#allocation2 + $0x7a] sm:$0xff]
      %v648 = vld [vmem:[#allocation2 + $0x82] sm:$0xff]
      %v649 = vld [vmem:[#allocation2 + $0x8a] sm:$0xff]
      %s650 = scalar_lea.vmem %s1, 256
      %v651 = vld [vmem:[%s650] sm:$0xff]
      %v652 = vld [vmem:[%s650 + $0x8] sm:$0xff]
      %v653 = vld [vmem:[%s650 + $0x10] sm:$0xff]
      %v654 = vld [vmem:[%s650 + $0x18] sm:$0xff]
      %v655 = vld [vmem:[%s650 + $0x20] sm:$0xff]
      %v656 = vld [vmem:[%s650 + $0x28] sm:$0xff]
      %v657 = vld [vmem:[%s650 + $0x30] sm:$0xff]
      %v658 = vld [vmem:[%s650 + $0x38] sm:$0xff]
      %v659 = vld [vmem:[%s650 + $0x40] sm:$0xff]
      %v660 = vld [vmem:[%s650 + $0x48] sm:$0xff]
      %v661 = vld [vmem:[%s650 + $0x50] sm:$0xff]
      %v662 = vld [vmem:[%s650 + $0x58] sm:$0xff]
      %v663 = vld [vmem:[%s650 + $0x60] sm:$0xff]
      %v664 = vld [vmem:[%s650 + $0x68] sm:$0xff]
      %v665 = vld [vmem:[%s650 + $0x70] sm:$0xff]
      %v666 = vld [vmem:[%s650 + $0x78] sm:$0xff]
      %667 = vmatprep.subr.mxu0 0.0
      %668 = vmatpush1.msra.mxu0 %v666
      %669 = vmatprep.subr.mxu0 0.0
      %670 = vmatpush1.msra.mxu0 %v665
      %671 = vmatprep.subr.mxu0 0.0
      %672 = vmatpush1.msra.mxu0 %v664
      %673 = vmatprep.subr.mxu0 0.0
      %674 = vmatpush1.msra.mxu0 %v663
      %675 = vmatprep.subr.mxu0 0.0
      %676 = vmatpush1.msra.mxu0 %v662
      %677 = vmatprep.subr.mxu0 0.0
      %678 = vmatpush1.msra.mxu0 %v661
      %679 = vmatprep.subr.mxu0 0.0
      %680 = vmatpush1.msra.mxu0 %v660
      %681 = vmatprep.subr.mxu0 0.0
      %682 = vmatpush1.msra.mxu0 %v659
      %683 = vmatprep.subr.mxu0 0.0
      %684 = vmatpush1.msra.mxu0 %v658
      %685 = vmatprep.subr.mxu0 0.0
      %686 = vmatpush1.msra.mxu0 %v657
      %687 = vmatprep.subr.mxu0 0.0
      %688 = vmatpush1.msra.mxu0 %v656
      %689 = vmatprep.subr.mxu0 0.0
      %690 = vmatpush1.msra.mxu0 %v655
      %691 = vmatprep.subr.mxu0 0.0
      %692 = vmatpush1.msra.mxu0 %v654
      %693 = vmatprep.subr.mxu0 0.0
      %694 = vmatpush1.msra.mxu0 %v653
      %695 = vmatprep.subr.mxu0 0.0
      %696 = vmatpush1.msra.mxu0 %v652
      %697 = vmatprep.subr.mxu0 0.0
      %698 = vmatpush1.msra.mxu0 %v651
      %699 = vmatprep.subr.mxu0 0.0
      %700 = vmatpush2.msra.mxu0 0.0
      %701 = vmatprep.subr.mxu0 0.0
      %702 = vmatpush2.msra.mxu0 0.0
      %703 = vmatprep.subr.mxu0 0.0
      %704 = vmatpush2.msra.mxu0 0.0
      %705 = vmatprep.subr.mxu0 0.0
      %706 = vmatpush2.msra.mxu0 0.0
      %707 = vmatprep.subr.mxu0 0.0
      %708 = vmatpush2.msra.mxu0 0.0
      %709 = vmatprep.subr.mxu0 0.0
      %710 = vmatpush2.msra.mxu0 0.0
      %711 = vmatprep.subr.mxu0 0.0
      %712 = vmatpush2.msra.mxu0 0.0
      %713 = vmatprep.subr.mxu0 0.0
      %714 = vmatpush2.msra.mxu0 0.0
      %715 = vmatprep.subr.mxu0 0.0
      %716 = vmatpush2.msra.mxu0 0.0
      %717 = vmatprep.subr.mxu0 0.0
      %718 = vmatpush2.msra.mxu0 0.0
      %719 = vmatprep.subr.mxu0 0.0
      %720 = vmatpush2.msra.mxu0 0.0
      %721 = vmatprep.subr.mxu0 0.0
      %722 = vmatpush2.msra.mxu0 0.0
      %723 = vmatprep.subr.mxu0 0.0
      %724 = vmatpush2.msra.mxu0 0.0
      %725 = vmatprep.subr.mxu0 0.0
      %726 = vmatpush2.msra.mxu0 0.0
      %727 = vmatprep.subr.mxu0 0.0
      %728 = vmatpush2.msra.mxu0 0.0
      %729 = vmatprep.subr.mxu0 0.0
      %730 = vmatpush2.msra.mxu0 0.0
      %731 = vmatprep.mubr.f32.mxu0 0.0
      %732 = vmatmul.mubr.f32.gmra.mxu0 %v632
      %v733 = vpop.f32.mrf.mxu0
      %v734 = vadd.f32 0.0, %v733
      %v735 = vpop.f32.mrf.mxu0
      %736 = vmatprep.mubr.f32.mxu0 0.0
      %737 = vmatmul.mubr.f32.gmra.mxu0 %v633
      %v738 = vpop.f32.mrf.mxu0
      %v739 = vadd.f32 0.0, %v738
      %v740 = vpop.f32.mrf.mxu0
      %741 = vmatprep.mubr.f32.mxu0 0.0
      %742 = vmatmul.mubr.f32.gmra.mxu0 %v634
      %v743 = vpop.f32.mrf.mxu0
      %v744 = vadd.f32 0.0, %v743
      %v745 = vpop.f32.mrf.mxu0
      %746 = vmatprep.mubr.f32.mxu0 0.0
      %747 = vmatmul.mubr.f32.gmra.mxu0 %v635
      %v748 = vpop.f32.mrf.mxu0
      %v749 = vadd.f32 0.0, %v748
      %v750 = vpop.f32.mrf.mxu0
      %751 = vmatprep.mubr.f32.mxu0 0.0
      %752 = vmatmul.mubr.f32.gmra.mxu0 %v636
      %v753 = vpop.f32.mrf.mxu0
      %v754 = vadd.f32 0.0, %v753
      %v755 = vpop.f32.mrf.mxu0
      %756 = vmatprep.mubr.f32.mxu0 0.0
      %757 = vmatmul.mubr.f32.gmra.mxu0 %v637
      %v758 = vpop.f32.mrf.mxu0
      %v759 = vadd.f32 0.0, %v758
      %v760 = vpop.f32.mrf.mxu0
      %761 = vmatprep.mubr.f32.mxu0 0.0
      %762 = vmatmul.mubr.f32.gmra.mxu0 %v638
      %v763 = vpop.f32.mrf.mxu0
      %v764 = vadd.f32 0.0, %v763
      %v765 = vpop.f32.mrf.mxu0
      %766 = vmatprep.mubr.f32.mxu0 0.0
      %767 = vmatmul.mubr.f32.gmra.mxu0 %v639
      %v768 = vpop.f32.mrf.mxu0
      %v769 = vadd.f32 0.0, %v768
      %v770 = vpop.f32.mrf.mxu0
      %771 = vmatprep.mubr.f32.mxu0 0.0
      %772 = vmatmul.mubr.f32.gmra.mxu0 %v640
      %v773 = vpop.f32.mrf.mxu0
      %v774 = vadd.f32 0.0, %v773
      %v775 = vpop.f32.mrf.mxu0
      %776 = vmatprep.mubr.f32.mxu0 0.0
      %777 = vmatmul.mubr.f32.gmra.mxu0 %v641
      %v778 = vpop.f32.mrf.mxu0
      %v779 = vadd.f32 0.0, %v778
      %v780 = vpop.f32.mrf.mxu0
      %781 = vmatprep.mubr.f32.mxu0 0.0
      %782 = vmatmul.mubr.f32.gmra.mxu0 %v642
      %v783 = vpop.f32.mrf.mxu0
      %v784 = vadd.f32 0.0, %v783
      %v785 = vpop.f32.mrf.mxu0
      %786 = vmatprep.mubr.f32.mxu0 0.0
      %787 = vmatmul.mubr.f32.gmra.mxu0 %v643
      %v788 = vpop.f32.mrf.mxu0
      %v789 = vadd.f32 0.0, %v788
      %v790 = vpop.f32.mrf.mxu0
      %791 = vmatprep.mubr.f32.mxu0 0.0
      %792 = vmatmul.mubr.f32.gmra.mxu0 %v644
      %v793 = vpop.f32.mrf.mxu0
      %v794 = vadd.f32 0.0, %v793
      %v795 = vpop.f32.mrf.mxu0
      %796 = vmatprep.mubr.f32.mxu0 0.0
      %797 = vmatmul.mubr.f32.gmra.mxu0 %v645
      %v798 = vpop.f32.mrf.mxu0
      %v799 = vadd.f32 0.0, %v798
      %v800 = vpop.f32.mrf.mxu0
      %801 = vmatprep.mubr.f32.mxu0 0.0
      %802 = vmatmul.mubr.f32.gmra.mxu0 %v646
      %v803 = vpop.f32.mrf.mxu0
      %v804 = vadd.f32 0.0, %v803
      %v805 = vpop.f32.mrf.mxu0
      %806 = vmatprep.mubr.f32.mxu0 0.0
      %807 = vmatmul.mubr.f32.gmra.mxu0 %v647
      %v808 = vpop.f32.mrf.mxu0
      %v809 = vadd.f32 0.0, %v808
      %v810 = vpop.f32.mrf.mxu0
      %811 = vmatprep.mubr.f32.mxu0 0.0
      %812 = vmatmul.mubr.f32.gmra.mxu0 %v648
      %v813 = vpop.f32.mrf.mxu0
      %v814 = vadd.f32 0.0, %v813
      %v815 = vpop.f32.mrf.mxu0
      %816 = vmatprep.mubr.f32.mxu0 0.0
      %817 = vmatmul.mubr.f32.gmra.mxu0 %v649
      %v818 = vpop.f32.mrf.mxu0
      %v819 = vadd.f32 0.0, %v818
      %v820 = vpop.f32.mrf.mxu0
      %821 = vdwg.mxu0
      %v822 = vadd.f32 %v544, %v734
      %v823 = vadd.f32 %v549, %v739
      %v824 = vadd.f32 %v554, %v744
      %v825 = vadd.f32 %v559, %v749
      %v826 = vadd.f32 %v564, %v754
      %v827 = vadd.f32 %v569, %v759
      %v828 = vadd.f32 %v574, %v764
      %v829 = vadd.f32 %v579, %v769
      %v830 = vadd.f32 %v584, %v774
      %v831 = vadd.f32 %v589, %v779
      %v832 = vadd.f32 %v594, %v784
      %v833 = vadd.f32 %v599, %v789
      %v834 = vadd.f32 %v604, %v794
      %v835 = vadd.f32 %v609, %v799
      %v836 = vadd.f32 %v614, %v804
      %v837 = vadd.f32 %v619, %v809
      %v838 = vadd.f32 %v624, %v814
      %v839 = vadd.f32 %v629, %v819
      %v840 = vld [vmem:[#allocation2 + $0x12] sm:$0xff]
      %v841 = vld [vmem:[#allocation2 + $0x1a] sm:$0xff]
      %v842 = vld [vmem:[#allocation2 + $0x22] sm:$0xff]
      %v843 = vld [vmem:[#allocation2 + $0x2a] sm:$0xff]
      %v844 = vld [vmem:[#allocation2 + $0x32] sm:$0xff]
      %v845 = vld [vmem:[#allocation2 + $0x3a] sm:$0xff]
      %v846 = vld [vmem:[#allocation2 + $0x42] sm:$0xff]
      %v847 = vld [vmem:[#allocation2 + $0x4a] sm:$0xff]
      %v848 = vld [vmem:[#allocation2 + $0x52] sm:$0xff]
      %v849 = vld [vmem:[#allocation2 + $0x5a] sm:$0xff]
      %v850 = vld [vmem:[#allocation2 + $0x62] sm:$0xff]
      %v851 = vld [vmem:[#allocation2 + $0x6a] sm:$0xff]
      %v852 = vld [vmem:[#allocation2 + $0x72] sm:$0xff]
      %v853 = vld [vmem:[#allocation2 + $0x7a] sm:$0xff]
      %v854 = vld [vmem:[#allocation2 + $0x82] sm:$0xff]
      %v855 = vld [vmem:[#allocation2 + $0x8a] sm:$0xff]
      %v856 = vld [vmem:[#allocation2 + $0x92] sm:$0xff]
      %v857 = vld [vmem:[#allocation2 + $0x9a] sm:$0xff]
      %s858 = scalar_lea.vmem %s1, 384
      %v859 = vld [vmem:[%s858] sm:$0xff]
      %v860 = vld [vmem:[%s858 + $0x8] sm:$0xff]
      %v861 = vld [vmem:[%s858 + $0x10] sm:$0xff]
      %v862 = vld [vmem:[%s858 + $0x18] sm:$0xff]
      %v863 = vld [vmem:[%s858 + $0x20] sm:$0xff]
      %v864 = vld [vmem:[%s858 + $0x28] sm:$0xff]
      %v865 = vld [vmem:[%s858 + $0x30] sm:$0xff]
      %v866 = vld [vmem:[%s858 + $0x38] sm:$0xff]
      %v867 = vld [vmem:[%s858 + $0x40] sm:$0xff]
      %v868 = vld [vmem:[%s858 + $0x48] sm:$0xff]
      %v869 = vld [vmem:[%s858 + $0x50] sm:$0xff]
      %v870 = vld [vmem:[%s858 + $0x58] sm:$0xff]
      %v871 = vld [vmem:[%s858 + $0x60] sm:$0xff]
      %v872 = vld [vmem:[%s858 + $0x68] sm:$0xff]
      %v873 = vld [vmem:[%s858 + $0x70] sm:$0xff]
      %v874 = vld [vmem:[%s858 + $0x78] sm:$0xff]
      %875 = vmatprep.subr.mxu0 0.0
      %876 = vmatpush1.msra.mxu0 %v874
      %877 = vmatprep.subr.mxu0 0.0
      %878 = vmatpush1.msra.mxu0 %v873
      %879 = vmatprep.subr.mxu0 0.0
      %880 = vmatpush1.msra.mxu0 %v872
      %881 = vmatprep.subr.mxu0 0.0
      %882 = vmatpush1.msra.mxu0 %v871
      %883 = vmatprep.subr.mxu0 0.0
      %884 = vmatpush1.msra.mxu0 %v870
      %885 = vmatprep.subr.mxu0 0.0
      %886 = vmatpush1.msra.mxu0 %v869
      %887 = vmatprep.subr.mxu0 0.0
      %888 = vmatpush1.msra.mxu0 %v868
      %889 = vmatprep.subr.mxu0 0.0
      %890 = vmatpush1.msra.mxu0 %v867
      %891 = vmatprep.subr.mxu0 0.0
      %892 = vmatpush1.msra.mxu0 %v866
      %893 = vmatprep.subr.mxu0 0.0
      %894 = vmatpush1.msra.mxu0 %v865
      %895 = vmatprep.subr.mxu0 0.0
      %896 = vmatpush1.msra.mxu0 %v864
      %897 = vmatprep.subr.mxu0 0.0
      %898 = vmatpush1.msra.mxu0 %v863
      %899 = vmatprep.subr.mxu0 0.0
      %900 = vmatpush1.msra.mxu0 %v862
      %901 = vmatprep.subr.mxu0 0.0
      %902 = vmatpush1.msra.mxu0 %v861
      %903 = vmatprep.subr.mxu0 0.0
      %904 = vmatpush1.msra.mxu0 %v860
      %905 = vmatprep.subr.mxu0 0.0
      %906 = vmatpush1.msra.mxu0 %v859
      %907 = vmatprep.subr.mxu0 0.0
      %908 = vmatpush2.msra.mxu0 0.0
      %909 = vmatprep.subr.mxu0 0.0
      %910 = vmatpush2.msra.mxu0 0.0
      %911 = vmatprep.subr.mxu0 0.0
      %912 = vmatpush2.msra.mxu0 0.0
      %913 = vmatprep.subr.mxu0 0.0
      %914 = vmatpush2.msra.mxu0 0.0
      %915 = vmatprep.subr.mxu0 0.0
      %916 = vmatpush2.msra.mxu0 0.0
      %917 = vmatprep.subr.mxu0 0.0
      %918 = vmatpush2.msra.mxu0 0.0
      %919 = vmatprep.subr.mxu0 0.0
      %920 = vmatpush2.msra.mxu0 0.0
      %921 = vmatprep.subr.mxu0 0.0
      %922 = vmatpush2.msra.mxu0 0.0
      %923 = vmatprep.subr.mxu0 0.0
      %924 = vmatpush2.msra.mxu0 0.0
      %925 = vmatprep.subr.mxu0 0.0
      %926 = vmatpush2.msra.mxu0 0.0
      %927 = vmatprep.subr.mxu0 0.0
      %928 = vmatpush2.msra.mxu0 0.0
      %929 = vmatprep.subr.mxu0 0.0
      %930 = vmatpush2.msra.mxu0 0.0
      %931 = vmatprep.subr.mxu0 0.0
      %932 = vmatpush2.msra.mxu0 0.0
      %933 = vmatprep.subr.mxu0 0.0
      %934 = vmatpush2.msra.mxu0 0.0
      %935 = vmatprep.subr.mxu0 0.0
      %936 = vmatpush2.msra.mxu0 0.0
      %937 = vmatprep.subr.mxu0 0.0
      %938 = vmatpush2.msra.mxu0 0.0
      %939 = vmatprep.mubr.f32.mxu0 0.0
      %940 = vmatmul.mubr.f32.gmra.mxu0 %v840
      %v941 = vpop.f32.mrf.mxu0
      %v942 = vadd.f32 0.0, %v941
      %v943 = vpop.f32.mrf.mxu0
      %944 = vmatprep.mubr.f32.mxu0 0.0
      %945 = vmatmul.mubr.f32.gmra.mxu0 %v841
      %v946 = vpop.f32.mrf.mxu0
      %v947 = vadd.f32 0.0, %v946
      %v948 = vpop.f32.mrf.mxu0
      %949 = vmatprep.mubr.f32.mxu0 0.0
      %950 = vmatmul.mubr.f32.gmra.mxu0 %v842
      %v951 = vpop.f32.mrf.mxu0
      %v952 = vadd.f32 0.0, %v951
      %v953 = vpop.f32.mrf.mxu0
      %954 = vmatprep.mubr.f32.mxu0 0.0
      %955 = vmatmul.mubr.f32.gmra.mxu0 %v843
      %v956 = vpop.f32.mrf.mxu0
      %v957 = vadd.f32 0.0, %v956
      %v958 = vpop.f32.mrf.mxu0
      %959 = vmatprep.mubr.f32.mxu0 0.0
      %960 = vmatmul.mubr.f32.gmra.mxu0 %v844
      %v961 = vpop.f32.mrf.mxu0
      %v962 = vadd.f32 0.0, %v961
      %v963 = vpop.f32.mrf.mxu0
      %964 = vmatprep.mubr.f32.mxu0 0.0
      %965 = vmatmul.mubr.f32.gmra.mxu0 %v845
      %v966 = vpop.f32.mrf.mxu0
      %v967 = vadd.f32 0.0, %v966
      %v968 = vpop.f32.mrf.mxu0
      %969 = vmatprep.mubr.f32.mxu0 0.0
      %970 = vmatmul.mubr.f32.gmra.mxu0 %v846
      %v971 = vpop.f32.mrf.mxu0
      %v972 = vadd.f32 0.0, %v971
      %v973 = vpop.f32.mrf.mxu0
      %974 = vmatprep.mubr.f32.mxu0 0.0
      %975 = vmatmul.mubr.f32.gmra.mxu0 %v847
      %v976 = vpop.f32.mrf.mxu0
      %v977 = vadd.f32 0.0, %v976
      %v978 = vpop.f32.mrf.mxu0
      %979 = vmatprep.mubr.f32.mxu0 0.0
      %980 = vmatmul.mubr.f32.gmra.mxu0 %v848
      %v981 = vpop.f32.mrf.mxu0
      %v982 = vadd.f32 0.0, %v981
      %v983 = vpop.f32.mrf.mxu0
      %984 = vmatprep.mubr.f32.mxu0 0.0
      %985 = vmatmul.mubr.f32.gmra.mxu0 %v849
      %v986 = vpop.f32.mrf.mxu0
      %v987 = vadd.f32 0.0, %v986
      %v988 = vpop.f32.mrf.mxu0
      %989 = vmatprep.mubr.f32.mxu0 0.0
      %990 = vmatmul.mubr.f32.gmra.mxu0 %v850
      %v991 = vpop.f32.mrf.mxu0
      %v992 = vadd.f32 0.0, %v991
      %v993 = vpop.f32.mrf.mxu0
      %994 = vmatprep.mubr.f32.mxu0 0.0
      %995 = vmatmul.mubr.f32.gmra.mxu0 %v851
      %v996 = vpop.f32.mrf.mxu0
      %v997 = vadd.f32 0.0, %v996
      %v998 = vpop.f32.mrf.mxu0
      %999 = vmatprep.mubr.f32.mxu0 0.0
      %1000 = vmatmul.mubr.f32.gmra.mxu0 %v852
      %v1001 = vpop.f32.mrf.mxu0
      %v1002 = vadd.f32 0.0, %v1001
      %v1003 = vpop.f32.mrf.mxu0
      %1004 = vmatprep.mubr.f32.mxu0 0.0
      %1005 = vmatmul.mubr.f32.gmra.mxu0 %v853
      %v1006 = vpop.f32.mrf.mxu0
      %v1007 = vadd.f32 0.0, %v1006
      %v1008 = vpop.f32.mrf.mxu0
      %1009 = vmatprep.mubr.f32.mxu0 0.0
      %1010 = vmatmul.mubr.f32.gmra.mxu0 %v854
      %v1011 = vpop.f32.mrf.mxu0
      %v1012 = vadd.f32 0.0, %v1011
      %v1013 = vpop.f32.mrf.mxu0
      %1014 = vmatprep.mubr.f32.mxu0 0.0
      %1015 = vmatmul.mubr.f32.gmra.mxu0 %v855
      %v1016 = vpop.f32.mrf.mxu0
      %v1017 = vadd.f32 0.0, %v1016
      %v1018 = vpop.f32.mrf.mxu0
      %1019 = vmatprep.mubr.f32.mxu0 0.0
      %1020 = vmatmul.mubr.f32.gmra.mxu0 %v856
      %v1021 = vpop.f32.mrf.mxu0
      %v1022 = vadd.f32 0.0, %v1021
      %v1023 = vpop.f32.mrf.mxu0
      %1024 = vmatprep.mubr.f32.mxu0 0.0
      %1025 = vmatmul.mubr.f32.gmra.mxu0 %v857
      %v1026 = vpop.f32.mrf.mxu0
      %v1027 = vadd.f32 0.0, %v1026
      %v1028 = vpop.f32.mrf.mxu0
      %1029 = vdwg.mxu0
      %v1030 = vadd.f32 %v822, %v942
      %v1031 = vadd.f32 %v823, %v947
      %v1032 = vadd.f32 %v824, %v952
      %v1033 = vadd.f32 %v825, %v957
      %v1034 = vadd.f32 %v826, %v962
      %v1035 = vadd.f32 %v827, %v967
      %v1036 = vadd.f32 %v828, %v972
      %v1037 = vadd.f32 %v829, %v977
      %v1038 = vadd.f32 %v830, %v982
      %v1039 = vadd.f32 %v831, %v987
      %v1040 = vadd.f32 %v832, %v992
      %v1041 = vadd.f32 %v833, %v997
      %v1042 = vadd.f32 %v834, %v1002
      %v1043 = vadd.f32 %v835, %v1007
      %v1044 = vadd.f32 %v836, %v1012
      %v1045 = vadd.f32 %v837, %v1017
      %v1046 = vadd.f32 %v838, %v1022
      %v1047 = vadd.f32 %v839, %v1027
      %v1048 = vld [vmem:[#allocation2 + $0x13] sm:$0xff]
      %v1049 = vld [vmem:[#allocation2 + $0x1b] sm:$0xff]
      %v1050 = vld [vmem:[#allocation2 + $0x23] sm:$0xff]
      %v1051 = vld [vmem:[#allocation2 + $0x2b] sm:$0xff]
      %v1052 = vld [vmem:[#allocation2 + $0x33] sm:$0xff]
      %v1053 = vld [vmem:[#allocation2 + $0x3b] sm:$0xff]
      %v1054 = vld [vmem:[#allocation2 + $0x43] sm:$0xff]
      %v1055 = vld [vmem:[#allocation2 + $0x4b] sm:$0xff]
      %v1056 = vld [vmem:[#allocation2 + $0x53] sm:$0xff]
      %v1057 = vld [vmem:[#allocation2 + $0x5b] sm:$0xff]
      %v1058 = vld [vmem:[#allocation2 + $0x63] sm:$0xff]
      %v1059 = vld [vmem:[#allocation2 + $0x6b] sm:$0xff]
      %v1060 = vld [vmem:[#allocation2 + $0x73] sm:$0xff]
      %v1061 = vld [vmem:[#allocation2 + $0x7b] sm:$0xff]
      %v1062 = vld [vmem:[#allocation2 + $0x83] sm:$0xff]
      %v1063 = vld [vmem:[#allocation2 + $0x8b] sm:$0xff]
      %v1064 = vld [vmem:[#allocation2 + $0x93] sm:$0xff]
      %v1065 = vld [vmem:[#allocation2 + $0x9b] sm:$0xff]
      %s1066 = scalar_lea.vmem %s1, 512
      %v1067 = vld [vmem:[%s1066] sm:$0xff]
      %v1068 = vld [vmem:[%s1066 + $0x8] sm:$0xff]
      %v1069 = vld [vmem:[%s1066 + $0x10] sm:$0xff]
      %v1070 = vld [vmem:[%s1066 + $0x18] sm:$0xff]
      %v1071 = vld [vmem:[%s1066 + $0x20] sm:$0xff]
      %v1072 = vld [vmem:[%s1066 + $0x28] sm:$0xff]
      %v1073 = vld [vmem:[%s1066 + $0x30] sm:$0xff]
      %v1074 = vld [vmem:[%s1066 + $0x38] sm:$0xff]
      %v1075 = vld [vmem:[%s1066 + $0x40] sm:$0xff]
      %v1076 = vld [vmem:[%s1066 + $0x48] sm:$0xff]
      %v1077 = vld [vmem:[%s1066 + $0x50] sm:$0xff]
      %v1078 = vld [vmem:[%s1066 + $0x58] sm:$0xff]
      %v1079 = vld [vmem:[%s1066 + $0x60] sm:$0xff]
      %v1080 = vld [vmem:[%s1066 + $0x68] sm:$0xff]
      %v1081 = vld [vmem:[%s1066 + $0x70] sm:$0xff]
      %v1082 = vld [vmem:[%s1066 + $0x78] sm:$0xff]
      %1083 = vmatprep.subr.mxu0 0.0
      %1084 = vmatpush1.msra.mxu0 %v1082
      %1085 = vmatprep.subr.mxu0 0.0
      %1086 = vmatpush1.msra.mxu0 %v1081
      %1087 = vmatprep.subr.mxu0 0.0
      %1088 = vmatpush1.msra.mxu0 %v1080
      %1089 = vmatprep.subr.mxu0 0.0
      %1090 = vmatpush1.msra.mxu0 %v1079
      %1091 = vmatprep.subr.mxu0 0.0
      %1092 = vmatpush1.msra.mxu0 %v1078
      %1093 = vmatprep.subr.mxu0 0.0
      %1094 = vmatpush1.msra.mxu0 %v1077
      %1095 = vmatprep.subr.mxu0 0.0
      %1096 = vmatpush1.msra.mxu0 %v1076
      %1097 = vmatprep.subr.mxu0 0.0
      %1098 = vmatpush1.msra.mxu0 %v1075
      %1099 = vmatprep.subr.mxu0 0.0
      %1100 = vmatpush1.msra.mxu0 %v1074
      %1101 = vmatprep.subr.mxu0 0.0
      %1102 = vmatpush1.msra.mxu0 %v1073
      %1103 = vmatprep.subr.mxu0 0.0
      %1104 = vmatpush1.msra.mxu0 %v1072
      %1105 = vmatprep.subr.mxu0 0.0
      %1106 = vmatpush1.msra.mxu0 %v1071
      %1107 = vmatprep.subr.mxu0 0.0
      %1108 = vmatpush1.msra.mxu0 %v1070
      %1109 = vmatprep.subr.mxu0 0.0
      %1110 = vmatpush1.msra.mxu0 %v1069
      %1111 = vmatprep.subr.mxu0 0.0
      %1112 = vmatpush1.msra.mxu0 %v1068
      %1113 = vmatprep.subr.mxu0 0.0
      %1114 = vmatpush1.msra.mxu0 %v1067
      %1115 = vmatprep.subr.mxu0 0.0
      %1116 = vmatpush2.msra.mxu0 0.0
      %1117 = vmatprep.subr.mxu0 0.0
      %1118 = vmatpush2.msra.mxu0 0.0
      %1119 = vmatprep.subr.mxu0 0.0
      %1120 = vmatpush2.msra.mxu0 0.0
      %1121 = vmatprep.subr.mxu0 0.0
      %1122 = vmatpush2.msra.mxu0 0.0
      %1123 = vmatprep.subr.mxu0 0.0
      %1124 = vmatpush2.msra.mxu0 0.0
      %1125 = vmatprep.subr.mxu0 0.0
      %1126 = vmatpush2.msra.mxu0 0.0
      %1127 = vmatprep.subr.mxu0 0.0
      %1128 = vmatpush2.msra.mxu0 0.0
      %1129 = vmatprep.subr.mxu0 0.0
      %1130 = vmatpush2.msra.mxu0 0.0
      %1131 = vmatprep.subr.mxu0 0.0
      %1132 = vmatpush2.msra.mxu0 0.0
      %1133 = vmatprep.subr.mxu0 0.0
      %1134 = vmatpush2.msra.mxu0 0.0
      %1135 = vmatprep.subr.mxu0 0.0
      %1136 = vmatpush2.msra.mxu0 0.0
      %1137 = vmatprep.subr.mxu0 0.0
      %1138 = vmatpush2.msra.mxu0 0.0
      %1139 = vmatprep.subr.mxu0 0.0
      %1140 = vmatpush2.msra.mxu0 0.0
      %1141 = vmatprep.subr.mxu0 0.0
      %1142 = vmatpush2.msra.mxu0 0.0
      %1143 = vmatprep.subr.mxu0 0.0
      %1144 = vmatpush2.msra.mxu0 0.0
      %1145 = vmatprep.subr.mxu0 0.0
      %1146 = vmatpush2.msra.mxu0 0.0
      %1147 = vmatprep.mubr.f32.mxu0 0.0
      %1148 = vmatmul.mubr.f32.gmra.mxu0 %v1048
      %v1149 = vpop.f32.mrf.mxu0
      %v1150 = vadd.f32 0.0, %v1149
      %v1151 = vpop.f32.mrf.mxu0
      %1152 = vmatprep.mubr.f32.mxu0 0.0
      %1153 = vmatmul.mubr.f32.gmra.mxu0 %v1049
      %v1154 = vpop.f32.mrf.mxu0
      %v1155 = vadd.f32 0.0, %v1154
      %v1156 = vpop.f32.mrf.mxu0
      %1157 = vmatprep.mubr.f32.mxu0 0.0
      %1158 = vmatmul.mubr.f32.gmra.mxu0 %v1050
      %v1159 = vpop.f32.mrf.mxu0
      %v1160 = vadd.f32 0.0, %v1159
      %v1161 = vpop.f32.mrf.mxu0
      %1162 = vmatprep.mubr.f32.mxu0 0.0
      %1163 = vmatmul.mubr.f32.gmra.mxu0 %v1051
      %v1164 = vpop.f32.mrf.mxu0
      %v1165 = vadd.f32 0.0, %v1164
      %v1166 = vpop.f32.mrf.mxu0
      %1167 = vmatprep.mubr.f32.mxu0 0.0
      %1168 = vmatmul.mubr.f32.gmra.mxu0 %v1052
      %v1169 = vpop.f32.mrf.mxu0
      %v1170 = vadd.f32 0.0, %v1169
      %v1171 = vpop.f32.mrf.mxu0
      %1172 = vmatprep.mubr.f32.mxu0 0.0
      %1173 = vmatmul.mubr.f32.gmra.mxu0 %v1053
      %v1174 = vpop.f32.mrf.mxu0
      %v1175 = vadd.f32 0.0, %v1174
      %v1176 = vpop.f32.mrf.mxu0
      %1177 = vmatprep.mubr.f32.mxu0 0.0
      %1178 = vmatmul.mubr.f32.gmra.mxu0 %v1054
      %v1179 = vpop.f32.mrf.mxu0
      %v1180 = vadd.f32 0.0, %v1179
      %v1181 = vpop.f32.mrf.mxu0
      %1182 = vmatprep.mubr.f32.mxu0 0.0
      %1183 = vmatmul.mubr.f32.gmra.mxu0 %v1055
      %v1184 = vpop.f32.mrf.mxu0
      %v1185 = vadd.f32 0.0, %v1184
      %v1186 = vpop.f32.mrf.mxu0
      %1187 = vmatprep.mubr.f32.mxu0 0.0
      %1188 = vmatmul.mubr.f32.gmra.mxu0 %v1056
      %v1189 = vpop.f32.mrf.mxu0
      %v1190 = vadd.f32 0.0, %v1189
      %v1191 = vpop.f32.mrf.mxu0
      %1192 = vmatprep.mubr.f32.mxu0 0.0
      %1193 = vmatmul.mubr.f32.gmra.mxu0 %v1057
      %v1194 = vpop.f32.mrf.mxu0
      %v1195 = vadd.f32 0.0, %v1194
      %v1196 = vpop.f32.mrf.mxu0
      %1197 = vmatprep.mubr.f32.mxu0 0.0
      %1198 = vmatmul.mubr.f32.gmra.mxu0 %v1058
      %v1199 = vpop.f32.mrf.mxu0
      %v1200 = vadd.f32 0.0, %v1199
      %v1201 = vpop.f32.mrf.mxu0
      %1202 = vmatprep.mubr.f32.mxu0 0.0
      %1203 = vmatmul.mubr.f32.gmra.mxu0 %v1059
      %v1204 = vpop.f32.mrf.mxu0
      %v1205 = vadd.f32 0.0, %v1204
      %v1206 = vpop.f32.mrf.mxu0
      %1207 = vmatprep.mubr.f32.mxu0 0.0
      %1208 = vmatmul.mubr.f32.gmra.mxu0 %v1060
      %v1209 = vpop.f32.mrf.mxu0
      %v1210 = vadd.f32 0.0, %v1209
      %v1211 = vpop.f32.mrf.mxu0
      %1212 = vmatprep.mubr.f32.mxu0 0.0
      %1213 = vmatmul.mubr.f32.gmra.mxu0 %v1061
      %v1214 = vpop.f32.mrf.mxu0
      %v1215 = vadd.f32 0.0, %v1214
      %v1216 = vpop.f32.mrf.mxu0
      %1217 = vmatprep.mubr.f32.mxu0 0.0
      %1218 = vmatmul.mubr.f32.gmra.mxu0 %v1062
      %v1219 = vpop.f32.mrf.mxu0
      %v1220 = vadd.f32 0.0, %v1219
      %v1221 = vpop.f32.mrf.mxu0
      %1222 = vmatprep.mubr.f32.mxu0 0.0
      %1223 = vmatmul.mubr.f32.gmra.mxu0 %v1063
      %v1224 = vpop.f32.mrf.mxu0
      %v1225 = vadd.f32 0.0, %v1224
      %v1226 = vpop.f32.mrf.mxu0
      %1227 = vmatprep.mubr.f32.mxu0 0.0
      %1228 = vmatmul.mubr.f32.gmra.mxu0 %v1064
      %v1229 = vpop.f32.mrf.mxu0
      %v1230 = vadd.f32 0.0, %v1229
      %v1231 = vpop.f32.mrf.mxu0
      %1232 = vmatprep.mubr.f32.mxu0 0.0
      %1233 = vmatmul.mubr.f32.gmra.mxu0 %v1065
      %v1234 = vpop.f32.mrf.mxu0
      %v1235 = vadd.f32 0.0, %v1234
      %v1236 = vpop.f32.mrf.mxu0
      %1237 = vdwg.mxu0
      %v1238 = vadd.f32 %v1030, %v1150
      %v1239 = vadd.f32 %v1031, %v1155
      %v1240 = vadd.f32 %v1032, %v1160
      %v1241 = vadd.f32 %v1033, %v1165
      %v1242 = vadd.f32 %v1034, %v1170
      %v1243 = vadd.f32 %v1035, %v1175
      %v1244 = vadd.f32 %v1036, %v1180
      %v1245 = vadd.f32 %v1037, %v1185
      %v1246 = vadd.f32 %v1038, %v1190
      %v1247 = vadd.f32 %v1039, %v1195
      %v1248 = vadd.f32 %v1040, %v1200
      %v1249 = vadd.f32 %v1041, %v1205
      %v1250 = vadd.f32 %v1042, %v1210
      %v1251 = vadd.f32 %v1043, %v1215
      %v1252 = vadd.f32 %v1044, %v1220
      %v1253 = vadd.f32 %v1045, %v1225
      %v1254 = vadd.f32 %v1046, %v1230
      %v1255 = vadd.f32 %v1047, %v1235
      %v1256 = vld [vmem:[#allocation2 + $0x14] sm:$0xff]
      %v1257 = vld [vmem:[#allocation2 + $0x1c] sm:$0xff]
      %v1258 = vld [vmem:[#allocation2 + $0x24] sm:$0xff]
      %v1259 = vld [vmem:[#allocation2 + $0x2c] sm:$0xff]
      %v1260 = vld [vmem:[#allocation2 + $0x34] sm:$0xff]
      %v1261 = vld [vmem:[#allocation2 + $0x3c] sm:$0xff]
      %v1262 = vld [vmem:[#allocation2 + $0x44] sm:$0xff]
      %v1263 = vld [vmem:[#allocation2 + $0x4c] sm:$0xff]
      %v1264 = vld [vmem:[#allocation2 + $0x54] sm:$0xff]
      %v1265 = vld [vmem:[#allocation2 + $0x5c] sm:$0xff]
      %v1266 = vld [vmem:[#allocation2 + $0x64] sm:$0xff]
      %v1267 = vld [vmem:[#allocation2 + $0x6c] sm:$0xff]
      %v1268 = vld [vmem:[#allocation2 + $0x74] sm:$0xff]
      %v1269 = vld [vmem:[#allocation2 + $0x7c] sm:$0xff]
      %v1270 = vld [vmem:[#allocation2 + $0x84] sm:$0xff]
      %v1271 = vld [vmem:[#allocation2 + $0x8c] sm:$0xff]
      %v1272 = vld [vmem:[#allocation2 + $0x94] sm:$0xff]
      %v1273 = vld [vmem:[#allocation2 + $0x9c] sm:$0xff]
      %s1274 = scalar_lea.vmem %s1, 640
      %v1275 = vld [vmem:[%s1274] sm:$0xff]
      %v1276 = vld [vmem:[%s1274 + $0x8] sm:$0xff]
      %v1277 = vld [vmem:[%s1274 + $0x10] sm:$0xff]
      %v1278 = vld [vmem:[%s1274 + $0x18] sm:$0xff]
      %v1279 = vld [vmem:[%s1274 + $0x20] sm:$0xff]
      %v1280 = vld [vmem:[%s1274 + $0x28] sm:$0xff]
      %v1281 = vld [vmem:[%s1274 + $0x30] sm:$0xff]
      %v1282 = vld [vmem:[%s1274 + $0x38] sm:$0xff]
      %v1283 = vld [vmem:[%s1274 + $0x40] sm:$0xff]
      %v1284 = vld [vmem:[%s1274 + $0x48] sm:$0xff]
      %v1285 = vld [vmem:[%s1274 + $0x50] sm:$0xff]
      %v1286 = vld [vmem:[%s1274 + $0x58] sm:$0xff]
      %v1287 = vld [vmem:[%s1274 + $0x60] sm:$0xff]
      %v1288 = vld [vmem:[%s1274 + $0x68] sm:$0xff]
      %v1289 = vld [vmem:[%s1274 + $0x70] sm:$0xff]
      %v1290 = vld [vmem:[%s1274 + $0x78] sm:$0xff]
      %1291 = vmatprep.subr.mxu0 0.0
      %1292 = vmatpush1.msra.mxu0 %v1290
      %1293 = vmatprep.subr.mxu0 0.0
      %1294 = vmatpush1.msra.mxu0 %v1289
      %1295 = vmatprep.subr.mxu0 0.0
      %1296 = vmatpush1.msra.mxu0 %v1288
      %1297 = vmatprep.subr.mxu0 0.0
      %1298 = vmatpush1.msra.mxu0 %v1287
      %1299 = vmatprep.subr.mxu0 0.0
      %1300 = vmatpush1.msra.mxu0 %v1286
      %1301 = vmatprep.subr.mxu0 0.0
      %1302 = vmatpush1.msra.mxu0 %v1285
      %1303 = vmatprep.subr.mxu0 0.0
      %1304 = vmatpush1.msra.mxu0 %v1284
      %1305 = vmatprep.subr.mxu0 0.0
      %1306 = vmatpush1.msra.mxu0 %v1283
      %1307 = vmatprep.subr.mxu0 0.0
      %1308 = vmatpush1.msra.mxu0 %v1282
      %1309 = vmatprep.subr.mxu0 0.0
      %1310 = vmatpush1.msra.mxu0 %v1281
      %1311 = vmatprep.subr.mxu0 0.0
      %1312 = vmatpush1.msra.mxu0 %v1280
      %1313 = vmatprep.subr.mxu0 0.0
      %1314 = vmatpush1.msra.mxu0 %v1279
      %1315 = vmatprep.subr.mxu0 0.0
      %1316 = vmatpush1.msra.mxu0 %v1278
      %1317 = vmatprep.subr.mxu0 0.0
      %1318 = vmatpush1.msra.mxu0 %v1277
      %1319 = vmatprep.subr.mxu0 0.0
      %1320 = vmatpush1.msra.mxu0 %v1276
      %1321 = vmatprep.subr.mxu0 0.0
      %1322 = vmatpush1.msra.mxu0 %v1275
      %1323 = vmatprep.subr.mxu0 0.0
      %1324 = vmatpush2.msra.mxu0 0.0
      %1325 = vmatprep.subr.mxu0 0.0
      %1326 = vmatpush2.msra.mxu0 0.0
      %1327 = vmatprep.subr.mxu0 0.0
      %1328 = vmatpush2.msra.mxu0 0.0
      %1329 = vmatprep.subr.mxu0 0.0
      %1330 = vmatpush2.msra.mxu0 0.0
      %1331 = vmatprep.subr.mxu0 0.0
      %1332 = vmatpush2.msra.mxu0 0.0
      %1333 = vmatprep.subr.mxu0 0.0
      %1334 = vmatpush2.msra.mxu0 0.0
      %1335 = vmatprep.subr.mxu0 0.0
      %1336 = vmatpush2.msra.mxu0 0.0
      %1337 = vmatprep.subr.mxu0 0.0
      %1338 = vmatpush2.msra.mxu0 0.0
      %1339 = vmatprep.subr.mxu0 0.0
      %1340 = vmatpush2.msra.mxu0 0.0
      %1341 = vmatprep.subr.mxu0 0.0
      %1342 = vmatpush2.msra.mxu0 0.0
      %1343 = vmatprep.subr.mxu0 0.0
      %1344 = vmatpush2.msra.mxu0 0.0
      %1345 = vmatprep.subr.mxu0 0.0
      %1346 = vmatpush2.msra.mxu0 0.0
      %1347 = vmatprep.subr.mxu0 0.0
      %1348 = vmatpush2.msra.mxu0 0.0
      %1349 = vmatprep.subr.mxu0 0.0
      %1350 = vmatpush2.msra.mxu0 0.0
      %1351 = vmatprep.subr.mxu0 0.0
      %1352 = vmatpush2.msra.mxu0 0.0
      %1353 = vmatprep.subr.mxu0 0.0
      %1354 = vmatpush2.msra.mxu0 0.0
      %1355 = vmatprep.mubr.f32.mxu0 0.0
      %1356 = vmatmul.mubr.f32.gmra.mxu0 %v1256
      %v1357 = vpop.f32.mrf.mxu0
      %v1358 = vadd.f32 0.0, %v1357
      %v1359 = vpop.f32.mrf.mxu0
      %1360 = vmatprep.mubr.f32.mxu0 0.0
      %1361 = vmatmul.mubr.f32.gmra.mxu0 %v1257
      %v1362 = vpop.f32.mrf.mxu0
      %v1363 = vadd.f32 0.0, %v1362
      %v1364 = vpop.f32.mrf.mxu0
      %1365 = vmatprep.mubr.f32.mxu0 0.0
      %1366 = vmatmul.mubr.f32.gmra.mxu0 %v1258
      %v1367 = vpop.f32.mrf.mxu0
      %v1368 = vadd.f32 0.0, %v1367
      %v1369 = vpop.f32.mrf.mxu0
      %1370 = vmatprep.mubr.f32.mxu0 0.0
      %1371 = vmatmul.mubr.f32.gmra.mxu0 %v1259
      %v1372 = vpop.f32.mrf.mxu0
      %v1373 = vadd.f32 0.0, %v1372
      %v1374 = vpop.f32.mrf.mxu0
      %1375 = vmatprep.mubr.f32.mxu0 0.0
      %1376 = vmatmul.mubr.f32.gmra.mxu0 %v1260
      %v1377 = vpop.f32.mrf.mxu0
      %v1378 = vadd.f32 0.0, %v1377
      %v1379 = vpop.f32.mrf.mxu0
      %1380 = vmatprep.mubr.f32.mxu0 0.0
      %1381 = vmatmul.mubr.f32.gmra.mxu0 %v1261
      %v1382 = vpop.f32.mrf.mxu0
      %v1383 = vadd.f32 0.0, %v1382
      %v1384 = vpop.f32.mrf.mxu0
      %1385 = vmatprep.mubr.f32.mxu0 0.0
      %1386 = vmatmul.mubr.f32.gmra.mxu0 %v1262
      %v1387 = vpop.f32.mrf.mxu0
      %v1388 = vadd.f32 0.0, %v1387
      %v1389 = vpop.f32.mrf.mxu0
      %1390 = vmatprep.mubr.f32.mxu0 0.0
      %1391 = vmatmul.mubr.f32.gmra.mxu0 %v1263
      %v1392 = vpop.f32.mrf.mxu0
      %v1393 = vadd.f32 0.0, %v1392
      %v1394 = vpop.f32.mrf.mxu0
      %1395 = vmatprep.mubr.f32.mxu0 0.0
      %1396 = vmatmul.mubr.f32.gmra.mxu0 %v1264
      %v1397 = vpop.f32.mrf.mxu0
      %v1398 = vadd.f32 0.0, %v1397
      %v1399 = vpop.f32.mrf.mxu0
      %1400 = vmatprep.mubr.f32.mxu0 0.0
      %1401 = vmatmul.mubr.f32.gmra.mxu0 %v1265
      %v1402 = vpop.f32.mrf.mxu0
      %v1403 = vadd.f32 0.0, %v1402
      %v1404 = vpop.f32.mrf.mxu0
      %1405 = vmatprep.mubr.f32.mxu0 0.0
      %1406 = vmatmul.mubr.f32.gmra.mxu0 %v1266
      %v1407 = vpop.f32.mrf.mxu0
      %v1408 = vadd.f32 0.0, %v1407
      %v1409 = vpop.f32.mrf.mxu0
      %1410 = vmatprep.mubr.f32.mxu0 0.0
      %1411 = vmatmul.mubr.f32.gmra.mxu0 %v1267
      %v1412 = vpop.f32.mrf.mxu0
      %v1413 = vadd.f32 0.0, %v1412
      %v1414 = vpop.f32.mrf.mxu0
      %1415 = vmatprep.mubr.f32.mxu0 0.0
      %1416 = vmatmul.mubr.f32.gmra.mxu0 %v1268
      %v1417 = vpop.f32.mrf.mxu0
      %v1418 = vadd.f32 0.0, %v1417
      %v1419 = vpop.f32.mrf.mxu0
      %1420 = vmatprep.mubr.f32.mxu0 0.0
      %1421 = vmatmul.mubr.f32.gmra.mxu0 %v1269
      %v1422 = vpop.f32.mrf.mxu0
      %v1423 = vadd.f32 0.0, %v1422
      %v1424 = vpop.f32.mrf.mxu0
      %1425 = vmatprep.mubr.f32.mxu0 0.0
      %1426 = vmatmul.mubr.f32.gmra.mxu0 %v1270
      %v1427 = vpop.f32.mrf.mxu0
      %v1428 = vadd.f32 0.0, %v1427
      %v1429 = vpop.f32.mrf.mxu0
      %1430 = vmatprep.mubr.f32.mxu0 0.0
      %1431 = vmatmul.mubr.f32.gmra.mxu0 %v1271
      %v1432 = vpop.f32.mrf.mxu0
      %v1433 = vadd.f32 0.0, %v1432
      %v1434 = vpop.f32.mrf.mxu0
      %1435 = vmatprep.mubr.f32.mxu0 0.0
      %1436 = vmatmul.mubr.f32.gmra.mxu0 %v1272
      %v1437 = vpop.f32.mrf.mxu0
      %v1438 = vadd.f32 0.0, %v1437
      %v1439 = vpop.f32.mrf.mxu0
      %1440 = vmatprep.mubr.f32.mxu0 0.0
      %1441 = vmatmul.mubr.f32.gmra.mxu0 %v1273
      %v1442 = vpop.f32.mrf.mxu0
      %v1443 = vadd.f32 0.0, %v1442
      %v1444 = vpop.f32.mrf.mxu0
      %1445 = vdwg.mxu0
      %v1446 = vadd.f32 %v1238, %v1358
      %v1447 = vadd.f32 %v1239, %v1363
      %v1448 = vadd.f32 %v1240, %v1368
      %v1449 = vadd.f32 %v1241, %v1373
      %v1450 = vadd.f32 %v1242, %v1378
      %v1451 = vadd.f32 %v1243, %v1383
      %v1452 = vadd.f32 %v1244, %v1388
      %v1453 = vadd.f32 %v1245, %v1393
      %v1454 = vadd.f32 %v1246, %v1398
      %v1455 = vadd.f32 %v1247, %v1403
      %v1456 = vadd.f32 %v1248, %v1408
      %v1457 = vadd.f32 %v1249, %v1413
      %v1458 = vadd.f32 %v1250, %v1418
      %v1459 = vadd.f32 %v1251, %v1423
      %v1460 = vadd.f32 %v1252, %v1428
      %v1461 = vadd.f32 %v1253, %v1433
      %v1462 = vadd.f32 %v1254, %v1438
      %v1463 = vadd.f32 %v1255, %v1443
      %v1464 = vld [vmem:[#allocation2 + $0x24] sm:$0xff]
      %v1465 = vld [vmem:[#allocation2 + $0x2c] sm:$0xff]
      %v1466 = vld [vmem:[#allocation2 + $0x34] sm:$0xff]
      %v1467 = vld [vmem:[#allocation2 + $0x3c] sm:$0xff]
      %v1468 = vld [vmem:[#allocation2 + $0x44] sm:$0xff]
      %v1469 = vld [vmem:[#allocation2 + $0x4c] sm:$0xff]
      %v1470 = vld [vmem:[#allocation2 + $0x54] sm:$0xff]
      %v1471 = vld [vmem:[#allocation2 + $0x5c] sm:$0xff]
      %v1472 = vld [vmem:[#allocation2 + $0x64] sm:$0xff]
      %v1473 = vld [vmem:[#allocation2 + $0x6c] sm:$0xff]
      %v1474 = vld [vmem:[#allocation2 + $0x74] sm:$0xff]
      %v1475 = vld [vmem:[#allocation2 + $0x7c] sm:$0xff]
      %v1476 = vld [vmem:[#allocation2 + $0x84] sm:$0xff]
      %v1477 = vld [vmem:[#allocation2 + $0x8c] sm:$0xff]
      %v1478 = vld [vmem:[#allocation2 + $0x94] sm:$0xff]
      %v1479 = vld [vmem:[#allocation2 + $0x9c] sm:$0xff]
      %v1480 = vld [vmem:[#allocation2 + $0xa4] sm:$0xff]
      %v1481 = vld [vmem:[#allocation2 + $0xac] sm:$0xff]
      %s1482 = scalar_lea.vmem %s1, 768
      %v1483 = vld [vmem:[%s1482] sm:$0xff]
      %v1484 = vld [vmem:[%s1482 + $0x8] sm:$0xff]
      %v1485 = vld [vmem:[%s1482 + $0x10] sm:$0xff]
      %v1486 = vld [vmem:[%s1482 + $0x18] sm:$0xff]
      %v1487 = vld [vmem:[%s1482 + $0x20] sm:$0xff]
      %v1488 = vld [vmem:[%s1482 + $0x28] sm:$0xff]
      %v1489 = vld [vmem:[%s1482 + $0x30] sm:$0xff]
      %v1490 = vld [vmem:[%s1482 + $0x38] sm:$0xff]
      %v1491 = vld [vmem:[%s1482 + $0x40] sm:$0xff]
      %v1492 = vld [vmem:[%s1482 + $0x48] sm:$0xff]
      %v1493 = vld [vmem:[%s1482 + $0x50] sm:$0xff]
      %v1494 = vld [vmem:[%s1482 + $0x58] sm:$0xff]
      %v1495 = vld [vmem:[%s1482 + $0x60] sm:$0xff]
      %v1496 = vld [vmem:[%s1482 + $0x68] sm:$0xff]
      %v1497 = vld [vmem:[%s1482 + $0x70] sm:$0xff]
      %v1498 = vld [vmem:[%s1482 + $0x78] sm:$0xff]
      %1499 = vmatprep.subr.mxu0 0.0
      %1500 = vmatpush1.msra.mxu0 %v1498
      %1501 = vmatprep.subr.mxu0 0.0
      %1502 = vmatpush1.msra.mxu0 %v1497
      %1503 = vmatprep.subr.mxu0 0.0
      %1504 = vmatpush1.msra.mxu0 %v1496
      %1505 = vmatprep.subr.mxu0 0.0
      %1506 = vmatpush1.msra.mxu0 %v1495
      %1507 = vmatprep.subr.mxu0 0.0
      %1508 = vmatpush1.msra.mxu0 %v1494
      %1509 = vmatprep.subr.mxu0 0.0
      %1510 = vmatpush1.msra.mxu0 %v1493
      %1511 = vmatprep.subr.mxu0 0.0
      %1512 = vmatpush1.msra.mxu0 %v1492
      %1513 = vmatprep.subr.mxu0 0.0
      %1514 = vmatpush1.msra.mxu0 %v1491
      %1515 = vmatprep.subr.mxu0 0.0
      %1516 = vmatpush1.msra.mxu0 %v1490
      %1517 = vmatprep.subr.mxu0 0.0
      %1518 = vmatpush1.msra.mxu0 %v1489
      %1519 = vmatprep.subr.mxu0 0.0
      %1520 = vmatpush1.msra.mxu0 %v1488
      %1521 = vmatprep.subr.mxu0 0.0
      %1522 = vmatpush1.msra.mxu0 %v1487
      %1523 = vmatprep.subr.mxu0 0.0
      %1524 = vmatpush1.msra.mxu0 %v1486
      %1525 = vmatprep.subr.mxu0 0.0
      %1526 = vmatpush1.msra.mxu0 %v1485
      %1527 = vmatprep.subr.mxu0 0.0
      %1528 = vmatpush1.msra.mxu0 %v1484
      %1529 = vmatprep.subr.mxu0 0.0
      %1530 = vmatpush1.msra.mxu0 %v1483
      %1531 = vmatprep.subr.mxu0 0.0
      %1532 = vmatpush2.msra.mxu0 0.0
      %1533 = vmatprep.subr.mxu0 0.0
      %1534 = vmatpush2.msra.mxu0 0.0
      %1535 = vmatprep.subr.mxu0 0.0
      %1536 = vmatpush2.msra.mxu0 0.0
      %1537 = vmatprep.subr.mxu0 0.0
      %1538 = vmatpush2.msra.mxu0 0.0
      %1539 = vmatprep.subr.mxu0 0.0
      %1540 = vmatpush2.msra.mxu0 0.0
      %1541 = vmatprep.subr.mxu0 0.0
      %1542 = vmatpush2.msra.mxu0 0.0
      %1543 = vmatprep.subr.mxu0 0.0
      %1544 = vmatpush2.msra.mxu0 0.0
      %1545 = vmatprep.subr.mxu0 0.0
      %1546 = vmatpush2.msra.mxu0 0.0
      %1547 = vmatprep.subr.mxu0 0.0
      %1548 = vmatpush2.msra.mxu0 0.0
      %1549 = vmatprep.subr.mxu0 0.0
      %1550 = vmatpush2.msra.mxu0 0.0
      %1551 = vmatprep.subr.mxu0 0.0
      %1552 = vmatpush2.msra.mxu0 0.0
      %1553 = vmatprep.subr.mxu0 0.0
      %1554 = vmatpush2.msra.mxu0 0.0
      %1555 = vmatprep.subr.mxu0 0.0
      %1556 = vmatpush2.msra.mxu0 0.0
      %1557 = vmatprep.subr.mxu0 0.0
      %1558 = vmatpush2.msra.mxu0 0.0
      %1559 = vmatprep.subr.mxu0 0.0
      %1560 = vmatpush2.msra.mxu0 0.0
      %1561 = vmatprep.subr.mxu0 0.0
      %1562 = vmatpush2.msra.mxu0 0.0
      %1563 = vmatprep.mubr.f32.mxu0 0.0
      %1564 = vmatmul.mubr.f32.gmra.mxu0 %v1464
      %v1565 = vpop.f32.mrf.mxu0
      %v1566 = vadd.f32 0.0, %v1565
      %v1567 = vpop.f32.mrf.mxu0
      %1568 = vmatprep.mubr.f32.mxu0 0.0
      %1569 = vmatmul.mubr.f32.gmra.mxu0 %v1465
      %v1570 = vpop.f32.mrf.mxu0
      %v1571 = vadd.f32 0.0, %v1570
      %v1572 = vpop.f32.mrf.mxu0
      %1573 = vmatprep.mubr.f32.mxu0 0.0
      %1574 = vmatmul.mubr.f32.gmra.mxu0 %v1466
      %v1575 = vpop.f32.mrf.mxu0
      %v1576 = vadd.f32 0.0, %v1575
      %v1577 = vpop.f32.mrf.mxu0
      %1578 = vmatprep.mubr.f32.mxu0 0.0
      %1579 = vmatmul.mubr.f32.gmra.mxu0 %v1467
      %v1580 = vpop.f32.mrf.mxu0
      %v1581 = vadd.f32 0.0, %v1580
      %v1582 = vpop.f32.mrf.mxu0
      %1583 = vmatprep.mubr.f32.mxu0 0.0
      %1584 = vmatmul.mubr.f32.gmra.mxu0 %v1468
      %v1585 = vpop.f32.mrf.mxu0
      %v1586 = vadd.f32 0.0, %v1585
      %v1587 = vpop.f32.mrf.mxu0
      %1588 = vmatprep.mubr.f32.mxu0 0.0
      %1589 = vmatmul.mubr.f32.gmra.mxu0 %v1469
      %v1590 = vpop.f32.mrf.mxu0
      %v1591 = vadd.f32 0.0, %v1590
      %v1592 = vpop.f32.mrf.mxu0
      %1593 = vmatprep.mubr.f32.mxu0 0.0
      %1594 = vmatmul.mubr.f32.gmra.mxu0 %v1470
      %v1595 = vpop.f32.mrf.mxu0
      %v1596 = vadd.f32 0.0, %v1595
      %v1597 = vpop.f32.mrf.mxu0
      %1598 = vmatprep.mubr.f32.mxu0 0.0
      %1599 = vmatmul.mubr.f32.gmra.mxu0 %v1471
      %v1600 = vpop.f32.mrf.mxu0
      %v1601 = vadd.f32 0.0, %v1600
      %v1602 = vpop.f32.mrf.mxu0
      %1603 = vmatprep.mubr.f32.mxu0 0.0
      %1604 = vmatmul.mubr.f32.gmra.mxu0 %v1472
      %v1605 = vpop.f32.mrf.mxu0
      %v1606 = vadd.f32 0.0, %v1605
      %v1607 = vpop.f32.mrf.mxu0
      %1608 = vmatprep.mubr.f32.mxu0 0.0
      %1609 = vmatmul.mubr.f32.gmra.mxu0 %v1473
      %v1610 = vpop.f32.mrf.mxu0
      %v1611 = vadd.f32 0.0, %v1610
      %v1612 = vpop.f32.mrf.mxu0
      %1613 = vmatprep.mubr.f32.mxu0 0.0
      %1614 = vmatmul.mubr.f32.gmra.mxu0 %v1474
      %v1615 = vpop.f32.mrf.mxu0
      %v1616 = vadd.f32 0.0, %v1615
      %v1617 = vpop.f32.mrf.mxu0
      %1618 = vmatprep.mubr.f32.mxu0 0.0
      %1619 = vmatmul.mubr.f32.gmra.mxu0 %v1475
      %v1620 = vpop.f32.mrf.mxu0
      %v1621 = vadd.f32 0.0, %v1620
      %v1622 = vpop.f32.mrf.mxu0
      %1623 = vmatprep.mubr.f32.mxu0 0.0
      %1624 = vmatmul.mubr.f32.gmra.mxu0 %v1476
      %v1625 = vpop.f32.mrf.mxu0
      %v1626 = vadd.f32 0.0, %v1625
      %v1627 = vpop.f32.mrf.mxu0
      %1628 = vmatprep.mubr.f32.mxu0 0.0
      %1629 = vmatmul.mubr.f32.gmra.mxu0 %v1477
      %v1630 = vpop.f32.mrf.mxu0
      %v1631 = vadd.f32 0.0, %v1630
      %v1632 = vpop.f32.mrf.mxu0
      %1633 = vmatprep.mubr.f32.mxu0 0.0
      %1634 = vmatmul.mubr.f32.gmra.mxu0 %v1478
      %v1635 = vpop.f32.mrf.mxu0
      %v1636 = vadd.f32 0.0, %v1635
      %v1637 = vpop.f32.mrf.mxu0
      %1638 = vmatprep.mubr.f32.mxu0 0.0
      %1639 = vmatmul.mubr.f32.gmra.mxu0 %v1479
      %v1640 = vpop.f32.mrf.mxu0
      %v1641 = vadd.f32 0.0, %v1640
      %v1642 = vpop.f32.mrf.mxu0
      %1643 = vmatprep.mubr.f32.mxu0 0.0
      %1644 = vmatmul.mubr.f32.gmra.mxu0 %v1480
      %v1645 = vpop.f32.mrf.mxu0
      %v1646 = vadd.f32 0.0, %v1645
      %v1647 = vpop.f32.mrf.mxu0
      %1648 = vmatprep.mubr.f32.mxu0 0.0
      %1649 = vmatmul.mubr.f32.gmra.mxu0 %v1481
      %v1650 = vpop.f32.mrf.mxu0
      %v1651 = vadd.f32 0.0, %v1650
      %v1652 = vpop.f32.mrf.mxu0
      %1653 = vdwg.mxu0
      %v1654 = vadd.f32 %v1446, %v1566
      %v1655 = vadd.f32 %v1447, %v1571
      %v1656 = vadd.f32 %v1448, %v1576
      %v1657 = vadd.f32 %v1449, %v1581
      %v1658 = vadd.f32 %v1450, %v1586
      %v1659 = vadd.f32 %v1451, %v1591
      %v1660 = vadd.f32 %v1452, %v1596
      %v1661 = vadd.f32 %v1453, %v1601
      %v1662 = vadd.f32 %v1454, %v1606
      %v1663 = vadd.f32 %v1455, %v1611
      %v1664 = vadd.f32 %v1456, %v1616
      %v1665 = vadd.f32 %v1457, %v1621
      %v1666 = vadd.f32 %v1458, %v1626
      %v1667 = vadd.f32 %v1459, %v1631
      %v1668 = vadd.f32 %v1460, %v1636
      %v1669 = vadd.f32 %v1461, %v1641
      %v1670 = vadd.f32 %v1462, %v1646
      %v1671 = vadd.f32 %v1463, %v1651
      %v1672 = vld [vmem:[#allocation2 + $0x25] sm:$0xff]
      %v1673 = vld [vmem:[#allocation2 + $0x2d] sm:$0xff]
      %v1674 = vld [vmem:[#allocation2 + $0x35] sm:$0xff]
      %v1675 = vld [vmem:[#allocation2 + $0x3d] sm:$0xff]
      %v1676 = vld [vmem:[#allocation2 + $0x45] sm:$0xff]
      %v1677 = vld [vmem:[#allocation2 + $0x4d] sm:$0xff]
      %v1678 = vld [vmem:[#allocation2 + $0x55] sm:$0xff]
      %v1679 = vld [vmem:[#allocation2 + $0x5d] sm:$0xff]
      %v1680 = vld [vmem:[#allocation2 + $0x65] sm:$0xff]
      %v1681 = vld [vmem:[#allocation2 + $0x6d] sm:$0xff]
      %v1682 = vld [vmem:[#allocation2 + $0x75] sm:$0xff]
      %v1683 = vld [vmem:[#allocation2 + $0x7d] sm:$0xff]
      %v1684 = vld [vmem:[#allocation2 + $0x85] sm:$0xff]
      %v1685 = vld [vmem:[#allocation2 + $0x8d] sm:$0xff]
      %v1686 = vld [vmem:[#allocation2 + $0x95] sm:$0xff]
      %v1687 = vld [vmem:[#allocation2 + $0x9d] sm:$0xff]
      %v1688 = vld [vmem:[#allocation2 + $0xa5] sm:$0xff]
      %v1689 = vld [vmem:[#allocation2 + $0xad] sm:$0xff]
      %s1690 = scalar_lea.vmem %s1, 896
      %v1691 = vld [vmem:[%s1690] sm:$0xff]
      %v1692 = vld [vmem:[%s1690 + $0x8] sm:$0xff]
      %v1693 = vld [vmem:[%s1690 + $0x10] sm:$0xff]
      %v1694 = vld [vmem:[%s1690 + $0x18] sm:$0xff]
      %v1695 = vld [vmem:[%s1690 + $0x20] sm:$0xff]
      %v1696 = vld [vmem:[%s1690 + $0x28] sm:$0xff]
      %v1697 = vld [vmem:[%s1690 + $0x30] sm:$0xff]
      %v1698 = vld [vmem:[%s1690 + $0x38] sm:$0xff]
      %v1699 = vld [vmem:[%s1690 + $0x40] sm:$0xff]
      %v1700 = vld [vmem:[%s1690 + $0x48] sm:$0xff]
      %v1701 = vld [vmem:[%s1690 + $0x50] sm:$0xff]
      %v1702 = vld [vmem:[%s1690 + $0x58] sm:$0xff]
      %v1703 = vld [vmem:[%s1690 + $0x60] sm:$0xff]
      %v1704 = vld [vmem:[%s1690 + $0x68] sm:$0xff]
      %v1705 = vld [vmem:[%s1690 + $0x70] sm:$0xff]
      %v1706 = vld [vmem:[%s1690 + $0x78] sm:$0xff]
      %1707 = vmatprep.subr.mxu0 0.0
      %1708 = vmatpush1.msra.mxu0 %v1706
      %1709 = vmatprep.subr.mxu0 0.0
      %1710 = vmatpush1.msra.mxu0 %v1705
      %1711 = vmatprep.subr.mxu0 0.0
      %1712 = vmatpush1.msra.mxu0 %v1704
      %1713 = vmatprep.subr.mxu0 0.0
      %1714 = vmatpush1.msra.mxu0 %v1703
      %1715 = vmatprep.subr.mxu0 0.0
      %1716 = vmatpush1.msra.mxu0 %v1702
      %1717 = vmatprep.subr.mxu0 0.0
      %1718 = vmatpush1.msra.mxu0 %v1701
      %1719 = vmatprep.subr.mxu0 0.0
      %1720 = vmatpush1.msra.mxu0 %v1700
      %1721 = vmatprep.subr.mxu0 0.0
      %1722 = vmatpush1.msra.mxu0 %v1699
      %1723 = vmatprep.subr.mxu0 0.0
      %1724 = vmatpush1.msra.mxu0 %v1698
      %1725 = vmatprep.subr.mxu0 0.0
      %1726 = vmatpush1.msra.mxu0 %v1697
      %1727 = vmatprep.subr.mxu0 0.0
      %1728 = vmatpush1.msra.mxu0 %v1696
      %1729 = vmatprep.subr.mxu0 0.0
      %1730 = vmatpush1.msra.mxu0 %v1695
      %1731 = vmatprep.subr.mxu0 0.0
      %1732 = vmatpush1.msra.mxu0 %v1694
      %1733 = vmatprep.subr.mxu0 0.0
      %1734 = vmatpush1.msra.mxu0 %v1693
      %1735 = vmatprep.subr.mxu0 0.0
      %1736 = vmatpush1.msra.mxu0 %v1692
      %1737 = vmatprep.subr.mxu0 0.0
      %1738 = vmatpush1.msra.mxu0 %v1691
      %1739 = vmatprep.subr.mxu0 0.0
      %1740 = vmatpush2.msra.mxu0 0.0
      %1741 = vmatprep.subr.mxu0 0.0
      %1742 = vmatpush2.msra.mxu0 0.0
      %1743 = vmatprep.subr.mxu0 0.0
      %1744 = vmatpush2.msra.mxu0 0.0
      %1745 = vmatprep.subr.mxu0 0.0
      %1746 = vmatpush2.msra.mxu0 0.0
      %1747 = vmatprep.subr.mxu0 0.0
      %1748 = vmatpush2.msra.mxu0 0.0
      %1749 = vmatprep.subr.mxu0 0.0
      %1750 = vmatpush2.msra.mxu0 0.0
      %1751 = vmatprep.subr.mxu0 0.0
      %1752 = vmatpush2.msra.mxu0 0.0
      %1753 = vmatprep.subr.mxu0 0.0
      %1754 = vmatpush2.msra.mxu0 0.0
      %1755 = vmatprep.subr.mxu0 0.0
      %1756 = vmatpush2.msra.mxu0 0.0
      %1757 = vmatprep.subr.mxu0 0.0
      %1758 = vmatpush2.msra.mxu0 0.0
      %1759 = vmatprep.subr.mxu0 0.0
      %1760 = vmatpush2.msra.mxu0 0.0
      %1761 = vmatprep.subr.mxu0 0.0
      %1762 = vmatpush2.msra.mxu0 0.0
      %1763 = vmatprep.subr.mxu0 0.0
      %1764 = vmatpush2.msra.mxu0 0.0
      %1765 = vmatprep.subr.mxu0 0.0
      %1766 = vmatpush2.msra.mxu0 0.0
      %1767 = vmatprep.subr.mxu0 0.0
      %1768 = vmatpush2.msra.mxu0 0.0
      %1769 = vmatprep.subr.mxu0 0.0
      %1770 = vmatpush2.msra.mxu0 0.0
      %1771 = vmatprep.mubr.f32.mxu0 0.0
      %1772 = vmatmul.mubr.f32.gmra.mxu0 %v1672
      %v1773 = vpop.f32.mrf.mxu0
      %v1774 = vadd.f32 0.0, %v1773
      %v1775 = vpop.f32.mrf.mxu0
      %1776 = vmatprep.mubr.f32.mxu0 0.0
      %1777 = vmatmul.mubr.f32.gmra.mxu0 %v1673
      %v1778 = vpop.f32.mrf.mxu0
      %v1779 = vadd.f32 0.0, %v1778
      %v1780 = vpop.f32.mrf.mxu0
      %1781 = vmatprep.mubr.f32.mxu0 0.0
      %1782 = vmatmul.mubr.f32.gmra.mxu0 %v1674
      %v1783 = vpop.f32.mrf.mxu0
      %v1784 = vadd.f32 0.0, %v1783
      %v1785 = vpop.f32.mrf.mxu0
      %1786 = vmatprep.mubr.f32.mxu0 0.0
      %1787 = vmatmul.mubr.f32.gmra.mxu0 %v1675
      %v1788 = vpop.f32.mrf.mxu0
      %v1789 = vadd.f32 0.0, %v1788
      %v1790 = vpop.f32.mrf.mxu0
      %1791 = vmatprep.mubr.f32.mxu0 0.0
      %1792 = vmatmul.mubr.f32.gmra.mxu0 %v1676
      %v1793 = vpop.f32.mrf.mxu0
      %v1794 = vadd.f32 0.0, %v1793
      %v1795 = vpop.f32.mrf.mxu0
      %1796 = vmatprep.mubr.f32.mxu0 0.0
      %1797 = vmatmul.mubr.f32.gmra.mxu0 %v1677
      %v1798 = vpop.f32.mrf.mxu0
      %v1799 = vadd.f32 0.0, %v1798
      %v1800 = vpop.f32.mrf.mxu0
      %1801 = vmatprep.mubr.f32.mxu0 0.0
      %1802 = vmatmul.mubr.f32.gmra.mxu0 %v1678
      %v1803 = vpop.f32.mrf.mxu0
      %v1804 = vadd.f32 0.0, %v1803
      %v1805 = vpop.f32.mrf.mxu0
      %1806 = vmatprep.mubr.f32.mxu0 0.0
      %1807 = vmatmul.mubr.f32.gmra.mxu0 %v1679
      %v1808 = vpop.f32.mrf.mxu0
      %v1809 = vadd.f32 0.0, %v1808
      %v1810 = vpop.f32.mrf.mxu0
      %1811 = vmatprep.mubr.f32.mxu0 0.0
      %1812 = vmatmul.mubr.f32.gmra.mxu0 %v1680
      %v1813 = vpop.f32.mrf.mxu0
      %v1814 = vadd.f32 0.0, %v1813
      %v1815 = vpop.f32.mrf.mxu0
      %1816 = vmatprep.mubr.f32.mxu0 0.0
      %1817 = vmatmul.mubr.f32.gmra.mxu0 %v1681
      %v1818 = vpop.f32.mrf.mxu0
      %v1819 = vadd.f32 0.0, %v1818
      %v1820 = vpop.f32.mrf.mxu0
      %1821 = vmatprep.mubr.f32.mxu0 0.0
      %1822 = vmatmul.mubr.f32.gmra.mxu0 %v1682
      %v1823 = vpop.f32.mrf.mxu0
      %v1824 = vadd.f32 0.0, %v1823
      %v1825 = vpop.f32.mrf.mxu0
      %1826 = vmatprep.mubr.f32.mxu0 0.0
      %1827 = vmatmul.mubr.f32.gmra.mxu0 %v1683
      %v1828 = vpop.f32.mrf.mxu0
      %v1829 = vadd.f32 0.0, %v1828
      %v1830 = vpop.f32.mrf.mxu0
      %1831 = vmatprep.mubr.f32.mxu0 0.0
      %1832 = vmatmul.mubr.f32.gmra.mxu0 %v1684
      %v1833 = vpop.f32.mrf.mxu0
      %v1834 = vadd.f32 0.0, %v1833
      %v1835 = vpop.f32.mrf.mxu0
      %1836 = vmatprep.mubr.f32.mxu0 0.0
      %1837 = vmatmul.mubr.f32.gmra.mxu0 %v1685
      %v1838 = vpop.f32.mrf.mxu0
      %v1839 = vadd.f32 0.0, %v1838
      %v1840 = vpop.f32.mrf.mxu0
      %1841 = vmatprep.mubr.f32.mxu0 0.0
      %1842 = vmatmul.mubr.f32.gmra.mxu0 %v1686
      %v1843 = vpop.f32.mrf.mxu0
      %v1844 = vadd.f32 0.0, %v1843
      %v1845 = vpop.f32.mrf.mxu0
      %1846 = vmatprep.mubr.f32.mxu0 0.0
      %1847 = vmatmul.mubr.f32.gmra.mxu0 %v1687
      %v1848 = vpop.f32.mrf.mxu0
      %v1849 = vadd.f32 0.0, %v1848
      %v1850 = vpop.f32.mrf.mxu0
      %1851 = vmatprep.mubr.f32.mxu0 0.0
      %1852 = vmatmul.mubr.f32.gmra.mxu0 %v1688
      %v1853 = vpop.f32.mrf.mxu0
      %v1854 = vadd.f32 0.0, %v1853
      %v1855 = vpop.f32.mrf.mxu0
      %1856 = vmatprep.mubr.f32.mxu0 0.0
      %1857 = vmatmul.mubr.f32.gmra.mxu0 %v1689
      %v1858 = vpop.f32.mrf.mxu0
      %v1859 = vadd.f32 0.0, %v1858
      %v1860 = vpop.f32.mrf.mxu0
      %1861 = vdwg.mxu0
      %v1862 = vadd.f32 %v1654, %v1774
      %v1863 = vadd.f32 %v1655, %v1779
      %v1864 = vadd.f32 %v1656, %v1784
      %v1865 = vadd.f32 %v1657, %v1789
      %v1866 = vadd.f32 %v1658, %v1794
      %v1867 = vadd.f32 %v1659, %v1799
      %v1868 = vadd.f32 %v1660, %v1804
      %v1869 = vadd.f32 %v1661, %v1809
      %v1870 = vadd.f32 %v1662, %v1814
      %v1871 = vadd.f32 %v1663, %v1819
      %v1872 = vadd.f32 %v1664, %v1824
      %v1873 = vadd.f32 %v1665, %v1829
      %v1874 = vadd.f32 %v1666, %v1834
      %v1875 = vadd.f32 %v1667, %v1839
      %v1876 = vadd.f32 %v1668, %v1844
      %v1877 = vadd.f32 %v1669, %v1849
      %v1878 = vadd.f32 %v1670, %v1854
      %v1879 = vadd.f32 %v1671, %v1859
      %v1880 = vld [vmem:[#allocation2 + $0x26] sm:$0xff]
      %v1881 = vld [vmem:[#allocation2 + $0x2e] sm:$0xff]
      %v1882 = vld [vmem:[#allocation2 + $0x36] sm:$0xff]
      %v1883 = vld [vmem:[#allocation2 + $0x3e] sm:$0xff]
      %v1884 = vld [vmem:[#allocation2 + $0x46] sm:$0xff]
      %v1885 = vld [vmem:[#allocation2 + $0x4e] sm:$0xff]
      %v1886 = vld [vmem:[#allocation2 + $0x56] sm:$0xff]
      %v1887 = vld [vmem:[#allocation2 + $0x5e] sm:$0xff]
      %v1888 = vld [vmem:[#allocation2 + $0x66] sm:$0xff]
      %v1889 = vld [vmem:[#allocation2 + $0x6e] sm:$0xff]
      %v1890 = vld [vmem:[#allocation2 + $0x76] sm:$0xff]
      %v1891 = vld [vmem:[#allocation2 + $0x7e] sm:$0xff]
      %v1892 = vld [vmem:[#allocation2 + $0x86] sm:$0xff]
      %v1893 = vld [vmem:[#allocation2 + $0x8e] sm:$0xff]
      %v1894 = vld [vmem:[#allocation2 + $0x96] sm:$0xff]
      %v1895 = vld [vmem:[#allocation2 + $0x9e] sm:$0xff]
      %v1896 = vld [vmem:[#allocation2 + $0xa6] sm:$0xff]
      %v1897 = vld [vmem:[#allocation2 + $0xae] sm:$0xff]
      %s1898 = scalar_lea.vmem %s1, 1024
      %v1899 = vld [vmem:[%s1898] sm:$0xff]
      %v1900 = vld [vmem:[%s1898 + $0x8] sm:$0xff]
      %v1901 = vld [vmem:[%s1898 + $0x10] sm:$0xff]
      %v1902 = vld [vmem:[%s1898 + $0x18] sm:$0xff]
      %v1903 = vld [vmem:[%s1898 + $0x20] sm:$0xff]
      %v1904 = vld [vmem:[%s1898 + $0x28] sm:$0xff]
      %v1905 = vld [vmem:[%s1898 + $0x30] sm:$0xff]
      %v1906 = vld [vmem:[%s1898 + $0x38] sm:$0xff]
      %v1907 = vld [vmem:[%s1898 + $0x40] sm:$0xff]
      %v1908 = vld [vmem:[%s1898 + $0x48] sm:$0xff]
      %v1909 = vld [vmem:[%s1898 + $0x50] sm:$0xff]
      %v1910 = vld [vmem:[%s1898 + $0x58] sm:$0xff]
      %v1911 = vld [vmem:[%s1898 + $0x60] sm:$0xff]
      %v1912 = vld [vmem:[%s1898 + $0x68] sm:$0xff]
      %v1913 = vld [vmem:[%s1898 + $0x70] sm:$0xff]
      %v1914 = vld [vmem:[%s1898 + $0x78] sm:$0xff]
      %1915 = vmatprep.subr.mxu0 0.0
      %1916 = vmatpush1.msra.mxu0 %v1914
      %1917 = vmatprep.subr.mxu0 0.0
      %1918 = vmatpush1.msra.mxu0 %v1913
      %1919 = vmatprep.subr.mxu0 0.0
      %1920 = vmatpush1.msra.mxu0 %v1912
      %1921 = vmatprep.subr.mxu0 0.0
      %1922 = vmatpush1.msra.mxu0 %v1911
      %1923 = vmatprep.subr.mxu0 0.0
      %1924 = vmatpush1.msra.mxu0 %v1910
      %1925 = vmatprep.subr.mxu0 0.0
      %1926 = vmatpush1.msra.mxu0 %v1909
      %1927 = vmatprep.subr.mxu0 0.0
      %1928 = vmatpush1.msra.mxu0 %v1908
      %1929 = vmatprep.subr.mxu0 0.0
      %1930 = vmatpush1.msra.mxu0 %v1907
      %1931 = vmatprep.subr.mxu0 0.0
      %1932 = vmatpush1.msra.mxu0 %v1906
      %1933 = vmatprep.subr.mxu0 0.0
      %1934 = vmatpush1.msra.mxu0 %v1905
      %1935 = vmatprep.subr.mxu0 0.0
      %1936 = vmatpush1.msra.mxu0 %v1904
      %1937 = vmatprep.subr.mxu0 0.0
      %1938 = vmatpush1.msra.mxu0 %v1903
      %1939 = vmatprep.subr.mxu0 0.0
      %1940 = vmatpush1.msra.mxu0 %v1902
      %1941 = vmatprep.subr.mxu0 0.0
      %1942 = vmatpush1.msra.mxu0 %v1901
      %1943 = vmatprep.subr.mxu0 0.0
      %1944 = vmatpush1.msra.mxu0 %v1900
      %1945 = vmatprep.subr.mxu0 0.0
      %1946 = vmatpush1.msra.mxu0 %v1899
      %1947 = vmatprep.subr.mxu0 0.0
      %1948 = vmatpush2.msra.mxu0 0.0
      %1949 = vmatprep.subr.mxu0 0.0
      %1950 = vmatpush2.msra.mxu0 0.0
      %1951 = vmatprep.subr.mxu0 0.0
      %1952 = vmatpush2.msra.mxu0 0.0
      %1953 = vmatprep.subr.mxu0 0.0
      %1954 = vmatpush2.msra.mxu0 0.0
      %1955 = vmatprep.subr.mxu0 0.0
      %1956 = vmatpush2.msra.mxu0 0.0
      %1957 = vmatprep.subr.mxu0 0.0
      %1958 = vmatpush2.msra.mxu0 0.0
      %1959 = vmatprep.subr.mxu0 0.0
      %1960 = vmatpush2.msra.mxu0 0.0
      %1961 = vmatprep.subr.mxu0 0.0
      %1962 = vmatpush2.msra.mxu0 0.0
      %1963 = vmatprep.subr.mxu0 0.0
      %1964 = vmatpush2.msra.mxu0 0.0
      %1965 = vmatprep.subr.mxu0 0.0
      %1966 = vmatpush2.msra.mxu0 0.0
      %1967 = vmatprep.subr.mxu0 0.0
      %1968 = vmatpush2.msra.mxu0 0.0
      %1969 = vmatprep.subr.mxu0 0.0
      %1970 = vmatpush2.msra.mxu0 0.0
      %1971 = vmatprep.subr.mxu0 0.0
      %1972 = vmatpush2.msra.mxu0 0.0
      %1973 = vmatprep.subr.mxu0 0.0
      %1974 = vmatpush2.msra.mxu0 0.0
      %1975 = vmatprep.subr.mxu0 0.0
      %1976 = vmatpush2.msra.mxu0 0.0
      %1977 = vmatprep.subr.mxu0 0.0
      %1978 = vmatpush2.msra.mxu0 0.0
      %1979 = vmatprep.mubr.f32.mxu0 0.0
      %1980 = vmatmul.mubr.f32.gmra.mxu0 %v1880
      %v1981 = vpop.f32.mrf.mxu0
      %v1982 = vadd.f32 0.0, %v1981
      %v1983 = vpop.f32.mrf.mxu0
      %1984 = vmatprep.mubr.f32.mxu0 0.0
      %1985 = vmatmul.mubr.f32.gmra.mxu0 %v1881
      %v1986 = vpop.f32.mrf.mxu0
      %v1987 = vadd.f32 0.0, %v1986
      %v1988 = vpop.f32.mrf.mxu0
      %1989 = vmatprep.mubr.f32.mxu0 0.0
      %1990 = vmatmul.mubr.f32.gmra.mxu0 %v1882
      %v1991 = vpop.f32.mrf.mxu0
      %v1992 = vadd.f32 0.0, %v1991
      %v1993 = vpop.f32.mrf.mxu0
      %1994 = vmatprep.mubr.f32.mxu0 0.0
      %1995 = vmatmul.mubr.f32.gmra.mxu0 %v1883
      %v1996 = vpop.f32.mrf.mxu0
      %v1997 = vadd.f32 0.0, %v1996
      %v1998 = vpop.f32.mrf.mxu0
      %1999 = vmatprep.mubr.f32.mxu0 0.0
      %2000 = vmatmul.mubr.f32.gmra.mxu0 %v1884
      %v2001 = vpop.f32.mrf.mxu0
      %v2002 = vadd.f32 0.0, %v2001
      %v2003 = vpop.f32.mrf.mxu0
      %2004 = vmatprep.mubr.f32.mxu0 0.0
      %2005 = vmatmul.mubr.f32.gmra.mxu0 %v1885
      %v2006 = vpop.f32.mrf.mxu0
      %v2007 = vadd.f32 0.0, %v2006
      %v2008 = vpop.f32.mrf.mxu0
      %2009 = vmatprep.mubr.f32.mxu0 0.0
      %2010 = vmatmul.mubr.f32.gmra.mxu0 %v1886
      %v2011 = vpop.f32.mrf.mxu0
      %v2012 = vadd.f32 0.0, %v2011
      %v2013 = vpop.f32.mrf.mxu0
      %2014 = vmatprep.mubr.f32.mxu0 0.0
      %2015 = vmatmul.mubr.f32.gmra.mxu0 %v1887
      %v2016 = vpop.f32.mrf.mxu0
      %v2017 = vadd.f32 0.0, %v2016
      %v2018 = vpop.f32.mrf.mxu0
      %2019 = vmatprep.mubr.f32.mxu0 0.0
      %2020 = vmatmul.mubr.f32.gmra.mxu0 %v1888
      %v2021 = vpop.f32.mrf.mxu0
      %v2022 = vadd.f32 0.0, %v2021
      %v2023 = vpop.f32.mrf.mxu0
      %2024 = vmatprep.mubr.f32.mxu0 0.0
      %2025 = vmatmul.mubr.f32.gmra.mxu0 %v1889
      %v2026 = vpop.f32.mrf.mxu0
      %v2027 = vadd.f32 0.0, %v2026
      %v2028 = vpop.f32.mrf.mxu0
      %2029 = vmatprep.mubr.f32.mxu0 0.0
      %2030 = vmatmul.mubr.f32.gmra.mxu0 %v1890
      %v2031 = vpop.f32.mrf.mxu0
      %v2032 = vadd.f32 0.0, %v2031
      %v2033 = vpop.f32.mrf.mxu0
      %2034 = vmatprep.mubr.f32.mxu0 0.0
      %2035 = vmatmul.mubr.f32.gmra.mxu0 %v1891
      %v2036 = vpop.f32.mrf.mxu0
      %v2037 = vadd.f32 0.0, %v2036
      %v2038 = vpop.f32.mrf.mxu0
      %2039 = vmatprep.mubr.f32.mxu0 0.0
      %2040 = vmatmul.mubr.f32.gmra.mxu0 %v1892
      %v2041 = vpop.f32.mrf.mxu0
      %v2042 = vadd.f32 0.0, %v2041
      %v2043 = vpop.f32.mrf.mxu0
      %2044 = vmatprep.mubr.f32.mxu0 0.0
      %2045 = vmatmul.mubr.f32.gmra.mxu0 %v1893
      %v2046 = vpop.f32.mrf.mxu0
      %v2047 = vadd.f32 0.0, %v2046
      %v2048 = vpop.f32.mrf.mxu0
      %2049 = vmatprep.mubr.f32.mxu0 0.0
      %2050 = vmatmul.mubr.f32.gmra.mxu0 %v1894
      %v2051 = vpop.f32.mrf.mxu0
      %v2052 = vadd.f32 0.0, %v2051
      %v2053 = vpop.f32.mrf.mxu0
      %2054 = vmatprep.mubr.f32.mxu0 0.0
      %2055 = vmatmul.mubr.f32.gmra.mxu0 %v1895
      %v2056 = vpop.f32.mrf.mxu0
      %v2057 = vadd.f32 0.0, %v2056
      %v2058 = vpop.f32.mrf.mxu0
      %2059 = vmatprep.mubr.f32.mxu0 0.0
      %2060 = vmatmul.mubr.f32.gmra.mxu0 %v1896
      %v2061 = vpop.f32.mrf.mxu0
      %v2062 = vadd.f32 0.0, %v2061
      %v2063 = vpop.f32.mrf.mxu0
      %2064 = vmatprep.mubr.f32.mxu0 0.0
      %2065 = vmatmul.mubr.f32.gmra.mxu0 %v1897
      %v2066 = vpop.f32.mrf.mxu0
      %v2067 = vadd.f32 0.0, %v2066
      %v2068 = vpop.f32.mrf.mxu0
      %2069 = vdwg.mxu0
      %v2070 = vadd.f32 %v1862, %v1982
      %v2071 = vadd.f32 %v1863, %v1987
      %v2072 = vadd.f32 %v1864, %v1992
      %v2073 = vadd.f32 %v1865, %v1997
      %v2074 = vadd.f32 %v1866, %v2002
      %v2075 = vadd.f32 %v1867, %v2007
      %v2076 = vadd.f32 %v1868, %v2012
      %v2077 = vadd.f32 %v1869, %v2017
      %v2078 = vadd.f32 %v1870, %v2022
      %v2079 = vadd.f32 %v1871, %v2027
      %v2080 = vadd.f32 %v1872, %v2032
      %v2081 = vadd.f32 %v1873, %v2037
      %v2082 = vadd.f32 %v1874, %v2042
      %v2083 = vadd.f32 %v1875, %v2047
      %v2084 = vadd.f32 %v1876, %v2052
      %v2085 = vadd.f32 %v1877, %v2057
      %v2086 = vadd.f32 %v1878, %v2062
      %v2087 = vadd.f32 %v1879, %v2067
      %v2088 = vld [vmem:[%s2] sm:$0x1]
      %v2090 = vlaneseq
      %v2091 = vshrl.u32 %v2090, 7
      %v2092 = vsub.s32 0, %v2091
      %v2093 = vrot.slane %v2088, %v2092
      %v2095 = vadd.f32 %v2070, %v2093
      %v2096 = vadd.f32 %v2071, %v2093
      %v2097 = vadd.f32 %v2072, %v2093
      %v2098 = vadd.f32 %v2073, %v2093
      %v2099 = vadd.f32 %v2074, %v2093
      %v2100 = vadd.f32 %v2075, %v2093
      %v2101 = vadd.f32 %v2076, %v2093
      %v2102 = vadd.f32 %v2077, %v2093
      %v2103 = vadd.f32 %v2078, %v2093
      %v2104 = vadd.f32 %v2079, %v2093
      %v2105 = vadd.f32 %v2080, %v2093
      %v2106 = vadd.f32 %v2081, %v2093
      %v2107 = vadd.f32 %v2082, %v2093
      %v2108 = vadd.f32 %v2083, %v2093
      %v2109 = vadd.f32 %v2084, %v2093
      %v2110 = vadd.f32 %v2085, %v2093
      %v2111 = vadd.f32 %v2086, %v2093
      %v2112 = vadd.f32 %v2087, %v2093
      %v2113 = vmax.f32 %v2095, 0.0
      %v2114 = vmax.f32 %v2096, 0.0
      %v2115 = vmax.f32 %v2097, 0.0
      %v2116 = vmax.f32 %v2098, 0.0
      %v2117 = vmax.f32 %v2099, 0.0
      %v2118 = vmax.f32 %v2100, 0.0
      %v2119 = vmax.f32 %v2101, 0.0
      %v2120 = vmax.f32 %v2102, 0.0
      %v2121 = vmax.f32 %v2103, 0.0
      %v2122 = vmax.f32 %v2104, 0.0
      %v2123 = vmax.f32 %v2105, 0.0
      %v2124 = vmax.f32 %v2106, 0.0
      %v2125 = vmax.f32 %v2107, 0.0
      %v2126 = vmax.f32 %v2108, 0.0
      %v2127 = vmax.f32 %v2109, 0.0
      %v2128 = vmax.f32 %v2110, 0.0
      %v2129 = vmax.f32 %v2111, 0.0
      %v2130 = vmax.f32 %v2112, 0.0
      %2131 = vst [vmem:[%s146] sm:$0xff] %v2113
      %2132 = vst [vmem:[%s146 + $0x8] sm:$0xff] %v2114
      %2133 = vst [vmem:[%s146 + $0x10] sm:$0xff] %v2115
      %2134 = vst [vmem:[%s146 + $0x18] sm:$0xff] %v2116
      %2135 = vst [vmem:[%s146 + $0x20] sm:$0xff] %v2117
      %2136 = vst [vmem:[%s146 + $0x28] sm:$0xff] %v2118
      %2137 = vst [vmem:[%s146 + $0x30] sm:$0xff] %v2119
      %2138 = vst [vmem:[%s146 + $0x38] sm:$0xff] %v2120
      %2139 = vst [vmem:[%s146 + $0x40] sm:$0xff] %v2121
      %2140 = vst [vmem:[%s146 + $0x48] sm:$0xff] %v2122
      %2141 = vst [vmem:[%s146 + $0x50] sm:$0xff] %v2123
      %2142 = vst [vmem:[%s146 + $0x58] sm:$0xff] %v2124
      %2143 = vst [vmem:[%s146 + $0x60] sm:$0xff] %v2125
      %2144 = vst [vmem:[%s146 + $0x68] sm:$0xff] %v2126
      %2145 = vst [vmem:[%s146 + $0x70] sm:$0xff] %v2127
      %2146 = vst [vmem:[%s146 + $0x78] sm:$0xff] %v2128
      %2147 = vst [vmem:[%s146 + $0x80] sm:$0xff] %v2129
      %2148 = vst [vmem:[%s146 + $0x88] sm:$0xff] %v2130
      %s2149 = smul.u32 18, %s19
      %p2150 = scmp.lt.s32.totalorder %s18, 1
      %s2151 = scalar_select %p2150, %s18, 1
      %p2152 = scmp.lt.s32.totalorder %s2149, 35
      %s2153 = scalar_select %p2152, %s2149, 35
      %s2154 = smul.addr %s2151, 36
      %s2155 = sadd.s32 %s2153, %s2154
      %s2156 = smul.addr %s2155, 8
      %s2157 = scalar_lea.vmem %s3, %s2156
      // Predicated region
      $region66: #{_lambda_.2} parent=27 // pred_check
        %p2158 = pneg %p88
      $region67: #{_lambda_.2} parent=27 // pred_check_branch
        %2160 = sbr.rel (%p2158) target = $region69
      $region68: #{_lambda_.2} parent=27 // pred_region
        %s2161 = smul.u32 18, %s19
      $region69: #{_lambda_.2} parent=27 // pred_fallthru
        _
    $region28: #{_lambda_.2} parent=5 // pred_fallthru
      _
    %p2162 = scmp.le.s32.totalorder 2, %s9
    // Predicated region
    $region70: #{_lambda_.2} parent=5 // pred_check
      %p2163 = pneg %p2162
    $region71: #{_lambda_.2} parent=5 // pred_check_branch
      %2165 = sbr.rel (%p2163) target = $region73
    $region72: #{_lambda_.2} parent=5 // pred_region
      %s2166 = ssub.s32 %s9, 2
      // Predicated region
      $region74: #{_lambda_.2} parent=72 // pred_check
        %p2167 = pneg %p94
      $region75: #{_lambda_.2} parent=72 // pred_check_branch
        %2169 = sbr.rel (%p2167) target = $region77
      $region76: #{_lambda_.2} parent=72 // pred_region
        %s2170 = smul.u32 18, %s21
        %p2171 = scmp.lt.s32.totalorder %s20, 1
        %s2172 = scalar_select %p2171, %s20, 1
        %p2173 = scmp.lt.s32.totalorder %s2170, 35
        %s2174 = scalar_select %p2173, %s2170, 35
        %s2175 = smul.addr %s2172, 36
        %s2176 = sadd.s32 %s2174, %s2175
        %s2177 = smul.addr %s2176, 8
        %s2178 = scalar_lea.vmem %s3, %s2177
      $region77: #{_lambda_.2} parent=72 // pred_fallthru
        _
    $region73: #{_lambda_.2} parent=5 // pred_fallthru
      _
  $region6: #{_lambda_.2} parent=0 // loop_footer
    %s13 = sadd.s32 1, %s9
  $region7: #{_lambda_.2} parent=0 // loop_footer_branch
    %8 = sbr.rel target = $region3
  $region8: #{_lambda_.2} parent=0 // loop_exit
    _
  %2179 = vsyncmov [#allocation3]
  %s2180 = vpop.sfrf %2179
  %p2181 = scmp.eq.s32.totalorder %s2180, 0
  %p2182 = pneg %p2181
  %2184 = shalt.err (%p2182)

// kernel: _lambda_.3
$region0: #{_lambda_.3}
  #allocation0 [shape = 'u32[]', space=smem, size = 0x4, offset = 0x4, fixed_abs, tag = 'smem constant byte address 0x4 - core index']
  #allocation1 [shape = 'u32[144,128]{1,0:T(1,128)}', space=vmem, size = 0x12000, scoped, tag = 'internal scratch']
  #allocation2 [shape = 'f32[182,128]{1,0:T(8,128)}', space=vmem, size = 0x17000, scoped, tag = 'scratch operand']
  #allocation3 [shape = 's32[1]{0}', space=sflag, size = 0x4, scoped, tag = 'scratch operand']
  #allocation4 [shape = 's32[]', space=sflag, size = 0x4, offset = 0, fixed_abs, tag = 'sflag constant byte address 0x0 - dummy sync flag']
  %s0 = inlined_call_operand.vmem [shape: f32[2,342,128], index: 0, kind: input, shape index: {}]
  %s1 = inlined_call_operand.vmem [shape: f32[9,128,128], index: 1, kind: input, shape index: {}]
  %s2 = inlined_call_operand.vmem [shape: f32[1,128], index: 2, kind: input, shape index: {}]
  %s3 = inlined_call_operand.vmem [shape: f32[2,288,128], index: 3, kind: input, shape index: {}]
  %s4 = inlined_call_operand.vmem [shape: f32[2,288,128], index: 4, kind: output, shape index: {}]
  %s5 = sld [smem:[#allocation0]]
  $region82: #{_lambda_.3} parent=0
    _
  %s7 = ssub.s32 1, %s5
  %s8 = scalar_select 0, %s7, %s5
  loop: start=0, step=1, limit=6
  $region2: #{_lambda_.3} parent=0 // loop_pre_header
    _
  $region3: #{_lambda_.3} parent=0 // loop_header
    %s10 = sphi 0, %s14
    %p11 = scmp.ge.s32.totalorder %s10, 6
    %s17 = sphi 0, %s29
    %s18 = sphi 0, %s25
    %s19 = sphi 0, %s17
    %s20 = sphi 0, %s18
    %s21 = sphi 0, %s19
    %s22 = sphi 0, %s20
    %s30 = sphi 0, %s30
    %s32 = sphi 0, %s30
    %s33 = sphi 0, %s32
    %s47 = sphi 0, %s33
    %s51 = sphi 0, %s51
    %s53 = sphi 0, %s51
    %s54 = sphi 0, %s53
    %s68 = sphi 0, %s54
    %s76 = sphi 0, %s78
    %s79 = sphi 0, %s76
    %s80 = sphi 0, %s79
    %s96 = sphi 0, %s80
    %s104 = sphi 0, %s106
    %s107 = sphi 0, %s104
    %s108 = sphi 0, %s107
    %s124 = sphi 0, %s108
  $region4: #{_lambda_.3} parent=0 // loop_header_branch
    %13 = sbr.rel (%p11) target = $region8
  $region5: #{_lambda_.3} parent=0 // loop_body
    %s15 = ssub.s32 %s10, 1
    %s16 = ssub.s32 %s10, 2
    %s23 = sadd.s32 1, %s18
    %p24 = scmp.ge.s32.totalorder %s23, 2
    %s25 = scalar_select %p24, 0, %s23
    %s26 = sadd.s32 1, %s17
    %s27 = scalar_select %p24, %s26, %s17
    %p28 = scmp.ge.s32.totalorder %s27, 2
    %s29 = scalar_select %p28, 0, %s27
    %s31 = sadd.s32 %s30, 1
    %p34 = scmp.eq.s32.totalorder %s10, 3
    %p35 = scmp.ne.s32.totalorder %s30, %s32
    %p36 = scmp.eq.s32.totalorder %s10, 0
    %p37 = por %p35, %p36
    %p38 = scmp.ne.s32.totalorder %s30, %s32
    %p39 = scmp.eq.s32.totalorder %s15, 3
    %p40 = por %p38, %p39
    %p41 = scmp.ne.s32.totalorder %s32, %s33
    %p42 = scmp.eq.s32.totalorder %s15, 0
    %p43 = por %p41, %p42
    %p44 = scmp.ne.s32.totalorder %s32, %s33
    %p45 = scmp.eq.s32.totalorder %s16, 3
    %p46 = por %p44, %p45
    %p48 = scmp.ne.s32.totalorder %s33, %s47
    %p49 = scmp.eq.s32.totalorder %s16, 0
    %p50 = por %p48, %p49
    %s52 = sadd.s32 %s51, 1
    %p55 = scmp.eq.s32.totalorder %s10, 3
    %p56 = scmp.ne.s32.totalorder %s51, %s53
    %p57 = scmp.eq.s32.totalorder %s10, 0
    %p58 = por %p56, %p57
    %p59 = scmp.ne.s32.totalorder %s51, %s53
    %p60 = scmp.eq.s32.totalorder %s15, 3
    %p61 = por %p59, %p60
    %p62 = scmp.ne.s32.totalorder %s53, %s54
    %p63 = scmp.eq.s32.totalorder %s15, 0
    %p64 = por %p62, %p63
    %p65 = scmp.ne.s32.totalorder %s53, %s54
    %p66 = scmp.eq.s32.totalorder %s16, 3
    %p67 = por %p65, %p66
    %p69 = scmp.ne.s32.totalorder %s54, %s68
    %p70 = scmp.eq.s32.totalorder %s16, 0
    %p71 = por %p69, %p70
    %s72 = ssub.s32 %s17, %s29
    %s73 = ssub.s32 %s18, %s25
    %s74 = sor.u32 %s72, %s73
    %p75 = scmp.eq.s32.totalorder %s74, 0
    %s77 = sadd.s32 %s76, 1
    %s78 = scalar_select %p75, %s76, %s77
    %p81 = pneg %p75
    %p82 = scmp.eq.s32.totalorder %s10, 3
    %p83 = por %p81, %p82
    %p84 = scmp.ne.s32.totalorder %s76, %s79
    %p85 = scmp.eq.s32.totalorder %s10, 0
    %p86 = por %p84, %p85
    %p87 = scmp.ne.s32.totalorder %s76, %s79
    %p88 = scmp.eq.s32.totalorder %s15, 3
    %p89 = por %p87, %p88
    %p90 = scmp.ne.s32.totalorder %s79, %s80
    %p91 = scmp.eq.s32.totalorder %s15, 0
    %p92 = por %p90, %p91
    %p93 = scmp.ne.s32.totalorder %s79, %s80
    %p94 = scmp.eq.s32.totalorder %s16, 3
    %p95 = por %p93, %p94
    %p97 = scmp.ne.s32.totalorder %s80, %s96
    %p98 = scmp.eq.s32.totalorder %s16, 0
    %p99 = por %p97, %p98
    %s100 = ssub.s32 %s17, %s29
    %s101 = ssub.s32 %s18, %s25
    %s102 = sor.u32 %s100, %s101
    %p103 = scmp.eq.s32.totalorder %s102, 0
    %s105 = sadd.s32 %s104, 1
    %s106 = scalar_select %p103, %s104, %s105
    %p109 = pneg %p103
    %p110 = scmp.eq.s32.totalorder %s10, 3
    %p111 = por %p109, %p110
    %p112 = scmp.ne.s32.totalorder %s104, %s107
    %p113 = scmp.eq.s32.totalorder %s10, 0
    %p114 = por %p112, %p113
    %p115 = scmp.ne.s32.totalorder %s104, %s107
    %p116 = scmp.eq.s32.totalorder %s15, 3
    %p117 = por %p115, %p116
    %p118 = scmp.ne.s32.totalorder %s107, %s108
    %p119 = scmp.eq.s32.totalorder %s15, 0
    %p120 = por %p118, %p119
    %p121 = scmp.ne.s32.totalorder %s107, %s108
    %p122 = scmp.eq.s32.totalorder %s16, 3
    %p123 = por %p121, %p122
    %p125 = scmp.ne.s32.totalorder %s108, %s124
    %p126 = scmp.eq.s32.totalorder %s16, 0
    %p127 = por %p125, %p126
    %p128 = scmp.le.s32.totalorder 1, %s10
    %p129 = scmp.lt.s32.totalorder %s10, 5
    %p130 = pnand %p128, %p129
    %p131 = pneg %p130
    // Predicated region
    $region9: #{_lambda_.3} parent=5 // pred_check
      _
    $region10: #{_lambda_.3} parent=5 // pred_check_branch
      %133 = sbr.rel (%p130) target = $region12
    $region11: #{_lambda_.3} parent=5 // pred_region
      %s134 = ssub.s32 %s10, 1
      // Predicated region
      $region13: #{_lambda_.3} parent=11 // pred_check
        %p135 = pneg %p43
      $region14: #{_lambda_.3} parent=11 // pred_check_branch
        %137 = sbr.rel (%p135) target = $region16
      $region15: #{_lambda_.3} parent=11 // pred_region
        _
      $region16: #{_lambda_.3} parent=11 // pred_fallthru
        _
      // Predicated region
      $region17: #{_lambda_.3} parent=11 // pred_check
        %p138 = pneg %p64
      $region18: #{_lambda_.3} parent=11 // pred_check_branch
        %140 = sbr.rel (%p138) target = $region20
      $region19: #{_lambda_.3} parent=11 // pred_region
        _
      $region20: #{_lambda_.3} parent=11 // pred_fallthru
        _
    $region12: #{_lambda_.3} parent=5 // pred_fallthru
      _
    %p141 = scmp.lt.s32.totalorder %s10, 4
    // Predicated region
    $region21: #{_lambda_.3} parent=5 // pred_check
      %p142 = pneg %p141
    $region22: #{_lambda_.3} parent=5 // pred_check_branch
      %144 = sbr.rel (%p142) target = $region24
    $region23: #{_lambda_.3} parent=5 // pred_region
      // Predicated region
      $region25: #{_lambda_.3} parent=23 // pred_check
        %p145 = pneg %p86
      $region26: #{_lambda_.3} parent=23 // pred_check_branch
        %147 = sbr.rel (%p145) target = $region28
      $region27: #{_lambda_.3} parent=23 // pred_region
        %s148 = smul.u32 18, %s18
        %p149 = scmp.lt.s32.totalorder %s17, 1
        %s150 = scalar_select %p149, %s17, 1
        %p151 = scmp.lt.s32.totalorder %s148, 35
        %s152 = scalar_select %p151, %s148, 35
        %s153 = smul.addr %s150, 36
        %s154 = sadd.s32 %s152, %s153
        %s155 = smul.addr %s154, 8
        %s156 = scalar_lea.vmem %s3, %s155
        %s157 = smul.u32 18, %s18
      $region28: #{_lambda_.3} parent=23 // pred_fallthru
        _
    $region24: #{_lambda_.3} parent=5 // pred_fallthru
      _
    %p158 = scmp.le.s32.totalorder 1, %s10
    %p159 = scmp.lt.s32.totalorder %s10, 5
    %p160 = pnand %p158, %p159
    %p161 = pneg %p160
    // Predicated region
    $region29: #{_lambda_.3} parent=5 // pred_check
      _
    $region30: #{_lambda_.3} parent=5 // pred_check_branch
      %163 = sbr.rel (%p160) target = $region32
    $region31: #{_lambda_.3} parent=5 // pred_region
      %s164 = ssub.s32 %s10, 1
      %p165 = pneg %p43
      %p166 = pneg %p40
      %p167 = pneg %p64
      %p168 = pneg %p61
      %s169 = smul.u32 18, %s20
      %p170 = scmp.lt.s32.totalorder %s19, 1
      %s171 = scalar_select %p170, %s19, 1
      %p172 = scmp.lt.s32.totalorder %s169, 35
      %s173 = scalar_select %p172, %s169, 35
      %s174 = smul.addr %s171, 36
      %s175 = sadd.s32 %s173, %s174
      %s176 = smul.addr %s175, 8
      %s177 = scalar_lea.vmem %s3, %s176
      %p178 = pneg %p92
      %p179 = pneg %p89
      %p180 = pneg %p120
      %p181 = pneg %p117
      %s182 = smul.u32 18, %s20
      %p183 = scmp.lt.s32.totalorder %s19, 1
      %s184 = scalar_select %p183, %s19, 1
      %p185 = scmp.lt.s32.totalorder %s182, 35
      %s186 = scalar_select %p185, %s182, 35
      %s187 = smul.addr %s184, 36
      %s188 = sadd.s32 %s186, %s187
      %s189 = smul.addr %s188, 8
      %s190 = scalar_lea.vmem %s4, %s189
      %s191 = smul.u32 18, %s20
      %p192 = scmp.lt.s32.totalorder %s19, 1
      %s193 = scalar_select %p192, %s19, 1
      %p194 = scmp.lt.s32.totalorder %s191, 35
      %s195 = scalar_select %p194, %s191, 35
      %s196 = smul.addr %s193, 36
      %s197 = sadd.s32 %s195, %s196
      %s198 = smul.addr %s197, 8
      %s199 = scalar_lea.vmem %s3, %s198
      %s200 = smul.u32 18, %s20
      %s201 = smul.u32 18, %s20
      %p202 = scmp.lt.s32.totalorder %s19, 1
      %s203 = scalar_select %p202, %s19, 1
      %p204 = scmp.lt.s32.totalorder %s201, 35
      %s205 = scalar_select %p204, %s201, 35
      %s206 = smul.addr %s203, 36
      %s207 = sadd.s32 %s205, %s206
      %s208 = smul.addr %s207, 8
      %s209 = scalar_lea.vmem %s4, %s208
      %s210 = smul.u32 18, %s20
      %s211 = smul.u32 %s20, 144
      %s212 = smul.u32 %s19, 344
      %s213 = sadd.s32 %s211, %s212
      %s214 = scalar_lea.vmem %s0, %s213
      %p216 = scmp.lt.u32.totalorder 182, 8
      %p217 = pneg %p216
      // Predicated region
      $region33: #{_lambda_.3} parent=31 // pred_check
        _
      $region34: #{_lambda_.3} parent=31 // pred_check_branch
        %219 = sbr.rel (%p216) target = $region36
      $region35: #{_lambda_.3} parent=31 // pred_region
        %s235 = sand.u32 182, 7
        %p236 = scmp.eq.s32.totalorder %s235, 0
        %p237 = pneg %p236
        // Predicated region
        $region48: #{_lambda_.3} parent=35 // pred_check
          _
        $region49: #{_lambda_.3} parent=35 // pred_check_branch
          %239 = sbr.rel (%p236) target = $region51
        $region50: #{_lambda_.3} parent=35 // pred_region
          %s240 = sand.u32 182, 7
          %s241 = ssub.s32 182, %s240
          %s242 = scalar_lea.vmem %s214, %s241
          %s243 = ssub.s32 182, %s240
          %s244 = scalar_lea.vmem [#allocation2], %s243
          loop: start=0, step=1, limit=1
          $region52: #{_lambda_.3} parent=50 // loop_pre_header
            _
          $region53: #{_lambda_.3} parent=50 // loop_header
            %s246 = sphi 0, %s250
            %p247 = scmp.ge.s32.totalorder %s246, 1
            %s251 = sphi %s214, %s214
            %s252 = sphi [#allocation2], [#allocation2]
          $region54: #{_lambda_.3} parent=50 // loop_header_branch
            %249 = sbr.rel (%p247) target = $region58
          $region55: #{_lambda_.3} parent=50 // loop_body
            %v253 = vld [vmem:[%s251] sm:$0xff]
            %254 = vst [vmem:[%s252] sm:$0xff] %v253
            %v255 = vld [vmem:[%s251 + $0x8] sm:$0xff]
            %256 = vst [vmem:[%s252 + $0x8] sm:$0xff] %v255
            %v257 = vld [vmem:[%s251 + $0x10] sm:$0xff]
            %258 = vst [vmem:[%s252 + $0x10] sm:$0xff] %v257
            %v259 = vld [vmem:[%s251 + $0x18] sm:$0xff]
            %260 = vst [vmem:[%s252 + $0x18] sm:$0xff] %v259
            %v261 = vld [vmem:[%s251 + $0x20] sm:$0xff]
            %262 = vst [vmem:[%s252 + $0x20] sm:$0xff] %v261
            %v263 = vld [vmem:[%s251 + $0x28] sm:$0xff]
            %264 = vst [vmem:[%s252 + $0x28] sm:$0xff] %v263
            %v265 = vld [vmem:[%s251 + $0x30] sm:$0xff]
            %266 = vst [vmem:[%s252 + $0x30] sm:$0xff] %v265
            %v267 = vld [vmem:[%s251 + $0x38] sm:$0xff]
            %268 = vst [vmem:[%s252 + $0x38] sm:$0xff] %v267
            %v269 = vld [vmem:[%s251 + $0x40] sm:$0xff]
            %270 = vst [vmem:[%s252 + $0x40] sm:$0xff] %v269
            %v271 = vld [vmem:[%s251 + $0x48] sm:$0xff]
            %272 = vst [vmem:[%s252 + $0x48] sm:$0xff] %v271
            %v273 = vld [vmem:[%s251 + $0x50] sm:$0xff]
            %274 = vst [vmem:[%s252 + $0x50] sm:$0xff] %v273
            %v275 = vld [vmem:[%s251 + $0x58] sm:$0xff]
            %276 = vst [vmem:[%s252 + $0x58] sm:$0xff] %v275
            %v277 = vld [vmem:[%s251 + $0x60] sm:$0xff]
            %278 = vst [vmem:[%s252 + $0x60] sm:$0xff] %v277
            %v279 = vld [vmem:[%s251 + $0x68] sm:$0xff]
            %280 = vst [vmem:[%s252 + $0x68] sm:$0xff] %v279
            %v281 = vld [vmem:[%s251 + $0x70] sm:$0xff]
            %282 = vst [vmem:[%s252 + $0x70] sm:$0xff] %v281
            %v283 = vld [vmem:[%s251 + $0x78] sm:$0xff]
            %284 = vst [vmem:[%s252 + $0x78] sm:$0xff] %v283
            %v285 = vld [vmem:[%s251 + $0x80] sm:$0xff]
            %286 = vst [vmem:[%s252 + $0x80] sm:$0xff] %v285
            %v287 = vld [vmem:[%s251 + $0x88] sm:$0xff]
            %288 = vst [vmem:[%s252 + $0x88] sm:$0xff] %v287
            %v289 = vld [vmem:[%s251 + $0x90] sm:$0xff]
            %290 = vst [vmem:[%s252 + $0x90] sm:$0xff] %v289
            %v291 = vld [vmem:[%s251 + $0x98] sm:$0xff]
            %292 = vst [vmem:[%s252 + $0x98] sm:$0xff] %v291
            %v293 = vld [vmem:[%s251 + $0xa0] sm:$0xff]
            %294 = vst [vmem:[%s252 + $0xa0] sm:$0xff] %v293
            %v295 = vld [vmem:[%s251 + $0xa8] sm:$0xff]
            %296 = vst [vmem:[%s252 + $0xa8] sm:$0xff] %v295
          $region56: #{_lambda_.3} parent=50 // loop_footer
            %s250 = sadd.s32 1, %s246
          $region57: #{_lambda_.3} parent=50 // loop_footer_branch
            %245 = sbr.rel target = $region53
          $region58: #{_lambda_.3} parent=50 // loop_exit
            _
          %s297 = sshll.u32 1, %s240
          %s298 = ssub.s32 %s297, 1
          loop: start=0, step=1, limit=1
          $region59: #{_lambda_.3} parent=50 // loop_pre_header
            _
          $region60: #{_lambda_.3} parent=50 // loop_header
            %s300 = sphi 0, %s304
            %p301 = scmp.ge.s32.totalorder %s300, 1
            %s305 = sphi %s242, %s242
            %s306 = sphi %s244, %s244
          $region61: #{_lambda_.3} parent=50 // loop_header_branch
            %303 = sbr.rel (%p301) target = $region65
          $region62: #{_lambda_.3} parent=50 // loop_body
            %v307 = vld [vmem:[%s305] sm:%s298]
            %308 = vst [vmem:[%s306] sm:%s298] %v307
          $region63: #{_lambda_.3} parent=50 // loop_footer
            %s304 = sadd.s32 1, %s300
          $region64: #{_lambda_.3} parent=50 // loop_footer_branch
            %299 = sbr.rel target = $region60
          $region65: #{_lambda_.3} parent=50 // loop_exit
            _
        $region51: #{_lambda_.3} parent=35 // pred_fallthru
          _
      $region36: #{_lambda_.3} parent=31 // pred_fallthru
        _
      // Predicated region
      $region37: #{_lambda_.3} parent=31 // pred_check
        %p220 = pneg %p216
      $region38: #{_lambda_.3} parent=31 // pred_check_branch
        %222 = sbr.rel (%p220) target = $region40
      $region39: #{_lambda_.3} parent=31 // pred_region
        %s223 = sshll.u32 1, 182
        %s224 = ssub.s32 %s223, 1
        loop: start=0, step=1, limit=1
        $region41: #{_lambda_.3} parent=39 // loop_pre_header
          _
        $region42: #{_lambda_.3} parent=39 // loop_header
          %s226 = sphi 0, %s230
          %p227 = scmp.ge.s32.totalorder %s226, 1
          %s231 = sphi %s214, %s214
          %s232 = sphi [#allocation2], [#allocation2]
        $region43: #{_lambda_.3} parent=39 // loop_header_branch
          %229 = sbr.rel (%p227) target = $region47
        $region44: #{_lambda_.3} parent=39 // loop_body
          %v233 = vld [vmem:[%s231] sm:%s224]
          %234 = vst [vmem:[%s232] sm:%s224] %v233
        $region45: #{_lambda_.3} parent=39 // loop_footer
          %s230 = sadd.s32 1, %s226
        $region46: #{_lambda_.3} parent=39 // loop_footer_branch
          %225 = sbr.rel target = $region42
        $region47: #{_lambda_.3} parent=39 // loop_exit
          _
      $region40: #{_lambda_.3} parent=31 // pred_fallthru
        _
      // Predicated region
      $region66: #{_lambda_.3} parent=31 // pred_check
        _
      $region67: #{_lambda_.3} parent=31 // pred_check_branch
        %311 = sbr.rel (0) target = $region69
      $region68: #{_lambda_.3} parent=31 // pred_region
        %312 = vsyncadd [#allocation3], 2912
      $region69: #{_lambda_.3} parent=31 // pred_fallthru
        _
      %s313 = smul.u32 182, 1
      %s314 = sshll.u32 %s313, 4
      %315 = dma.done [#allocation3], %s314
      %v316 = vld [vmem:[#allocation2] sm:$0xff]
      %v317 = vld [vmem:[#allocation2 + $0x8] sm:$0xff]
      %v318 = vld [vmem:[#allocation2 + $0x10] sm:$0xff]
      %v319 = vld [vmem:[#allocation2 + $0x18] sm:$0xff]
      %v320 = vld [vmem:[#allocation2 + $0x20] sm:$0xff]
      %v321 = vld [vmem:[#allocation2 + $0x28] sm:$0xff]
      %v322 = vld [vmem:[#allocation2 + $0x30] sm:$0xff]
      %v323 = vld [vmem:[#allocation2 + $0x38] sm:$0xff]
      %v324 = vld [vmem:[#allocation2 + $0x40] sm:$0xff]
      %v325 = vld [vmem:[#allocation2 + $0x48] sm:$0xff]
      %v326 = vld [vmem:[#allocation2 + $0x50] sm:$0xff]
      %v327 = vld [vmem:[#allocation2 + $0x58] sm:$0xff]
      %v328 = vld [vmem:[#allocation2 + $0x60] sm:$0xff]
      %v329 = vld [vmem:[#allocation2 + $0x68] sm:$0xff]
      %v330 = vld [vmem:[#allocation2 + $0x70] sm:$0xff]
      %v331 = vld [vmem:[#allocation2 + $0x78] sm:$0xff]
      %v332 = vld [vmem:[#allocation2 + $0x80] sm:$0xff]
      %v333 = vld [vmem:[#allocation2 + $0x88] sm:$0xff]
      %v334 = vld [vmem:[%s1] sm:$0xff]
      %v335 = vld [vmem:[%s1 + $0x8] sm:$0xff]
      %v336 = vld [vmem:[%s1 + $0x10] sm:$0xff]
      %v337 = vld [vmem:[%s1 + $0x18] sm:$0xff]
      %v338 = vld [vmem:[%s1 + $0x20] sm:$0xff]
      %v339 = vld [vmem:[%s1 + $0x28] sm:$0xff]
      %v340 = vld [vmem:[%s1 + $0x30] sm:$0xff]
      %v341 = vld [vmem:[%s1 + $0x38] sm:$0xff]
      %v342 = vld [vmem:[%s1 + $0x40] sm:$0xff]
      %v343 = vld [vmem:[%s1 + $0x48] sm:$0xff]
      %v344 = vld [vmem:[%s1 + $0x50] sm:$0xff]
      %v345 = vld [vmem:[%s1 + $0x58] sm:$0xff]
      %v346 = vld [vmem:[%s1 + $0x60] sm:$0xff]
      %v347 = vld [vmem:[%s1 + $0x68] sm:$0xff]
      %v348 = vld [vmem:[%s1 + $0x70] sm:$0xff]
      %v349 = vld [vmem:[%s1 + $0x78] sm:$0xff]
      %v350 = vld [vmem:[#allocation2 + $0x1] sm:$0xff]
      %v351 = vld [vmem:[#allocation2 + $0x9] sm:$0xff]
      %v352 = vld [vmem:[#allocation2 + $0x11] sm:$0xff]
      %v353 = vld [vmem:[#allocation2 + $0x19] sm:$0xff]
      %v354 = vld [vmem:[#allocation2 + $0x21] sm:$0xff]
      %v355 = vld [vmem:[#allocation2 + $0x29] sm:$0xff]
      %v356 = vld [vmem:[#allocation2 + $0x31] sm:$0xff]
      %v357 = vld [vmem:[#allocation2 + $0x39] sm:$0xff]
      %v358 = vld [vmem:[#allocation2 + $0x41] sm:$0xff]
      %v359 = vld [vmem:[#allocation2 + $0x49] sm:$0xff]
      %v360 = vld [vmem:[#allocation2 + $0x51] sm:$0xff]
      %v361 = vld [vmem:[#allocation2 + $0x59] sm:$0xff]
      %v362 = vld [vmem:[#allocation2 + $0x61] sm:$0xff]
      %v363 = vld [vmem:[#allocation2 + $0x69] sm:$0xff]
      %v364 = vld [vmem:[#allocation2 + $0x71] sm:$0xff]
      %v365 = vld [vmem:[#allocation2 + $0x79] sm:$0xff]
      %v366 = vld [vmem:[#allocation2 + $0x81] sm:$0xff]
      %v367 = vld [vmem:[#allocation2 + $0x89] sm:$0xff]
      %s368 = scalar_lea.vmem %s1, 128
      %v369 = vld [vmem:[%s368] sm:$0xff]
      %v370 = vld [vmem:[%s368 + $0x8] sm:$0xff]
      %v371 = vld [vmem:[%s368 + $0x10] sm:$0xff]
      %v372 = vld [vmem:[%s368 + $0x18] sm:$0xff]
      %v373 = vld [vmem:[%s368 + $0x20] sm:$0xff]
      %v374 = vld [vmem:[%s368 + $0x28] sm:$0xff]
      %v375 = vld [vmem:[%s368 + $0x30] sm:$0xff]
      %v376 = vld [vmem:[%s368 + $0x38] sm:$0xff]
      %v377 = vld [vmem:[%s368 + $0x40] sm:$0xff]
      %v378 = vld [vmem:[%s368 + $0x48] sm:$0xff]
      %v379 = vld [vmem:[%s368 + $0x50] sm:$0xff]
      %v380 = vld [vmem:[%s368 + $0x58] sm:$0xff]
      %v381 = vld [vmem:[%s368 + $0x60] sm:$0xff]
      %v382 = vld [vmem:[%s368 + $0x68] sm:$0xff]
      %v383 = vld [vmem:[%s368 + $0x70] sm:$0xff]
      %v384 = vld [vmem:[%s368 + $0x78] sm:$0xff]
      %385 = vmatprep.subr.mxu0 0.0
      %386 = vmatpush1.msra.mxu0 %v384
      %387 = vmatprep.subr.mxu0 0.0
      %388 = vmatpush1.msra.mxu0 %v383
      %389 = vmatprep.subr.mxu0 0.0
      %390 = vmatpush1.msra.mxu0 %v382
      %391 = vmatprep.subr.mxu0 0.0
      %392 = vmatpush1.msra.mxu0 %v381
      %393 = vmatprep.subr.mxu0 0.0
      %394 = vmatpush1.msra.mxu0 %v380
      %395 = vmatprep.subr.mxu0 0.0
      %396 = vmatpush1.msra.mxu0 %v379
      %397 = vmatprep.subr.mxu0 0.0
      %398 = vmatpush1.msra.mxu0 %v378
      %399 = vmatprep.subr.mxu0 0.0
      %400 = vmatpush1.msra.mxu0 %v377
      %401 = vmatprep.subr.mxu0 0.0
      %402 = vmatpush1.msra.mxu0 %v376
      %403 = vmatprep.subr.mxu0 0.0
      %404 = vmatpush1.msra.mxu0 %v375
      %405 = vmatprep.subr.mxu0 0.0
      %406 = vmatpush1.msra.mxu0 %v374
      %407 = vmatprep.subr.mxu0 0.0
      %408 = vmatpush1.msra.mxu0 %v373
      %409 = vmatprep.subr.mxu0 0.0
      %410 = vmatpush1.msra.mxu0 %v372
      %411 = vmatprep.subr.mxu0 0.0
      %412 = vmatpush1.msra.mxu0 %v371
      %413 = vmatprep.subr.mxu0 0.0
      %414 = vmatpush1.msra.mxu0 %v370
      %415 = vmatprep.subr.mxu0 0.0
      %416 = vmatpush1.msra.mxu0 %v369
      %417 = vmatprep.subr.mxu0 0.0
      %418 = vmatpush2.msra.mxu0 0.0
      %419 = vmatprep.subr.mxu0 0.0
      %420 = vmatpush2.msra.mxu0 0.0
      %421 = vmatprep.subr.mxu0 0.0
      %422 = vmatpush2.msra.mxu0 0.0
      %423 = vmatprep.subr.mxu0 0.0
      %424 = vmatpush2.msra.mxu0 0.0
      %425 = vmatprep.subr.mxu0 0.0
      %426 = vmatpush2.msra.mxu0 0.0
      %427 = vmatprep.subr.mxu0 0.0
      %428 = vmatpush2.msra.mxu0 0.0
      %429 = vmatprep.subr.mxu0 0.0
      %430 = vmatpush2.msra.mxu0 0.0
      %431 = vmatprep.subr.mxu0 0.0
      %432 = vmatpush2.msra.mxu0 0.0
      %433 = vmatprep.subr.mxu0 0.0
      %434 = vmatpush2.msra.mxu0 0.0
      %435 = vmatprep.subr.mxu0 0.0
      %436 = vmatpush2.msra.mxu0 0.0
      %437 = vmatprep.subr.mxu0 0.0
      %438 = vmatpush2.msra.mxu0 0.0
      %439 = vmatprep.subr.mxu0 0.0
      %440 = vmatpush2.msra.mxu0 0.0
      %441 = vmatprep.subr.mxu0 0.0
      %442 = vmatpush2.msra.mxu0 0.0
      %443 = vmatprep.subr.mxu0 0.0
      %444 = vmatpush2.msra.mxu0 0.0
      %445 = vmatprep.subr.mxu0 0.0
      %446 = vmatpush2.msra.mxu0 0.0
      %447 = vmatprep.subr.mxu0 0.0
      %448 = vmatpush2.msra.mxu0 0.0
      %449 = vmatprep.mubr.f32.mxu0 0.0
      %450 = vmatmul.mubr.f32.gmra.mxu0 %v350
      %v451 = vpop.f32.mrf.mxu0
      %v452 = vadd.f32 0.0, %v451
      %v453 = vpop.f32.mrf.mxu0
      %454 = vmatprep.mubr.f32.mxu0 0.0
      %455 = vmatmul.mubr.f32.gmra.mxu0 %v351
      %v456 = vpop.f32.mrf.mxu0
      %v457 = vadd.f32 0.0, %v456
      %v458 = vpop.f32.mrf.mxu0
      %459 = vmatprep.mubr.f32.mxu0 0.0
      %460 = vmatmul.mubr.f32.gmra.mxu0 %v352
      %v461 = vpop.f32.mrf.mxu0
      %v462 = vadd.f32 0.0, %v461
      %v463 = vpop.f32.mrf.mxu0
      %464 = vmatprep.mubr.f32.mxu0 0.0
      %465 = vmatmul.mubr.f32.gmra.mxu0 %v353
      %v466 = vpop.f32.mrf.mxu0
      %v467 = vadd.f32 0.0, %v466
      %v468 = vpop.f32.mrf.mxu0
      %469 = vmatprep.mubr.f32.mxu0 0.0
      %470 = vmatmul.mubr.f32.gmra.mxu0 %v354
      %v471 = vpop.f32.mrf.mxu0
      %v472 = vadd.f32 0.0, %v471
      %v473 = vpop.f32.mrf.mxu0
      %474 = vmatprep.mubr.f32.mxu0 0.0
      %475 = vmatmul.mubr.f32.gmra.mxu0 %v355
      %v476 = vpop.f32.mrf.mxu0
      %v477 = vadd.f32 0.0, %v476
      %v478 = vpop.f32.mrf.mxu0
      %479 = vmatprep.mubr.f32.mxu0 0.0
      %480 = vmatmul.mubr.f32.gmra.mxu0 %v356
      %v481 = vpop.f32.mrf.mxu0
      %v482 = vadd.f32 0.0, %v481
      %v483 = vpop.f32.mrf.mxu0
      %484 = vmatprep.mubr.f32.mxu0 0.0
      %485 = vmatmul.mubr.f32.gmra.mxu0 %v357
      %v486 = vpop.f32.mrf.mxu0
      %v487 = vadd.f32 0.0, %v486
      %v488 = vpop.f32.mrf.mxu0
      %489 = vmatprep.mubr.f32.mxu0 0.0
      %490 = vmatmul.mubr.f32.gmra.mxu0 %v358
      %v491 = vpop.f32.mrf.mxu0
      %v492 = vadd.f32 0.0, %v491
      %v493 = vpop.f32.mrf.mxu0
      %494 = vmatprep.mubr.f32.mxu0 0.0
      %495 = vmatmul.mubr.f32.gmra.mxu0 %v359
      %v496 = vpop.f32.mrf.mxu0
      %v497 = vadd.f32 0.0, %v496
      %v498 = vpop.f32.mrf.mxu0
      %499 = vmatprep.mubr.f32.mxu0 0.0
      %500 = vmatmul.mubr.f32.gmra.mxu0 %v360
      %v501 = vpop.f32.mrf.mxu0
      %v502 = vadd.f32 0.0, %v501
      %v503 = vpop.f32.mrf.mxu0
      %504 = vmatprep.mubr.f32.mxu0 0.0
      %505 = vmatmul.mubr.f32.gmra.mxu0 %v361
      %v506 = vpop.f32.mrf.mxu0
      %v507 = vadd.f32 0.0, %v506
      %v508 = vpop.f32.mrf.mxu0
      %509 = vmatprep.mubr.f32.mxu0 0.0
      %510 = vmatmul.mubr.f32.gmra.mxu0 %v362
      %v511 = vpop.f32.mrf.mxu0
      %v512 = vadd.f32 0.0, %v511
      %v513 = vpop.f32.mrf.mxu0
      %514 = vmatprep.mubr.f32.mxu0 0.0
      %515 = vmatmul.mubr.f32.gmra.mxu0 %v363
      %v516 = vpop.f32.mrf.mxu0
      %v517 = vadd.f32 0.0, %v516
      %v518 = vpop.f32.mrf.mxu0
      %519 = vmatprep.mubr.f32.mxu0 0.0
      %520 = vmatmul.mubr.f32.gmra.mxu0 %v364
      %v521 = vpop.f32.mrf.mxu0
      %v522 = vadd.f32 0.0, %v521
      %v523 = vpop.f32.mrf.mxu0
      %524 = vmatprep.mubr.f32.mxu0 0.0
      %525 = vmatmul.mubr.f32.gmra.mxu0 %v365
      %v526 = vpop.f32.mrf.mxu0
      %v527 = vadd.f32 0.0, %v526
      %v528 = vpop.f32.mrf.mxu0
      %529 = vmatprep.mubr.f32.mxu0 0.0
      %530 = vmatmul.mubr.f32.gmra.mxu0 %v366
      %v531 = vpop.f32.mrf.mxu0
      %v532 = vadd.f32 0.0, %v531
      %v533 = vpop.f32.mrf.mxu0
      %534 = vmatprep.mubr.f32.mxu0 0.0
      %535 = vmatmul.mubr.f32.gmra.mxu0 %v367
      %v536 = vpop.f32.mrf.mxu0
      %v537 = vadd.f32 0.0, %v536
      %v538 = vpop.f32.mrf.mxu0
      %539 = vdwg.mxu0
      %540 = vmatprep.subr.mxu0 0.0
      %541 = vmatpush1.msra.mxu0 %v349
      %542 = vmatprep.subr.mxu0 0.0
      %543 = vmatpush1.msra.mxu0 %v348
      %544 = vmatprep.subr.mxu0 0.0
      %545 = vmatpush1.msra.mxu0 %v347
      %546 = vmatprep.subr.mxu0 0.0
      %547 = vmatpush1.msra.mxu0 %v346
      %548 = vmatprep.subr.mxu0 0.0
      %549 = vmatpush1.msra.mxu0 %v345
      %550 = vmatprep.subr.mxu0 0.0
      %551 = vmatpush1.msra.mxu0 %v344
      %552 = vmatprep.subr.mxu0 0.0
      %553 = vmatpush1.msra.mxu0 %v343
      %554 = vmatprep.subr.mxu0 0.0
      %555 = vmatpush1.msra.mxu0 %v342
      %556 = vmatprep.subr.mxu0 0.0
      %557 = vmatpush1.msra.mxu0 %v341
      %558 = vmatprep.subr.mxu0 0.0
      %559 = vmatpush1.msra.mxu0 %v340
      %560 = vmatprep.subr.mxu0 0.0
      %561 = vmatpush1.msra.mxu0 %v339
      %562 = vmatprep.subr.mxu0 0.0
      %563 = vmatpush1.msra.mxu0 %v338
      %564 = vmatprep.subr.mxu0 0.0
      %565 = vmatpush1.msra.mxu0 %v337
      %566 = vmatprep.subr.mxu0 0.0
      %567 = vmatpush1.msra.mxu0 %v336
      %568 = vmatprep.subr.mxu0 0.0
      %569 = vmatpush1.msra.mxu0 %v335
      %570 = vmatprep.subr.mxu0 0.0
      %571 = vmatpush1.msra.mxu0 %v334
      %572 = vmatprep.subr.mxu0 0.0
      %573 = vmatpush2.msra.mxu0 0.0
      %574 = vmatprep.subr.mxu0 0.0
      %575 = vmatpush2.msra.mxu0 0.0
      %576 = vmatprep.subr.mxu0 0.0
      %577 = vmatpush2.msra.mxu0 0.0
      %578 = vmatprep.subr.mxu0 0.0
      %579 = vmatpush2.msra.mxu0 0.0
      %580 = vmatprep.subr.mxu0 0.0
      %581 = vmatpush2.msra.mxu0 0.0
      %582 = vmatprep.subr.mxu0 0.0
      %583 = vmatpush2.msra.mxu0 0.0
      %584 = vmatprep.subr.mxu0 0.0
      %585 = vmatpush2.msra.mxu0 0.0
      %586 = vmatprep.subr.mxu0 0.0
      %587 = vmatpush2.msra.mxu0 0.0
      %588 = vmatprep.subr.mxu0 0.0
      %589 = vmatpush2.msra.mxu0 0.0
      %590 = vmatprep.subr.mxu0 0.0
      %591 = vmatpush2.msra.mxu0 0.0
      %592 = vmatprep.subr.mxu0 0.0
      %593 = vmatpush2.msra.mxu0 0.0
      %594 = vmatprep.subr.mxu0 0.0
      %595 = vmatpush2.msra.mxu0 0.0
      %596 = vmatprep.subr.mxu0 0.0
      %597 = vmatpush2.msra.mxu0 0.0
      %598 = vmatprep.subr.mxu0 0.0
      %599 = vmatpush2.msra.mxu0 0.0
      %600 = vmatprep.subr.mxu0 0.0
      %601 = vmatpush2.msra.mxu0 0.0
      %602 = vmatprep.subr.mxu0 0.0
      %603 = vmatpush2.msra.mxu0 0.0
      %604 = vmatprep.mubr.f32.mxu0 0.0
      %605 = vmatmul.mubr.f32.gmra.mxu0 %v316
      %v606 = vpop.f32.mrf.mxu0
      %v607 = vadd.f32 %v452, %v606
      %v608 = vpop.f32.mrf.mxu0
      %609 = vmatprep.mubr.f32.mxu0 0.0
      %610 = vmatmul.mubr.f32.gmra.mxu0 %v317
      %v611 = vpop.f32.mrf.mxu0
      %v612 = vadd.f32 %v457, %v611
      %v613 = vpop.f32.mrf.mxu0
      %614 = vmatprep.mubr.f32.mxu0 0.0
      %615 = vmatmul.mubr.f32.gmra.mxu0 %v318
      %v616 = vpop.f32.mrf.mxu0
      %v617 = vadd.f32 %v462, %v616
      %v618 = vpop.f32.mrf.mxu0
      %619 = vmatprep.mubr.f32.mxu0 0.0
      %620 = vmatmul.mubr.f32.gmra.mxu0 %v319
      %v621 = vpop.f32.mrf.mxu0
      %v622 = vadd.f32 %v467, %v621
      %v623 = vpop.f32.mrf.mxu0
      %624 = vmatprep.mubr.f32.mxu0 0.0
      %625 = vmatmul.mubr.f32.gmra.mxu0 %v320
      %v626 = vpop.f32.mrf.mxu0
      %v627 = vadd.f32 %v472, %v626
      %v628 = vpop.f32.mrf.mxu0
      %629 = vmatprep.mubr.f32.mxu0 0.0
      %630 = vmatmul.mubr.f32.gmra.mxu0 %v321
      %v631 = vpop.f32.mrf.mxu0
      %v632 = vadd.f32 %v477, %v631
      %v633 = vpop.f32.mrf.mxu0
      %634 = vmatprep.mubr.f32.mxu0 0.0
      %635 = vmatmul.mubr.f32.gmra.mxu0 %v322
      %v636 = vpop.f32.mrf.mxu0
      %v637 = vadd.f32 %v482, %v636
      %v638 = vpop.f32.mrf.mxu0
      %639 = vmatprep.mubr.f32.mxu0 0.0
      %640 = vmatmul.mubr.f32.gmra.mxu0 %v323
      %v641 = vpop.f32.mrf.mxu0
      %v642 = vadd.f32 %v487, %v641
      %v643 = vpop.f32.mrf.mxu0
      %644 = vmatprep.mubr.f32.mxu0 0.0
      %645 = vmatmul.mubr.f32.gmra.mxu0 %v324
      %v646 = vpop.f32.mrf.mxu0
      %v647 = vadd.f32 %v492, %v646
      %v648 = vpop.f32.mrf.mxu0
      %649 = vmatprep.mubr.f32.mxu0 0.0
      %650 = vmatmul.mubr.f32.gmra.mxu0 %v325
      %v651 = vpop.f32.mrf.mxu0
      %v652 = vadd.f32 %v497, %v651
      %v653 = vpop.f32.mrf.mxu0
      %654 = vmatprep.mubr.f32.mxu0 0.0
      %655 = vmatmul.mubr.f32.gmra.mxu0 %v326
      %v656 = vpop.f32.mrf.mxu0
      %v657 = vadd.f32 %v502, %v656
      %v658 = vpop.f32.mrf.mxu0
      %659 = vmatprep.mubr.f32.mxu0 0.0
      %660 = vmatmul.mubr.f32.gmra.mxu0 %v327
      %v661 = vpop.f32.mrf.mxu0
      %v662 = vadd.f32 %v507, %v661
      %v663 = vpop.f32.mrf.mxu0
      %664 = vmatprep.mubr.f32.mxu0 0.0
      %665 = vmatmul.mubr.f32.gmra.mxu0 %v328
      %v666 = vpop.f32.mrf.mxu0
      %v667 = vadd.f32 %v512, %v666
      %v668 = vpop.f32.mrf.mxu0
      %669 = vmatprep.mubr.f32.mxu0 0.0
      %670 = vmatmul.mubr.f32.gmra.mxu0 %v329
      %v671 = vpop.f32.mrf.mxu0
      %v672 = vadd.f32 %v517, %v671
      %v673 = vpop.f32.mrf.mxu0
      %674 = vmatprep.mubr.f32.mxu0 0.0
      %675 = vmatmul.mubr.f32.gmra.mxu0 %v330
      %v676 = vpop.f32.mrf.mxu0
      %v677 = vadd.f32 %v522, %v676
      %v678 = vpop.f32.mrf.mxu0
      %679 = vmatprep.mubr.f32.mxu0 0.0
      %680 = vmatmul.mubr.f32.gmra.mxu0 %v331
      %v681 = vpop.f32.mrf.mxu0
      %v682 = vadd.f32 %v527, %v681
      %v683 = vpop.f32.mrf.mxu0
      %684 = vmatprep.mubr.f32.mxu0 0.0
      %685 = vmatmul.mubr.f32.gmra.mxu0 %v332
      %v686 = vpop.f32.mrf.mxu0
      %v687 = vadd.f32 %v532, %v686
      %v688 = vpop.f32.mrf.mxu0
      %689 = vmatprep.mubr.f32.mxu0 0.0
      %690 = vmatmul.mubr.f32.gmra.mxu0 %v333
      %v691 = vpop.f32.mrf.mxu0
      %v692 = vadd.f32 %v537, %v691
      %v693 = vpop.f32.mrf.mxu0
      %694 = vdwg.mxu0
      %v695 = vld [vmem:[#allocation2 + $0x2] sm:$0xff]
      %v696 = vld [vmem:[#allocation2 + $0xa] sm:$0xff]
      %v697 = vld [vmem:[#allocation2 + $0x12] sm:$0xff]
      %v698 = vld [vmem:[#allocation2 + $0x1a] sm:$0xff]
      %v699 = vld [vmem:[#allocation2 + $0x22] sm:$0xff]
      %v700 = vld [vmem:[#allocation2 + $0x2a] sm:$0xff]
      %v701 = vld [vmem:[#allocation2 + $0x32] sm:$0xff]
      %v702 = vld [vmem:[#allocation2 + $0x3a] sm:$0xff]
      %v703 = vld [vmem:[#allocation2 + $0x42] sm:$0xff]
      %v704 = vld [vmem:[#allocation2 + $0x4a] sm:$0xff]
      %v705 = vld [vmem:[#allocation2 + $0x52] sm:$0xff]
      %v706 = vld [vmem:[#allocation2 + $0x5a] sm:$0xff]
      %v707 = vld [vmem:[#allocation2 + $0x62] sm:$0xff]
      %v708 = vld [vmem:[#allocation2 + $0x6a] sm:$0xff]
      %v709 = vld [vmem:[#allocation2 + $0x72] sm:$0xff]
      %v710 = vld [vmem:[#allocation2 + $0x7a] sm:$0xff]
      %v711 = vld [vmem:[#allocation2 + $0x82] sm:$0xff]
      %v712 = vld [vmem:[#allocation2 + $0x8a] sm:$0xff]
      %s713 = scalar_lea.vmem %s1, 256
      %v714 = vld [vmem:[%s713] sm:$0xff]
      %v715 = vld [vmem:[%s713 + $0x8] sm:$0xff]
      %v716 = vld [vmem:[%s713 + $0x10] sm:$0xff]
      %v717 = vld [vmem:[%s713 + $0x18] sm:$0xff]
      %v718 = vld [vmem:[%s713 + $0x20] sm:$0xff]
      %v719 = vld [vmem:[%s713 + $0x28] sm:$0xff]
      %v720 = vld [vmem:[%s713 + $0x30] sm:$0xff]
      %v721 = vld [vmem:[%s713 + $0x38] sm:$0xff]
      %v722 = vld [vmem:[%s713 + $0x40] sm:$0xff]
      %v723 = vld [vmem:[%s713 + $0x48] sm:$0xff]
      %v724 = vld [vmem:[%s713 + $0x50] sm:$0xff]
      %v725 = vld [vmem:[%s713 + $0x58] sm:$0xff]
      %v726 = vld [vmem:[%s713 + $0x60] sm:$0xff]
      %v727 = vld [vmem:[%s713 + $0x68] sm:$0xff]
      %v728 = vld [vmem:[%s713 + $0x70] sm:$0xff]
      %v729 = vld [vmem:[%s713 + $0x78] sm:$0xff]
      %730 = vmatprep.subr.mxu0 0.0
      %731 = vmatpush1.msra.mxu0 %v729
      %732 = vmatprep.subr.mxu0 0.0
      %733 = vmatpush1.msra.mxu0 %v728
      %734 = vmatprep.subr.mxu0 0.0
      %735 = vmatpush1.msra.mxu0 %v727
      %736 = vmatprep.subr.mxu0 0.0
      %737 = vmatpush1.msra.mxu0 %v726
      %738 = vmatprep.subr.mxu0 0.0
      %739 = vmatpush1.msra.mxu0 %v725
      %740 = vmatprep.subr.mxu0 0.0
      %741 = vmatpush1.msra.mxu0 %v724
      %742 = vmatprep.subr.mxu0 0.0
      %743 = vmatpush1.msra.mxu0 %v723
      %744 = vmatprep.subr.mxu0 0.0
      %745 = vmatpush1.msra.mxu0 %v722
      %746 = vmatprep.subr.mxu0 0.0
      %747 = vmatpush1.msra.mxu0 %v721
      %748 = vmatprep.subr.mxu0 0.0
      %749 = vmatpush1.msra.mxu0 %v720
      %750 = vmatprep.subr.mxu0 0.0
      %751 = vmatpush1.msra.mxu0 %v719
      %752 = vmatprep.subr.mxu0 0.0
      %753 = vmatpush1.msra.mxu0 %v718
      %754 = vmatprep.subr.mxu0 0.0
      %755 = vmatpush1.msra.mxu0 %v717
      %756 = vmatprep.subr.mxu0 0.0
      %757 = vmatpush1.msra.mxu0 %v716
      %758 = vmatprep.subr.mxu0 0.0
      %759 = vmatpush1.msra.mxu0 %v715
      %760 = vmatprep.subr.mxu0 0.0
      %761 = vmatpush1.msra.mxu0 %v714
      %762 = vmatprep.subr.mxu0 0.0
      %763 = vmatpush2.msra.mxu0 0.0
      %764 = vmatprep.subr.mxu0 0.0
      %765 = vmatpush2.msra.mxu0 0.0
      %766 = vmatprep.subr.mxu0 0.0
      %767 = vmatpush2.msra.mxu0 0.0
      %768 = vmatprep.subr.mxu0 0.0
      %769 = vmatpush2.msra.mxu0 0.0
      %770 = vmatprep.subr.mxu0 0.0
      %771 = vmatpush2.msra.mxu0 0.0
      %772 = vmatprep.subr.mxu0 0.0
      %773 = vmatpush2.msra.mxu0 0.0
      %774 = vmatprep.subr.mxu0 0.0
      %775 = vmatpush2.msra.mxu0 0.0
      %776 = vmatprep.subr.mxu0 0.0
      %777 = vmatpush2.msra.mxu0 0.0
      %778 = vmatprep.subr.mxu0 0.0
      %779 = vmatpush2.msra.mxu0 0.0
      %780 = vmatprep.subr.mxu0 0.0
      %781 = vmatpush2.msra.mxu0 0.0
      %782 = vmatprep.subr.mxu0 0.0
      %783 = vmatpush2.msra.mxu0 0.0
      %784 = vmatprep.subr.mxu0 0.0
      %785 = vmatpush2.msra.mxu0 0.0
      %786 = vmatprep.subr.mxu0 0.0
      %787 = vmatpush2.msra.mxu0 0.0
      %788 = vmatprep.subr.mxu0 0.0
      %789 = vmatpush2.msra.mxu0 0.0
      %790 = vmatprep.subr.mxu0 0.0
      %791 = vmatpush2.msra.mxu0 0.0
      %792 = vmatprep.subr.mxu0 0.0
      %793 = vmatpush2.msra.mxu0 0.0
      %794 = vmatprep.mubr.f32.mxu0 0.0
      %795 = vmatmul.mubr.f32.gmra.mxu0 %v695
      %v796 = vpop.f32.mrf.mxu0
      %v797 = vadd.f32 0.0, %v796
      %v798 = vpop.f32.mrf.mxu0
      %799 = vmatprep.mubr.f32.mxu0 0.0
      %800 = vmatmul.mubr.f32.gmra.mxu0 %v696
      %v801 = vpop.f32.mrf.mxu0
      %v802 = vadd.f32 0.0, %v801
      %v803 = vpop.f32.mrf.mxu0
      %804 = vmatprep.mubr.f32.mxu0 0.0
      %805 = vmatmul.mubr.f32.gmra.mxu0 %v697
      %v806 = vpop.f32.mrf.mxu0
      %v807 = vadd.f32 0.0, %v806
      %v808 = vpop.f32.mrf.mxu0
      %809 = vmatprep.mubr.f32.mxu0 0.0
      %810 = vmatmul.mubr.f32.gmra.mxu0 %v698
      %v811 = vpop.f32.mrf.mxu0
      %v812 = vadd.f32 0.0, %v811
      %v813 = vpop.f32.mrf.mxu0
      %814 = vmatprep.mubr.f32.mxu0 0.0
      %815 = vmatmul.mubr.f32.gmra.mxu0 %v699
      %v816 = vpop.f32.mrf.mxu0
      %v817 = vadd.f32 0.0, %v816
      %v818 = vpop.f32.mrf.mxu0
      %819 = vmatprep.mubr.f32.mxu0 0.0
      %820 = vmatmul.mubr.f32.gmra.mxu0 %v700
      %v821 = vpop.f32.mrf.mxu0
      %v822 = vadd.f32 0.0, %v821
      %v823 = vpop.f32.mrf.mxu0
      %824 = vmatprep.mubr.f32.mxu0 0.0
      %825 = vmatmul.mubr.f32.gmra.mxu0 %v701
      %v826 = vpop.f32.mrf.mxu0
      %v827 = vadd.f32 0.0, %v826
      %v828 = vpop.f32.mrf.mxu0
      %829 = vmatprep.mubr.f32.mxu0 0.0
      %830 = vmatmul.mubr.f32.gmra.mxu0 %v702
      %v831 = vpop.f32.mrf.mxu0
      %v832 = vadd.f32 0.0, %v831
      %v833 = vpop.f32.mrf.mxu0
      %834 = vmatprep.mubr.f32.mxu0 0.0
      %835 = vmatmul.mubr.f32.gmra.mxu0 %v703
      %v836 = vpop.f32.mrf.mxu0
      %v837 = vadd.f32 0.0, %v836
      %v838 = vpop.f32.mrf.mxu0
      %839 = vmatprep.mubr.f32.mxu0 0.0
      %840 = vmatmul.mubr.f32.gmra.mxu0 %v704
      %v841 = vpop.f32.mrf.mxu0
      %v842 = vadd.f32 0.0, %v841
      %v843 = vpop.f32.mrf.mxu0
      %844 = vmatprep.mubr.f32.mxu0 0.0
      %845 = vmatmul.mubr.f32.gmra.mxu0 %v705
      %v846 = vpop.f32.mrf.mxu0
      %v847 = vadd.f32 0.0, %v846
      %v848 = vpop.f32.mrf.mxu0
      %849 = vmatprep.mubr.f32.mxu0 0.0
      %850 = vmatmul.mubr.f32.gmra.mxu0 %v706
      %v851 = vpop.f32.mrf.mxu0
      %v852 = vadd.f32 0.0, %v851
      %v853 = vpop.f32.mrf.mxu0
      %854 = vmatprep.mubr.f32.mxu0 0.0
      %855 = vmatmul.mubr.f32.gmra.mxu0 %v707
      %v856 = vpop.f32.mrf.mxu0
      %v857 = vadd.f32 0.0, %v856
      %v858 = vpop.f32.mrf.mxu0
      %859 = vmatprep.mubr.f32.mxu0 0.0
      %860 = vmatmul.mubr.f32.gmra.mxu0 %v708
      %v861 = vpop.f32.mrf.mxu0
      %v862 = vadd.f32 0.0, %v861
      %v863 = vpop.f32.mrf.mxu0
      %864 = vmatprep.mubr.f32.mxu0 0.0
      %865 = vmatmul.mubr.f32.gmra.mxu0 %v709
      %v866 = vpop.f32.mrf.mxu0
      %v867 = vadd.f32 0.0, %v866
      %v868 = vpop.f32.mrf.mxu0
      %869 = vmatprep.mubr.f32.mxu0 0.0
      %870 = vmatmul.mubr.f32.gmra.mxu0 %v710
      %v871 = vpop.f32.mrf.mxu0
      %v872 = vadd.f32 0.0, %v871
      %v873 = vpop.f32.mrf.mxu0
      %874 = vmatprep.mubr.f32.mxu0 0.0
      %875 = vmatmul.mubr.f32.gmra.mxu0 %v711
      %v876 = vpop.f32.mrf.mxu0
      %v877 = vadd.f32 0.0, %v876
      %v878 = vpop.f32.mrf.mxu0
      %879 = vmatprep.mubr.f32.mxu0 0.0
      %880 = vmatmul.mubr.f32.gmra.mxu0 %v712
      %v881 = vpop.f32.mrf.mxu0
      %v882 = vadd.f32 0.0, %v881
      %v883 = vpop.f32.mrf.mxu0
      %884 = vdwg.mxu0
      %v885 = vadd.f32 %v607, %v797
      %v886 = vadd.f32 %v612, %v802
      %v887 = vadd.f32 %v617, %v807
      %v888 = vadd.f32 %v622, %v812
      %v889 = vadd.f32 %v627, %v817
      %v890 = vadd.f32 %v632, %v822
      %v891 = vadd.f32 %v637, %v827
      %v892 = vadd.f32 %v642, %v832
      %v893 = vadd.f32 %v647, %v837
      %v894 = vadd.f32 %v652, %v842
      %v895 = vadd.f32 %v657, %v847
      %v896 = vadd.f32 %v662, %v852
      %v897 = vadd.f32 %v667, %v857
      %v898 = vadd.f32 %v672, %v862
      %v899 = vadd.f32 %v677, %v867
      %v900 = vadd.f32 %v682, %v872
      %v901 = vadd.f32 %v687, %v877
      %v902 = vadd.f32 %v692, %v882
      %v903 = vld [vmem:[#allocation2 + $0x12] sm:$0xff]
      %v904 = vld [vmem:[#allocation2 + $0x1a] sm:$0xff]
      %v905 = vld [vmem:[#allocation2 + $0x22] sm:$0xff]
      %v906 = vld [vmem:[#allocation2 + $0x2a] sm:$0xff]
      %v907 = vld [vmem:[#allocation2 + $0x32] sm:$0xff]
      %v908 = vld [vmem:[#allocation2 + $0x3a] sm:$0xff]
      %v909 = vld [vmem:[#allocation2 + $0x42] sm:$0xff]
      %v910 = vld [vmem:[#allocation2 + $0x4a] sm:$0xff]
      %v911 = vld [vmem:[#allocation2 + $0x52] sm:$0xff]
      %v912 = vld [vmem:[#allocation2 + $0x5a] sm:$0xff]
      %v913 = vld [vmem:[#allocation2 + $0x62] sm:$0xff]
      %v914 = vld [vmem:[#allocation2 + $0x6a] sm:$0xff]
      %v915 = vld [vmem:[#allocation2 + $0x72] sm:$0xff]
      %v916 = vld [vmem:[#allocation2 + $0x7a] sm:$0xff]
      %v917 = vld [vmem:[#allocation2 + $0x82] sm:$0xff]
      %v918 = vld [vmem:[#allocation2 + $0x8a] sm:$0xff]
      %v919 = vld [vmem:[#allocation2 + $0x92] sm:$0xff]
      %v920 = vld [vmem:[#allocation2 + $0x9a] sm:$0xff]
      %s921 = scalar_lea.vmem %s1, 384
      %v922 = vld [vmem:[%s921] sm:$0xff]
      %v923 = vld [vmem:[%s921 + $0x8] sm:$0xff]
      %v924 = vld [vmem:[%s921 + $0x10] sm:$0xff]
      %v925 = vld [vmem:[%s921 + $0x18] sm:$0xff]
      %v926 = vld [vmem:[%s921 + $0x20] sm:$0xff]
      %v927 = vld [vmem:[%s921 + $0x28] sm:$0xff]
      %v928 = vld [vmem:[%s921 + $0x30] sm:$0xff]
      %v929 = vld [vmem:[%s921 + $0x38] sm:$0xff]
      %v930 = vld [vmem:[%s921 + $0x40] sm:$0xff]
      %v931 = vld [vmem:[%s921 + $0x48] sm:$0xff]
      %v932 = vld [vmem:[%s921 + $0x50] sm:$0xff]
      %v933 = vld [vmem:[%s921 + $0x58] sm:$0xff]
      %v934 = vld [vmem:[%s921 + $0x60] sm:$0xff]
      %v935 = vld [vmem:[%s921 + $0x68] sm:$0xff]
      %v936 = vld [vmem:[%s921 + $0x70] sm:$0xff]
      %v937 = vld [vmem:[%s921 + $0x78] sm:$0xff]
      %938 = vmatprep.subr.mxu0 0.0
      %939 = vmatpush1.msra.mxu0 %v937
      %940 = vmatprep.subr.mxu0 0.0
      %941 = vmatpush1.msra.mxu0 %v936
      %942 = vmatprep.subr.mxu0 0.0
      %943 = vmatpush1.msra.mxu0 %v935
      %944 = vmatprep.subr.mxu0 0.0
      %945 = vmatpush1.msra.mxu0 %v934
      %946 = vmatprep.subr.mxu0 0.0
      %947 = vmatpush1.msra.mxu0 %v933
      %948 = vmatprep.subr.mxu0 0.0
      %949 = vmatpush1.msra.mxu0 %v932
      %950 = vmatprep.subr.mxu0 0.0
      %951 = vmatpush1.msra.mxu0 %v931
      %952 = vmatprep.subr.mxu0 0.0
      %953 = vmatpush1.msra.mxu0 %v930
      %954 = vmatprep.subr.mxu0 0.0
      %955 = vmatpush1.msra.mxu0 %v929
      %956 = vmatprep.subr.mxu0 0.0
      %957 = vmatpush1.msra.mxu0 %v928
      %958 = vmatprep.subr.mxu0 0.0
      %959 = vmatpush1.msra.mxu0 %v927
      %960 = vmatprep.subr.mxu0 0.0
      %961 = vmatpush1.msra.mxu0 %v926
      %962 = vmatprep.subr.mxu0 0.0
      %963 = vmatpush1.msra.mxu0 %v925
      %964 = vmatprep.subr.mxu0 0.0
      %965 = vmatpush1.msra.mxu0 %v924
      %966 = vmatprep.subr.mxu0 0.0
      %967 = vmatpush1.msra.mxu0 %v923
      %968 = vmatprep.subr.mxu0 0.0
      %969 = vmatpush1.msra.mxu0 %v922
      %970 = vmatprep.subr.mxu0 0.0
      %971 = vmatpush2.msra.mxu0 0.0
      %972 = vmatprep.subr.mxu0 0.0
      %973 = vmatpush2.msra.mxu0 0.0
      %974 = vmatprep.subr.mxu0 0.0
      %975 = vmatpush2.msra.mxu0 0.0
      %976 = vmatprep.subr.mxu0 0.0
      %977 = vmatpush2.msra.mxu0 0.0
      %978 = vmatprep.subr.mxu0 0.0
      %979 = vmatpush2.msra.mxu0 0.0
      %980 = vmatprep.subr.mxu0 0.0
      %981 = vmatpush2.msra.mxu0 0.0
      %982 = vmatprep.subr.mxu0 0.0
      %983 = vmatpush2.msra.mxu0 0.0
      %984 = vmatprep.subr.mxu0 0.0
      %985 = vmatpush2.msra.mxu0 0.0
      %986 = vmatprep.subr.mxu0 0.0
      %987 = vmatpush2.msra.mxu0 0.0
      %988 = vmatprep.subr.mxu0 0.0
      %989 = vmatpush2.msra.mxu0 0.0
      %990 = vmatprep.subr.mxu0 0.0
      %991 = vmatpush2.msra.mxu0 0.0
      %992 = vmatprep.subr.mxu0 0.0
      %993 = vmatpush2.msra.mxu0 0.0
      %994 = vmatprep.subr.mxu0 0.0
      %995 = vmatpush2.msra.mxu0 0.0
      %996 = vmatprep.subr.mxu0 0.0
      %997 = vmatpush2.msra.mxu0 0.0
      %998 = vmatprep.subr.mxu0 0.0
      %999 = vmatpush2.msra.mxu0 0.0
      %1000 = vmatprep.subr.mxu0 0.0
      %1001 = vmatpush2.msra.mxu0 0.0
      %1002 = vmatprep.mubr.f32.mxu0 0.0
      %1003 = vmatmul.mubr.f32.gmra.mxu0 %v903
      %v1004 = vpop.f32.mrf.mxu0
      %v1005 = vadd.f32 0.0, %v1004
      %v1006 = vpop.f32.mrf.mxu0
      %1007 = vmatprep.mubr.f32.mxu0 0.0
      %1008 = vmatmul.mubr.f32.gmra.mxu0 %v904
      %v1009 = vpop.f32.mrf.mxu0
      %v1010 = vadd.f32 0.0, %v1009
      %v1011 = vpop.f32.mrf.mxu0
      %1012 = vmatprep.mubr.f32.mxu0 0.0
      %1013 = vmatmul.mubr.f32.gmra.mxu0 %v905
      %v1014 = vpop.f32.mrf.mxu0
      %v1015 = vadd.f32 0.0, %v1014
      %v1016 = vpop.f32.mrf.mxu0
      %1017 = vmatprep.mubr.f32.mxu0 0.0
      %1018 = vmatmul.mubr.f32.gmra.mxu0 %v906
      %v1019 = vpop.f32.mrf.mxu0
      %v1020 = vadd.f32 0.0, %v1019
      %v1021 = vpop.f32.mrf.mxu0
      %1022 = vmatprep.mubr.f32.mxu0 0.0
      %1023 = vmatmul.mubr.f32.gmra.mxu0 %v907
      %v1024 = vpop.f32.mrf.mxu0
      %v1025 = vadd.f32 0.0, %v1024
      %v1026 = vpop.f32.mrf.mxu0
      %1027 = vmatprep.mubr.f32.mxu0 0.0
      %1028 = vmatmul.mubr.f32.gmra.mxu0 %v908
      %v1029 = vpop.f32.mrf.mxu0
      %v1030 = vadd.f32 0.0, %v1029
      %v1031 = vpop.f32.mrf.mxu0
      %1032 = vmatprep.mubr.f32.mxu0 0.0
      %1033 = vmatmul.mubr.f32.gmra.mxu0 %v909
      %v1034 = vpop.f32.mrf.mxu0
      %v1035 = vadd.f32 0.0, %v1034
      %v1036 = vpop.f32.mrf.mxu0
      %1037 = vmatprep.mubr.f32.mxu0 0.0
      %1038 = vmatmul.mubr.f32.gmra.mxu0 %v910
      %v1039 = vpop.f32.mrf.mxu0
      %v1040 = vadd.f32 0.0, %v1039
      %v1041 = vpop.f32.mrf.mxu0
      %1042 = vmatprep.mubr.f32.mxu0 0.0
      %1043 = vmatmul.mubr.f32.gmra.mxu0 %v911
      %v1044 = vpop.f32.mrf.mxu0
      %v1045 = vadd.f32 0.0, %v1044
      %v1046 = vpop.f32.mrf.mxu0
      %1047 = vmatprep.mubr.f32.mxu0 0.0
      %1048 = vmatmul.mubr.f32.gmra.mxu0 %v912
      %v1049 = vpop.f32.mrf.mxu0
      %v1050 = vadd.f32 0.0, %v1049
      %v1051 = vpop.f32.mrf.mxu0
      %1052 = vmatprep.mubr.f32.mxu0 0.0
      %1053 = vmatmul.mubr.f32.gmra.mxu0 %v913
      %v1054 = vpop.f32.mrf.mxu0
      %v1055 = vadd.f32 0.0, %v1054
      %v1056 = vpop.f32.mrf.mxu0
      %1057 = vmatprep.mubr.f32.mxu0 0.0
      %1058 = vmatmul.mubr.f32.gmra.mxu0 %v914
      %v1059 = vpop.f32.mrf.mxu0
      %v1060 = vadd.f32 0.0, %v1059
      %v1061 = vpop.f32.mrf.mxu0
      %1062 = vmatprep.mubr.f32.mxu0 0.0
      %1063 = vmatmul.mubr.f32.gmra.mxu0 %v915
      %v1064 = vpop.f32.mrf.mxu0
      %v1065 = vadd.f32 0.0, %v1064
      %v1066 = vpop.f32.mrf.mxu0
      %1067 = vmatprep.mubr.f32.mxu0 0.0
      %1068 = vmatmul.mubr.f32.gmra.mxu0 %v916
      %v1069 = vpop.f32.mrf.mxu0
      %v1070 = vadd.f32 0.0, %v1069
      %v1071 = vpop.f32.mrf.mxu0
      %1072 = vmatprep.mubr.f32.mxu0 0.0
      %1073 = vmatmul.mubr.f32.gmra.mxu0 %v917
      %v1074 = vpop.f32.mrf.mxu0
      %v1075 = vadd.f32 0.0, %v1074
      %v1076 = vpop.f32.mrf.mxu0
      %1077 = vmatprep.mubr.f32.mxu0 0.0
      %1078 = vmatmul.mubr.f32.gmra.mxu0 %v918
      %v1079 = vpop.f32.mrf.mxu0
      %v1080 = vadd.f32 0.0, %v1079
      %v1081 = vpop.f32.mrf.mxu0
      %1082 = vmatprep.mubr.f32.mxu0 0.0
      %1083 = vmatmul.mubr.f32.gmra.mxu0 %v919
      %v1084 = vpop.f32.mrf.mxu0
      %v1085 = vadd.f32 0.0, %v1084
      %v1086 = vpop.f32.mrf.mxu0
      %1087 = vmatprep.mubr.f32.mxu0 0.0
      %1088 = vmatmul.mubr.f32.gmra.mxu0 %v920
      %v1089 = vpop.f32.mrf.mxu0
      %v1090 = vadd.f32 0.0, %v1089
      %v1091 = vpop.f32.mrf.mxu0
      %1092 = vdwg.mxu0
      %v1093 = vadd.f32 %v885, %v1005
      %v1094 = vadd.f32 %v886, %v1010
      %v1095 = vadd.f32 %v887, %v1015
      %v1096 = vadd.f32 %v888, %v1020
      %v1097 = vadd.f32 %v889, %v1025
      %v1098 = vadd.f32 %v890, %v1030
      %v1099 = vadd.f32 %v891, %v1035
      %v1100 = vadd.f32 %v892, %v1040
      %v1101 = vadd.f32 %v893, %v1045
      %v1102 = vadd.f32 %v894, %v1050
      %v1103 = vadd.f32 %v895, %v1055
      %v1104 = vadd.f32 %v896, %v1060
      %v1105 = vadd.f32 %v897, %v1065
      %v1106 = vadd.f32 %v898, %v1070
      %v1107 = vadd.f32 %v899, %v1075
      %v1108 = vadd.f32 %v900, %v1080
      %v1109 = vadd.f32 %v901, %v1085
      %v1110 = vadd.f32 %v902, %v1090
      %v1111 = vld [vmem:[#allocation2 + $0x13] sm:$0xff]
      %v1112 = vld [vmem:[#allocation2 + $0x1b] sm:$0xff]
      %v1113 = vld [vmem:[#allocation2 + $0x23] sm:$0xff]
      %v1114 = vld [vmem:[#allocation2 + $0x2b] sm:$0xff]
      %v1115 = vld [vmem:[#allocation2 + $0x33] sm:$0xff]
      %v1116 = vld [vmem:[#allocation2 + $0x3b] sm:$0xff]
      %v1117 = vld [vmem:[#allocation2 + $0x43] sm:$0xff]
      %v1118 = vld [vmem:[#allocation2 + $0x4b] sm:$0xff]
      %v1119 = vld [vmem:[#allocation2 + $0x53] sm:$0xff]
      %v1120 = vld [vmem:[#allocation2 + $0x5b] sm:$0xff]
      %v1121 = vld [vmem:[#allocation2 + $0x63] sm:$0xff]
      %v1122 = vld [vmem:[#allocation2 + $0x6b] sm:$0xff]
      %v1123 = vld [vmem:[#allocation2 + $0x73] sm:$0xff]
      %v1124 = vld [vmem:[#allocation2 + $0x7b] sm:$0xff]
      %v1125 = vld [vmem:[#allocation2 + $0x83] sm:$0xff]
      %v1126 = vld [vmem:[#allocation2 + $0x8b] sm:$0xff]
      %v1127 = vld [vmem:[#allocation2 + $0x93] sm:$0xff]
      %v1128 = vld [vmem:[#allocation2 + $0x9b] sm:$0xff]
      %s1129 = scalar_lea.vmem %s1, 512
      %v1130 = vld [vmem:[%s1129] sm:$0xff]
      %v1131 = vld [vmem:[%s1129 + $0x8] sm:$0xff]
      %v1132 = vld [vmem:[%s1129 + $0x10] sm:$0xff]
      %v1133 = vld [vmem:[%s1129 + $0x18] sm:$0xff]
      %v1134 = vld [vmem:[%s1129 + $0x20] sm:$0xff]
      %v1135 = vld [vmem:[%s1129 + $0x28] sm:$0xff]
      %v1136 = vld [vmem:[%s1129 + $0x30] sm:$0xff]
      %v1137 = vld [vmem:[%s1129 + $0x38] sm:$0xff]
      %v1138 = vld [vmem:[%s1129 + $0x40] sm:$0xff]
      %v1139 = vld [vmem:[%s1129 + $0x48] sm:$0xff]
      %v1140 = vld [vmem:[%s1129 + $0x50] sm:$0xff]
      %v1141 = vld [vmem:[%s1129 + $0x58] sm:$0xff]
      %v1142 = vld [vmem:[%s1129 + $0x60] sm:$0xff]
      %v1143 = vld [vmem:[%s1129 + $0x68] sm:$0xff]
      %v1144 = vld [vmem:[%s1129 + $0x70] sm:$0xff]
      %v1145 = vld [vmem:[%s1129 + $0x78] sm:$0xff]
      %1146 = vmatprep.subr.mxu0 0.0
      %1147 = vmatpush1.msra.mxu0 %v1145
      %1148 = vmatprep.subr.mxu0 0.0
      %1149 = vmatpush1.msra.mxu0 %v1144
      %1150 = vmatprep.subr.mxu0 0.0
      %1151 = vmatpush1.msra.mxu0 %v1143
      %1152 = vmatprep.subr.mxu0 0.0
      %1153 = vmatpush1.msra.mxu0 %v1142
      %1154 = vmatprep.subr.mxu0 0.0
      %1155 = vmatpush1.msra.mxu0 %v1141
      %1156 = vmatprep.subr.mxu0 0.0
      %1157 = vmatpush1.msra.mxu0 %v1140
      %1158 = vmatprep.subr.mxu0 0.0
      %1159 = vmatpush1.msra.mxu0 %v1139
      %1160 = vmatprep.subr.mxu0 0.0
      %1161 = vmatpush1.msra.mxu0 %v1138
      %1162 = vmatprep.subr.mxu0 0.0
      %1163 = vmatpush1.msra.mxu0 %v1137
      %1164 = vmatprep.subr.mxu0 0.0
      %1165 = vmatpush1.msra.mxu0 %v1136
      %1166 = vmatprep.subr.mxu0 0.0
      %1167 = vmatpush1.msra.mxu0 %v1135
      %1168 = vmatprep.subr.mxu0 0.0
      %1169 = vmatpush1.msra.mxu0 %v1134
      %1170 = vmatprep.subr.mxu0 0.0
      %1171 = vmatpush1.msra.mxu0 %v1133
      %1172 = vmatprep.subr.mxu0 0.0
      %1173 = vmatpush1.msra.mxu0 %v1132
      %1174 = vmatprep.subr.mxu0 0.0
      %1175 = vmatpush1.msra.mxu0 %v1131
      %1176 = vmatprep.subr.mxu0 0.0
      %1177 = vmatpush1.msra.mxu0 %v1130
      %1178 = vmatprep.subr.mxu0 0.0
      %1179 = vmatpush2.msra.mxu0 0.0
      %1180 = vmatprep.subr.mxu0 0.0
      %1181 = vmatpush2.msra.mxu0 0.0
      %1182 = vmatprep.subr.mxu0 0.0
      %1183 = vmatpush2.msra.mxu0 0.0
      %1184 = vmatprep.subr.mxu0 0.0
      %1185 = vmatpush2.msra.mxu0 0.0
      %1186 = vmatprep.subr.mxu0 0.0
      %1187 = vmatpush2.msra.mxu0 0.0
      %1188 = vmatprep.subr.mxu0 0.0
      %1189 = vmatpush2.msra.mxu0 0.0
      %1190 = vmatprep.subr.mxu0 0.0
      %1191 = vmatpush2.msra.mxu0 0.0
      %1192 = vmatprep.subr.mxu0 0.0
      %1193 = vmatpush2.msra.mxu0 0.0
      %1194 = vmatprep.subr.mxu0 0.0
      %1195 = vmatpush2.msra.mxu0 0.0
      %1196 = vmatprep.subr.mxu0 0.0
      %1197 = vmatpush2.msra.mxu0 0.0
      %1198 = vmatprep.subr.mxu0 0.0
      %1199 = vmatpush2.msra.mxu0 0.0
      %1200 = vmatprep.subr.mxu0 0.0
      %1201 = vmatpush2.msra.mxu0 0.0
      %1202 = vmatprep.subr.mxu0 0.0
      %1203 = vmatpush2.msra.mxu0 0.0
      %1204 = vmatprep.subr.mxu0 0.0
      %1205 = vmatpush2.msra.mxu0 0.0
      %1206 = vmatprep.subr.mxu0 0.0
      %1207 = vmatpush2.msra.mxu0 0.0
      %1208 = vmatprep.subr.mxu0 0.0
      %1209 = vmatpush2.msra.mxu0 0.0
      %1210 = vmatprep.mubr.f32.mxu0 0.0
      %1211 = vmatmul.mubr.f32.gmra.mxu0 %v1111
      %v1212 = vpop.f32.mrf.mxu0
      %v1213 = vadd.f32 0.0, %v1212
      %v1214 = vpop.f32.mrf.mxu0
      %1215 = vmatprep.mubr.f32.mxu0 0.0
      %1216 = vmatmul.mubr.f32.gmra.mxu0 %v1112
      %v1217 = vpop.f32.mrf.mxu0
      %v1218 = vadd.f32 0.0, %v1217
      %v1219 = vpop.f32.mrf.mxu0
      %1220 = vmatprep.mubr.f32.mxu0 0.0
      %1221 = vmatmul.mubr.f32.gmra.mxu0 %v1113
      %v1222 = vpop.f32.mrf.mxu0
      %v1223 = vadd.f32 0.0, %v1222
      %v1224 = vpop.f32.mrf.mxu0
      %1225 = vmatprep.mubr.f32.mxu0 0.0
      %1226 = vmatmul.mubr.f32.gmra.mxu0 %v1114
      %v1227 = vpop.f32.mrf.mxu0
      %v1228 = vadd.f32 0.0, %v1227
      %v1229 = vpop.f32.mrf.mxu0
      %1230 = vmatprep.mubr.f32.mxu0 0.0
      %1231 = vmatmul.mubr.f32.gmra.mxu0 %v1115
      %v1232 = vpop.f32.mrf.mxu0
      %v1233 = vadd.f32 0.0, %v1232
      %v1234 = vpop.f32.mrf.mxu0
      %1235 = vmatprep.mubr.f32.mxu0 0.0
      %1236 = vmatmul.mubr.f32.gmra.mxu0 %v1116
      %v1237 = vpop.f32.mrf.mxu0
      %v1238 = vadd.f32 0.0, %v1237
      %v1239 = vpop.f32.mrf.mxu0
      %1240 = vmatprep.mubr.f32.mxu0 0.0
      %1241 = vmatmul.mubr.f32.gmra.mxu0 %v1117
      %v1242 = vpop.f32.mrf.mxu0
      %v1243 = vadd.f32 0.0, %v1242
      %v1244 = vpop.f32.mrf.mxu0
      %1245 = vmatprep.mubr.f32.mxu0 0.0
      %1246 = vmatmul.mubr.f32.gmra.mxu0 %v1118
      %v1247 = vpop.f32.mrf.mxu0
      %v1248 = vadd.f32 0.0, %v1247
      %v1249 = vpop.f32.mrf.mxu0
      %1250 = vmatprep.mubr.f32.mxu0 0.0
      %1251 = vmatmul.mubr.f32.gmra.mxu0 %v1119
      %v1252 = vpop.f32.mrf.mxu0
      %v1253 = vadd.f32 0.0, %v1252
      %v1254 = vpop.f32.mrf.mxu0
      %1255 = vmatprep.mubr.f32.mxu0 0.0
      %1256 = vmatmul.mubr.f32.gmra.mxu0 %v1120
      %v1257 = vpop.f32.mrf.mxu0
      %v1258 = vadd.f32 0.0, %v1257
      %v1259 = vpop.f32.mrf.mxu0
      %1260 = vmatprep.mubr.f32.mxu0 0.0
      %1261 = vmatmul.mubr.f32.gmra.mxu0 %v1121
      %v1262 = vpop.f32.mrf.mxu0
      %v1263 = vadd.f32 0.0, %v1262
      %v1264 = vpop.f32.mrf.mxu0
      %1265 = vmatprep.mubr.f32.mxu0 0.0
      %1266 = vmatmul.mubr.f32.gmra.mxu0 %v1122
      %v1267 = vpop.f32.mrf.mxu0
      %v1268 = vadd.f32 0.0, %v1267
      %v1269 = vpop.f32.mrf.mxu0
      %1270 = vmatprep.mubr.f32.mxu0 0.0
      %1271 = vmatmul.mubr.f32.gmra.mxu0 %v1123
      %v1272 = vpop.f32.mrf.mxu0
      %v1273 = vadd.f32 0.0, %v1272
      %v1274 = vpop.f32.mrf.mxu0
      %1275 = vmatprep.mubr.f32.mxu0 0.0
      %1276 = vmatmul.mubr.f32.gmra.mxu0 %v1124
      %v1277 = vpop.f32.mrf.mxu0
      %v1278 = vadd.f32 0.0, %v1277
      %v1279 = vpop.f32.mrf.mxu0
      %1280 = vmatprep.mubr.f32.mxu0 0.0
      %1281 = vmatmul.mubr.f32.gmra.mxu0 %v1125
      %v1282 = vpop.f32.mrf.mxu0
      %v1283 = vadd.f32 0.0, %v1282
      %v1284 = vpop.f32.mrf.mxu0
      %1285 = vmatprep.mubr.f32.mxu0 0.0
      %1286 = vmatmul.mubr.f32.gmra.mxu0 %v1126
      %v1287 = vpop.f32.mrf.mxu0
      %v1288 = vadd.f32 0.0, %v1287
      %v1289 = vpop.f32.mrf.mxu0
      %1290 = vmatprep.mubr.f32.mxu0 0.0
      %1291 = vmatmul.mubr.f32.gmra.mxu0 %v1127
      %v1292 = vpop.f32.mrf.mxu0
      %v1293 = vadd.f32 0.0, %v1292
      %v1294 = vpop.f32.mrf.mxu0
      %1295 = vmatprep.mubr.f32.mxu0 0.0
      %1296 = vmatmul.mubr.f32.gmra.mxu0 %v1128
      %v1297 = vpop.f32.mrf.mxu0
      %v1298 = vadd.f32 0.0, %v1297
      %v1299 = vpop.f32.mrf.mxu0
      %1300 = vdwg.mxu0
      %v1301 = vadd.f32 %v1093, %v1213
      %v1302 = vadd.f32 %v1094, %v1218
      %v1303 = vadd.f32 %v1095, %v1223
      %v1304 = vadd.f32 %v1096, %v1228
      %v1305 = vadd.f32 %v1097, %v1233
      %v1306 = vadd.f32 %v1098, %v1238
      %v1307 = vadd.f32 %v1099, %v1243
      %v1308 = vadd.f32 %v1100, %v1248
      %v1309 = vadd.f32 %v1101, %v1253
      %v1310 = vadd.f32 %v1102, %v1258
      %v1311 = vadd.f32 %v1103, %v1263
      %v1312 = vadd.f32 %v1104, %v1268
      %v1313 = vadd.f32 %v1105, %v1273
      %v1314 = vadd.f32 %v1106, %v1278
      %v1315 = vadd.f32 %v1107, %v1283
      %v1316 = vadd.f32 %v1108, %v1288
      %v1317 = vadd.f32 %v1109, %v1293
      %v1318 = vadd.f32 %v1110, %v1298
      %v1319 = vld [vmem:[#allocation2 + $0x14] sm:$0xff]
      %v1320 = vld [vmem:[#allocation2 + $0x1c] sm:$0xff]
      %v1321 = vld [vmem:[#allocation2 + $0x24] sm:$0xff]
      %v1322 = vld [vmem:[#allocation2 + $0x2c] sm:$0xff]
      %v1323 = vld [vmem:[#allocation2 + $0x34] sm:$0xff]
      %v1324 = vld [vmem:[#allocation2 + $0x3c] sm:$0xff]
      %v1325 = vld [vmem:[#allocation2 + $0x44] sm:$0xff]
      %v1326 = vld [vmem:[#allocation2 + $0x4c] sm:$0xff]
      %v1327 = vld [vmem:[#allocation2 + $0x54] sm:$0xff]
      %v1328 = vld [vmem:[#allocation2 + $0x5c] sm:$0xff]
      %v1329 = vld [vmem:[#allocation2 + $0x64] sm:$0xff]
      %v1330 = vld [vmem:[#allocation2 + $0x6c] sm:$0xff]
      %v1331 = vld [vmem:[#allocation2 + $0x74] sm:$0xff]
      %v1332 = vld [vmem:[#allocation2 + $0x7c] sm:$0xff]
      %v1333 = vld [vmem:[#allocation2 + $0x84] sm:$0xff]
      %v1334 = vld [vmem:[#allocation2 + $0x8c] sm:$0xff]
      %v1335 = vld [vmem:[#allocation2 + $0x94] sm:$0xff]
      %v1336 = vld [vmem:[#allocation2 + $0x9c] sm:$0xff]
      %s1337 = scalar_lea.vmem %s1, 640
      %v1338 = vld [vmem:[%s1337] sm:$0xff]
      %v1339 = vld [vmem:[%s1337 + $0x8] sm:$0xff]
      %v1340 = vld [vmem:[%s1337 + $0x10] sm:$0xff]
      %v1341 = vld [vmem:[%s1337 + $0x18] sm:$0xff]
      %v1342 = vld [vmem:[%s1337 + $0x20] sm:$0xff]
      %v1343 = vld [vmem:[%s1337 + $0x28] sm:$0xff]
      %v1344 = vld [vmem:[%s1337 + $0x30] sm:$0xff]
      %v1345 = vld [vmem:[%s1337 + $0x38] sm:$0xff]
      %v1346 = vld [vmem:[%s1337 + $0x40] sm:$0xff]
      %v1347 = vld [vmem:[%s1337 + $0x48] sm:$0xff]
      %v1348 = vld [vmem:[%s1337 + $0x50] sm:$0xff]
      %v1349 = vld [vmem:[%s1337 + $0x58] sm:$0xff]
      %v1350 = vld [vmem:[%s1337 + $0x60] sm:$0xff]
      %v1351 = vld [vmem:[%s1337 + $0x68] sm:$0xff]
      %v1352 = vld [vmem:[%s1337 + $0x70] sm:$0xff]
      %v1353 = vld [vmem:[%s1337 + $0x78] sm:$0xff]
      %1354 = vmatprep.subr.mxu0 0.0
      %1355 = vmatpush1.msra.mxu0 %v1353
      %1356 = vmatprep.subr.mxu0 0.0
      %1357 = vmatpush1.msra.mxu0 %v1352
      %1358 = vmatprep.subr.mxu0 0.0
      %1359 = vmatpush1.msra.mxu0 %v1351
      %1360 = vmatprep.subr.mxu0 0.0
      %1361 = vmatpush1.msra.mxu0 %v1350
      %1362 = vmatprep.subr.mxu0 0.0
      %1363 = vmatpush1.msra.mxu0 %v1349
      %1364 = vmatprep.subr.mxu0 0.0
      %1365 = vmatpush1.msra.mxu0 %v1348
      %1366 = vmatprep.subr.mxu0 0.0
      %1367 = vmatpush1.msra.mxu0 %v1347
      %1368 = vmatprep.subr.mxu0 0.0
      %1369 = vmatpush1.msra.mxu0 %v1346
      %1370 = vmatprep.subr.mxu0 0.0
      %1371 = vmatpush1.msra.mxu0 %v1345
      %1372 = vmatprep.subr.mxu0 0.0
      %1373 = vmatpush1.msra.mxu0 %v1344
      %1374 = vmatprep.subr.mxu0 0.0
      %1375 = vmatpush1.msra.mxu0 %v1343
      %1376 = vmatprep.subr.mxu0 0.0
      %1377 = vmatpush1.msra.mxu0 %v1342
      %1378 = vmatprep.subr.mxu0 0.0
      %1379 = vmatpush1.msra.mxu0 %v1341
      %1380 = vmatprep.subr.mxu0 0.0
      %1381 = vmatpush1.msra.mxu0 %v1340
      %1382 = vmatprep.subr.mxu0 0.0
      %1383 = vmatpush1.msra.mxu0 %v1339
      %1384 = vmatprep.subr.mxu0 0.0
      %1385 = vmatpush1.msra.mxu0 %v1338
      %1386 = vmatprep.subr.mxu0 0.0
      %1387 = vmatpush2.msra.mxu0 0.0
      %1388 = vmatprep.subr.mxu0 0.0
      %1389 = vmatpush2.msra.mxu0 0.0
      %1390 = vmatprep.subr.mxu0 0.0
      %1391 = vmatpush2.msra.mxu0 0.0
      %1392 = vmatprep.subr.mxu0 0.0
      %1393 = vmatpush2.msra.mxu0 0.0
      %1394 = vmatprep.subr.mxu0 0.0
      %1395 = vmatpush2.msra.mxu0 0.0
      %1396 = vmatprep.subr.mxu0 0.0
      %1397 = vmatpush2.msra.mxu0 0.0
      %1398 = vmatprep.subr.mxu0 0.0
      %1399 = vmatpush2.msra.mxu0 0.0
      %1400 = vmatprep.subr.mxu0 0.0
      %1401 = vmatpush2.msra.mxu0 0.0
      %1402 = vmatprep.subr.mxu0 0.0
      %1403 = vmatpush2.msra.mxu0 0.0
      %1404 = vmatprep.subr.mxu0 0.0
      %1405 = vmatpush2.msra.mxu0 0.0
      %1406 = vmatprep.subr.mxu0 0.0
      %1407 = vmatpush2.msra.mxu0 0.0
      %1408 = vmatprep.subr.mxu0 0.0
      %1409 = vmatpush2.msra.mxu0 0.0
      %1410 = vmatprep.subr.mxu0 0.0
      %1411 = vmatpush2.msra.mxu0 0.0
      %1412 = vmatprep.subr.mxu0 0.0
      %1413 = vmatpush2.msra.mxu0 0.0
      %1414 = vmatprep.subr.mxu0 0.0
      %1415 = vmatpush2.msra.mxu0 0.0
      %1416 = vmatprep.subr.mxu0 0.0
      %1417 = vmatpush2.msra.mxu0 0.0
      %1418 = vmatprep.mubr.f32.mxu0 0.0
      %1419 = vmatmul.mubr.f32.gmra.mxu0 %v1319
      %v1420 = vpop.f32.mrf.mxu0
      %v1421 = vadd.f32 0.0, %v1420
      %v1422 = vpop.f32.mrf.mxu0
      %1423 = vmatprep.mubr.f32.mxu0 0.0
      %1424 = vmatmul.mubr.f32.gmra.mxu0 %v1320
      %v1425 = vpop.f32.mrf.mxu0
      %v1426 = vadd.f32 0.0, %v1425
      %v1427 = vpop.f32.mrf.mxu0
      %1428 = vmatprep.mubr.f32.mxu0 0.0
      %1429 = vmatmul.mubr.f32.gmra.mxu0 %v1321
      %v1430 = vpop.f32.mrf.mxu0
      %v1431 = vadd.f32 0.0, %v1430
      %v1432 = vpop.f32.mrf.mxu0
      %1433 = vmatprep.mubr.f32.mxu0 0.0
      %1434 = vmatmul.mubr.f32.gmra.mxu0 %v1322
      %v1435 = vpop.f32.mrf.mxu0
      %v1436 = vadd.f32 0.0, %v1435
      %v1437 = vpop.f32.mrf.mxu0
      %1438 = vmatprep.mubr.f32.mxu0 0.0
      %1439 = vmatmul.mubr.f32.gmra.mxu0 %v1323
      %v1440 = vpop.f32.mrf.mxu0
      %v1441 = vadd.f32 0.0, %v1440
      %v1442 = vpop.f32.mrf.mxu0
      %1443 = vmatprep.mubr.f32.mxu0 0.0
      %1444 = vmatmul.mubr.f32.gmra.mxu0 %v1324
      %v1445 = vpop.f32.mrf.mxu0
      %v1446 = vadd.f32 0.0, %v1445
      %v1447 = vpop.f32.mrf.mxu0
      %1448 = vmatprep.mubr.f32.mxu0 0.0
      %1449 = vmatmul.mubr.f32.gmra.mxu0 %v1325
      %v1450 = vpop.f32.mrf.mxu0
      %v1451 = vadd.f32 0.0, %v1450
      %v1452 = vpop.f32.mrf.mxu0
      %1453 = vmatprep.mubr.f32.mxu0 0.0
      %1454 = vmatmul.mubr.f32.gmra.mxu0 %v1326
      %v1455 = vpop.f32.mrf.mxu0
      %v1456 = vadd.f32 0.0, %v1455
      %v1457 = vpop.f32.mrf.mxu0
      %1458 = vmatprep.mubr.f32.mxu0 0.0
      %1459 = vmatmul.mubr.f32.gmra.mxu0 %v1327
      %v1460 = vpop.f32.mrf.mxu0
      %v1461 = vadd.f32 0.0, %v1460
      %v1462 = vpop.f32.mrf.mxu0
      %1463 = vmatprep.mubr.f32.mxu0 0.0
      %1464 = vmatmul.mubr.f32.gmra.mxu0 %v1328
      %v1465 = vpop.f32.mrf.mxu0
      %v1466 = vadd.f32 0.0, %v1465
      %v1467 = vpop.f32.mrf.mxu0
      %1468 = vmatprep.mubr.f32.mxu0 0.0
      %1469 = vmatmul.mubr.f32.gmra.mxu0 %v1329
      %v1470 = vpop.f32.mrf.mxu0
      %v1471 = vadd.f32 0.0, %v1470
      %v1472 = vpop.f32.mrf.mxu0
      %1473 = vmatprep.mubr.f32.mxu0 0.0
      %1474 = vmatmul.mubr.f32.gmra.mxu0 %v1330
      %v1475 = vpop.f32.mrf.mxu0
      %v1476 = vadd.f32 0.0, %v1475
      %v1477 = vpop.f32.mrf.mxu0
      %1478 = vmatprep.mubr.f32.mxu0 0.0
      %1479 = vmatmul.mubr.f32.gmra.mxu0 %v1331
      %v1480 = vpop.f32.mrf.mxu0
      %v1481 = vadd.f32 0.0, %v1480
      %v1482 = vpop.f32.mrf.mxu0
      %1483 = vmatprep.mubr.f32.mxu0 0.0
      %1484 = vmatmul.mubr.f32.gmra.mxu0 %v1332
      %v1485 = vpop.f32.mrf.mxu0
      %v1486 = vadd.f32 0.0, %v1485
      %v1487 = vpop.f32.mrf.mxu0
      %1488 = vmatprep.mubr.f32.mxu0 0.0
      %1489 = vmatmul.mubr.f32.gmra.mxu0 %v1333
      %v1490 = vpop.f32.mrf.mxu0
      %v1491 = vadd.f32 0.0, %v1490
      %v1492 = vpop.f32.mrf.mxu0
      %1493 = vmatprep.mubr.f32.mxu0 0.0
      %1494 = vmatmul.mubr.f32.gmra.mxu0 %v1334
      %v1495 = vpop.f32.mrf.mxu0
      %v1496 = vadd.f32 0.0, %v1495
      %v1497 = vpop.f32.mrf.mxu0
      %1498 = vmatprep.mubr.f32.mxu0 0.0
      %1499 = vmatmul.mubr.f32.gmra.mxu0 %v1335
      %v1500 = vpop.f32.mrf.mxu0
      %v1501 = vadd.f32 0.0, %v1500
      %v1502 = vpop.f32.mrf.mxu0
      %1503 = vmatprep.mubr.f32.mxu0 0.0
      %1504 = vmatmul.mubr.f32.gmra.mxu0 %v1336
      %v1505 = vpop.f32.mrf.mxu0
      %v1506 = vadd.f32 0.0, %v1505
      %v1507 = vpop.f32.mrf.mxu0
      %1508 = vdwg.mxu0
      %v1509 = vadd.f32 %v1301, %v1421
      %v1510 = vadd.f32 %v1302, %v1426
      %v1511 = vadd.f32 %v1303, %v1431
      %v1512 = vadd.f32 %v1304, %v1436
      %v1513 = vadd.f32 %v1305, %v1441
      %v1514 = vadd.f32 %v1306, %v1446
      %v1515 = vadd.f32 %v1307, %v1451
      %v1516 = vadd.f32 %v1308, %v1456
      %v1517 = vadd.f32 %v1309, %v1461
      %v1518 = vadd.f32 %v1310, %v1466
      %v1519 = vadd.f32 %v1311, %v1471
      %v1520 = vadd.f32 %v1312, %v1476
      %v1521 = vadd.f32 %v1313, %v1481
      %v1522 = vadd.f32 %v1314, %v1486
      %v1523 = vadd.f32 %v1315, %v1491
      %v1524 = vadd.f32 %v1316, %v1496
      %v1525 = vadd.f32 %v1317, %v1501
      %v1526 = vadd.f32 %v1318, %v1506
      %v1527 = vld [vmem:[#allocation2 + $0x24] sm:$0xff]
      %v1528 = vld [vmem:[#allocation2 + $0x2c] sm:$0xff]
      %v1529 = vld [vmem:[#allocation2 + $0x34] sm:$0xff]
      %v1530 = vld [vmem:[#allocation2 + $0x3c] sm:$0xff]
      %v1531 = vld [vmem:[#allocation2 + $0x44] sm:$0xff]
      %v1532 = vld [vmem:[#allocation2 + $0x4c] sm:$0xff]
      %v1533 = vld [vmem:[#allocation2 + $0x54] sm:$0xff]
      %v1534 = vld [vmem:[#allocation2 + $0x5c] sm:$0xff]
      %v1535 = vld [vmem:[#allocation2 + $0x64] sm:$0xff]
      %v1536 = vld [vmem:[#allocation2 + $0x6c] sm:$0xff]
      %v1537 = vld [vmem:[#allocation2 + $0x74] sm:$0xff]
      %v1538 = vld [vmem:[#allocation2 + $0x7c] sm:$0xff]
      %v1539 = vld [vmem:[#allocation2 + $0x84] sm:$0xff]
      %v1540 = vld [vmem:[#allocation2 + $0x8c] sm:$0xff]
      %v1541 = vld [vmem:[#allocation2 + $0x94] sm:$0xff]
      %v1542 = vld [vmem:[#allocation2 + $0x9c] sm:$0xff]
      %v1543 = vld [vmem:[#allocation2 + $0xa4] sm:$0xff]
      %v1544 = vld [vmem:[#allocation2 + $0xac] sm:$0xff]
      %s1545 = scalar_lea.vmem %s1, 768
      %v1546 = vld [vmem:[%s1545] sm:$0xff]
      %v1547 = vld [vmem:[%s1545 + $0x8] sm:$0xff]
      %v1548 = vld [vmem:[%s1545 + $0x10] sm:$0xff]
      %v1549 = vld [vmem:[%s1545 + $0x18] sm:$0xff]
      %v1550 = vld [vmem:[%s1545 + $0x20] sm:$0xff]
      %v1551 = vld [vmem:[%s1545 + $0x28] sm:$0xff]
      %v1552 = vld [vmem:[%s1545 + $0x30] sm:$0xff]
      %v1553 = vld [vmem:[%s1545 + $0x38] sm:$0xff]
      %v1554 = vld [vmem:[%s1545 + $0x40] sm:$0xff]
      %v1555 = vld [vmem:[%s1545 + $0x48] sm:$0xff]
      %v1556 = vld [vmem:[%s1545 + $0x50] sm:$0xff]
      %v1557 = vld [vmem:[%s1545 + $0x58] sm:$0xff]
      %v1558 = vld [vmem:[%s1545 + $0x60] sm:$0xff]
      %v1559 = vld [vmem:[%s1545 + $0x68] sm:$0xff]
      %v1560 = vld [vmem:[%s1545 + $0x70] sm:$0xff]
      %v1561 = vld [vmem:[%s1545 + $0x78] sm:$0xff]
      %1562 = vmatprep.subr.mxu0 0.0
      %1563 = vmatpush1.msra.mxu0 %v1561
      %1564 = vmatprep.subr.mxu0 0.0
      %1565 = vmatpush1.msra.mxu0 %v1560
      %1566 = vmatprep.subr.mxu0 0.0
      %1567 = vmatpush1.msra.mxu0 %v1559
      %1568 = vmatprep.subr.mxu0 0.0
      %1569 = vmatpush1.msra.mxu0 %v1558
      %1570 = vmatprep.subr.mxu0 0.0
      %1571 = vmatpush1.msra.mxu0 %v1557
      %1572 = vmatprep.subr.mxu0 0.0
      %1573 = vmatpush1.msra.mxu0 %v1556
      %1574 = vmatprep.subr.mxu0 0.0
      %1575 = vmatpush1.msra.mxu0 %v1555
      %1576 = vmatprep.subr.mxu0 0.0
      %1577 = vmatpush1.msra.mxu0 %v1554
      %1578 = vmatprep.subr.mxu0 0.0
      %1579 = vmatpush1.msra.mxu0 %v1553
      %1580 = vmatprep.subr.mxu0 0.0
      %1581 = vmatpush1.msra.mxu0 %v1552
      %1582 = vmatprep.subr.mxu0 0.0
      %1583 = vmatpush1.msra.mxu0 %v1551
      %1584 = vmatprep.subr.mxu0 0.0
      %1585 = vmatpush1.msra.mxu0 %v1550
      %1586 = vmatprep.subr.mxu0 0.0
      %1587 = vmatpush1.msra.mxu0 %v1549
      %1588 = vmatprep.subr.mxu0 0.0
      %1589 = vmatpush1.msra.mxu0 %v1548
      %1590 = vmatprep.subr.mxu0 0.0
      %1591 = vmatpush1.msra.mxu0 %v1547
      %1592 = vmatprep.subr.mxu0 0.0
      %1593 = vmatpush1.msra.mxu0 %v1546
      %1594 = vmatprep.subr.mxu0 0.0
      %1595 = vmatpush2.msra.mxu0 0.0
      %1596 = vmatprep.subr.mxu0 0.0
      %1597 = vmatpush2.msra.mxu0 0.0
      %1598 = vmatprep.subr.mxu0 0.0
      %1599 = vmatpush2.msra.mxu0 0.0
      %1600 = vmatprep.subr.mxu0 0.0
      %1601 = vmatpush2.msra.mxu0 0.0
      %1602 = vmatprep.subr.mxu0 0.0
      %1603 = vmatpush2.msra.mxu0 0.0
      %1604 = vmatprep.subr.mxu0 0.0
      %1605 = vmatpush2.msra.mxu0 0.0
      %1606 = vmatprep.subr.mxu0 0.0
      %1607 = vmatpush2.msra.mxu0 0.0
      %1608 = vmatprep.subr.mxu0 0.0
      %1609 = vmatpush2.msra.mxu0 0.0
      %1610 = vmatprep.subr.mxu0 0.0
      %1611 = vmatpush2.msra.mxu0 0.0
      %1612 = vmatprep.subr.mxu0 0.0
      %1613 = vmatpush2.msra.mxu0 0.0
      %1614 = vmatprep.subr.mxu0 0.0
      %1615 = vmatpush2.msra.mxu0 0.0
      %1616 = vmatprep.subr.mxu0 0.0
      %1617 = vmatpush2.msra.mxu0 0.0
      %1618 = vmatprep.subr.mxu0 0.0
      %1619 = vmatpush2.msra.mxu0 0.0
      %1620 = vmatprep.subr.mxu0 0.0
      %1621 = vmatpush2.msra.mxu0 0.0
      %1622 = vmatprep.subr.mxu0 0.0
      %1623 = vmatpush2.msra.mxu0 0.0
      %1624 = vmatprep.subr.mxu0 0.0
      %1625 = vmatpush2.msra.mxu0 0.0
      %1626 = vmatprep.mubr.f32.mxu0 0.0
      %1627 = vmatmul.mubr.f32.gmra.mxu0 %v1527
      %v1628 = vpop.f32.mrf.mxu0
      %v1629 = vadd.f32 0.0, %v1628
      %v1630 = vpop.f32.mrf.mxu0
      %1631 = vmatprep.mubr.f32.mxu0 0.0
      %1632 = vmatmul.mubr.f32.gmra.mxu0 %v1528
      %v1633 = vpop.f32.mrf.mxu0
      %v1634 = vadd.f32 0.0, %v1633
      %v1635 = vpop.f32.mrf.mxu0
      %1636 = vmatprep.mubr.f32.mxu0 0.0
      %1637 = vmatmul.mubr.f32.gmra.mxu0 %v1529
      %v1638 = vpop.f32.mrf.mxu0
      %v1639 = vadd.f32 0.0, %v1638
      %v1640 = vpop.f32.mrf.mxu0
      %1641 = vmatprep.mubr.f32.mxu0 0.0
      %1642 = vmatmul.mubr.f32.gmra.mxu0 %v1530
      %v1643 = vpop.f32.mrf.mxu0
      %v1644 = vadd.f32 0.0, %v1643
      %v1645 = vpop.f32.mrf.mxu0
      %1646 = vmatprep.mubr.f32.mxu0 0.0
      %1647 = vmatmul.mubr.f32.gmra.mxu0 %v1531
      %v1648 = vpop.f32.mrf.mxu0
      %v1649 = vadd.f32 0.0, %v1648
      %v1650 = vpop.f32.mrf.mxu0
      %1651 = vmatprep.mubr.f32.mxu0 0.0
      %1652 = vmatmul.mubr.f32.gmra.mxu0 %v1532
      %v1653 = vpop.f32.mrf.mxu0
      %v1654 = vadd.f32 0.0, %v1653
      %v1655 = vpop.f32.mrf.mxu0
      %1656 = vmatprep.mubr.f32.mxu0 0.0
      %1657 = vmatmul.mubr.f32.gmra.mxu0 %v1533
      %v1658 = vpop.f32.mrf.mxu0
      %v1659 = vadd.f32 0.0, %v1658
      %v1660 = vpop.f32.mrf.mxu0
      %1661 = vmatprep.mubr.f32.mxu0 0.0
      %1662 = vmatmul.mubr.f32.gmra.mxu0 %v1534
      %v1663 = vpop.f32.mrf.mxu0
      %v1664 = vadd.f32 0.0, %v1663
      %v1665 = vpop.f32.mrf.mxu0
      %1666 = vmatprep.mubr.f32.mxu0 0.0
      %1667 = vmatmul.mubr.f32.gmra.mxu0 %v1535
      %v1668 = vpop.f32.mrf.mxu0
      %v1669 = vadd.f32 0.0, %v1668
      %v1670 = vpop.f32.mrf.mxu0
      %1671 = vmatprep.mubr.f32.mxu0 0.0
      %1672 = vmatmul.mubr.f32.gmra.mxu0 %v1536
      %v1673 = vpop.f32.mrf.mxu0
      %v1674 = vadd.f32 0.0, %v1673
      %v1675 = vpop.f32.mrf.mxu0
      %1676 = vmatprep.mubr.f32.mxu0 0.0
      %1677 = vmatmul.mubr.f32.gmra.mxu0 %v1537
      %v1678 = vpop.f32.mrf.mxu0
      %v1679 = vadd.f32 0.0, %v1678
      %v1680 = vpop.f32.mrf.mxu0
      %1681 = vmatprep.mubr.f32.mxu0 0.0
      %1682 = vmatmul.mubr.f32.gmra.mxu0 %v1538
      %v1683 = vpop.f32.mrf.mxu0
      %v1684 = vadd.f32 0.0, %v1683
      %v1685 = vpop.f32.mrf.mxu0
      %1686 = vmatprep.mubr.f32.mxu0 0.0
      %1687 = vmatmul.mubr.f32.gmra.mxu0 %v1539
      %v1688 = vpop.f32.mrf.mxu0
      %v1689 = vadd.f32 0.0, %v1688
      %v1690 = vpop.f32.mrf.mxu0
      %1691 = vmatprep.mubr.f32.mxu0 0.0
      %1692 = vmatmul.mubr.f32.gmra.mxu0 %v1540
      %v1693 = vpop.f32.mrf.mxu0
      %v1694 = vadd.f32 0.0, %v1693
      %v1695 = vpop.f32.mrf.mxu0
      %1696 = vmatprep.mubr.f32.mxu0 0.0
      %1697 = vmatmul.mubr.f32.gmra.mxu0 %v1541
      %v1698 = vpop.f32.mrf.mxu0
      %v1699 = vadd.f32 0.0, %v1698
      %v1700 = vpop.f32.mrf.mxu0
      %1701 = vmatprep.mubr.f32.mxu0 0.0
      %1702 = vmatmul.mubr.f32.gmra.mxu0 %v1542
      %v1703 = vpop.f32.mrf.mxu0
      %v1704 = vadd.f32 0.0, %v1703
      %v1705 = vpop.f32.mrf.mxu0
      %1706 = vmatprep.mubr.f32.mxu0 0.0
      %1707 = vmatmul.mubr.f32.gmra.mxu0 %v1543
      %v1708 = vpop.f32.mrf.mxu0
      %v1709 = vadd.f32 0.0, %v1708
      %v1710 = vpop.f32.mrf.mxu0
      %1711 = vmatprep.mubr.f32.mxu0 0.0
      %1712 = vmatmul.mubr.f32.gmra.mxu0 %v1544
      %v1713 = vpop.f32.mrf.mxu0
      %v1714 = vadd.f32 0.0, %v1713
      %v1715 = vpop.f32.mrf.mxu0
      %1716 = vdwg.mxu0
      %v1717 = vadd.f32 %v1509, %v1629
      %v1718 = vadd.f32 %v1510, %v1634
      %v1719 = vadd.f32 %v1511, %v1639
      %v1720 = vadd.f32 %v1512, %v1644
      %v1721 = vadd.f32 %v1513, %v1649
      %v1722 = vadd.f32 %v1514, %v1654
      %v1723 = vadd.f32 %v1515, %v1659
      %v1724 = vadd.f32 %v1516, %v1664
      %v1725 = vadd.f32 %v1517, %v1669
      %v1726 = vadd.f32 %v1518, %v1674
      %v1727 = vadd.f32 %v1519, %v1679
      %v1728 = vadd.f32 %v1520, %v1684
      %v1729 = vadd.f32 %v1521, %v1689
      %v1730 = vadd.f32 %v1522, %v1694
      %v1731 = vadd.f32 %v1523, %v1699
      %v1732 = vadd.f32 %v1524, %v1704
      %v1733 = vadd.f32 %v1525, %v1709
      %v1734 = vadd.f32 %v1526, %v1714
      %v1735 = vld [vmem:[#allocation2 + $0x25] sm:$0xff]
      %v1736 = vld [vmem:[#allocation2 + $0x2d] sm:$0xff]
      %v1737 = vld [vmem:[#allocation2 + $0x35] sm:$0xff]
      %v1738 = vld [vmem:[#allocation2 + $0x3d] sm:$0xff]
      %v1739 = vld [vmem:[#allocation2 + $0x45] sm:$0xff]
      %v1740 = vld [vmem:[#allocation2 + $0x4d] sm:$0xff]
      %v1741 = vld [vmem:[#allocation2 + $0x55] sm:$0xff]
      %v1742 = vld [vmem:[#allocation2 + $0x5d] sm:$0xff]
      %v1743 = vld [vmem:[#allocation2 + $0x65] sm:$0xff]
      %v1744 = vld [vmem:[#allocation2 + $0x6d] sm:$0xff]
      %v1745 = vld [vmem:[#allocation2 + $0x75] sm:$0xff]
      %v1746 = vld [vmem:[#allocation2 + $0x7d] sm:$0xff]
      %v1747 = vld [vmem:[#allocation2 + $0x85] sm:$0xff]
      %v1748 = vld [vmem:[#allocation2 + $0x8d] sm:$0xff]
      %v1749 = vld [vmem:[#allocation2 + $0x95] sm:$0xff]
      %v1750 = vld [vmem:[#allocation2 + $0x9d] sm:$0xff]
      %v1751 = vld [vmem:[#allocation2 + $0xa5] sm:$0xff]
      %v1752 = vld [vmem:[#allocation2 + $0xad] sm:$0xff]
      %s1753 = scalar_lea.vmem %s1, 896
      %v1754 = vld [vmem:[%s1753] sm:$0xff]
      %v1755 = vld [vmem:[%s1753 + $0x8] sm:$0xff]
      %v1756 = vld [vmem:[%s1753 + $0x10] sm:$0xff]
      %v1757 = vld [vmem:[%s1753 + $0x18] sm:$0xff]
      %v1758 = vld [vmem:[%s1753 + $0x20] sm:$0xff]
      %v1759 = vld [vmem:[%s1753 + $0x28] sm:$0xff]
      %v1760 = vld [vmem:[%s1753 + $0x30] sm:$0xff]
      %v1761 = vld [vmem:[%s1753 + $0x38] sm:$0xff]
      %v1762 = vld [vmem:[%s1753 + $0x40] sm:$0xff]
      %v1763 = vld [vmem:[%s1753 + $0x48] sm:$0xff]
      %v1764 = vld [vmem:[%s1753 + $0x50] sm:$0xff]
      %v1765 = vld [vmem:[%s1753 + $0x58] sm:$0xff]
      %v1766 = vld [vmem:[%s1753 + $0x60] sm:$0xff]
      %v1767 = vld [vmem:[%s1753 + $0x68] sm:$0xff]
      %v1768 = vld [vmem:[%s1753 + $0x70] sm:$0xff]
      %v1769 = vld [vmem:[%s1753 + $0x78] sm:$0xff]
      %1770 = vmatprep.subr.mxu0 0.0
      %1771 = vmatpush1.msra.mxu0 %v1769
      %1772 = vmatprep.subr.mxu0 0.0
      %1773 = vmatpush1.msra.mxu0 %v1768
      %1774 = vmatprep.subr.mxu0 0.0
      %1775 = vmatpush1.msra.mxu0 %v1767
      %1776 = vmatprep.subr.mxu0 0.0
      %1777 = vmatpush1.msra.mxu0 %v1766
      %1778 = vmatprep.subr.mxu0 0.0
      %1779 = vmatpush1.msra.mxu0 %v1765
      %1780 = vmatprep.subr.mxu0 0.0
      %1781 = vmatpush1.msra.mxu0 %v1764
      %1782 = vmatprep.subr.mxu0 0.0
      %1783 = vmatpush1.msra.mxu0 %v1763
      %1784 = vmatprep.subr.mxu0 0.0
      %1785 = vmatpush1.msra.mxu0 %v1762
      %1786 = vmatprep.subr.mxu0 0.0
      %1787 = vmatpush1.msra.mxu0 %v1761
      %1788 = vmatprep.subr.mxu0 0.0
      %1789 = vmatpush1.msra.mxu0 %v1760
      %1790 = vmatprep.subr.mxu0 0.0
      %1791 = vmatpush1.msra.mxu0 %v1759
      %1792 = vmatprep.subr.mxu0 0.0
      %1793 = vmatpush1.msra.mxu0 %v1758
      %1794 = vmatprep.subr.mxu0 0.0
      %1795 = vmatpush1.msra.mxu0 %v1757
      %1796 = vmatprep.subr.mxu0 0.0
      %1797 = vmatpush1.msra.mxu0 %v1756
      %1798 = vmatprep.subr.mxu0 0.0
      %1799 = vmatpush1.msra.mxu0 %v1755
      %1800 = vmatprep.subr.mxu0 0.0
      %1801 = vmatpush1.msra.mxu0 %v1754
      %1802 = vmatprep.subr.mxu0 0.0
      %1803 = vmatpush2.msra.mxu0 0.0
      %1804 = vmatprep.subr.mxu0 0.0
      %1805 = vmatpush2.msra.mxu0 0.0
      %1806 = vmatprep.subr.mxu0 0.0
      %1807 = vmatpush2.msra.mxu0 0.0
      %1808 = vmatprep.subr.mxu0 0.0
      %1809 = vmatpush2.msra.mxu0 0.0
      %1810 = vmatprep.subr.mxu0 0.0
      %1811 = vmatpush2.msra.mxu0 0.0
      %1812 = vmatprep.subr.mxu0 0.0
      %1813 = vmatpush2.msra.mxu0 0.0
      %1814 = vmatprep.subr.mxu0 0.0
      %1815 = vmatpush2.msra.mxu0 0.0
      %1816 = vmatprep.subr.mxu0 0.0
      %1817 = vmatpush2.msra.mxu0 0.0
      %1818 = vmatprep.subr.mxu0 0.0
      %1819 = vmatpush2.msra.mxu0 0.0
      %1820 = vmatprep.subr.mxu0 0.0
      %1821 = vmatpush2.msra.mxu0 0.0
      %1822 = vmatprep.subr.mxu0 0.0
      %1823 = vmatpush2.msra.mxu0 0.0
      %1824 = vmatprep.subr.mxu0 0.0
      %1825 = vmatpush2.msra.mxu0 0.0
      %1826 = vmatprep.subr.mxu0 0.0
      %1827 = vmatpush2.msra.mxu0 0.0
      %1828 = vmatprep.subr.mxu0 0.0
      %1829 = vmatpush2.msra.mxu0 0.0
      %1830 = vmatprep.subr.mxu0 0.0
      %1831 = vmatpush2.msra.mxu0 0.0
      %1832 = vmatprep.subr.mxu0 0.0
      %1833 = vmatpush2.msra.mxu0 0.0
      %1834 = vmatprep.mubr.f32.mxu0 0.0
      %1835 = vmatmul.mubr.f32.gmra.mxu0 %v1735
      %v1836 = vpop.f32.mrf.mxu0
      %v1837 = vadd.f32 0.0, %v1836
      %v1838 = vpop.f32.mrf.mxu0
      %1839 = vmatprep.mubr.f32.mxu0 0.0
      %1840 = vmatmul.mubr.f32.gmra.mxu0 %v1736
      %v1841 = vpop.f32.mrf.mxu0
      %v1842 = vadd.f32 0.0, %v1841
      %v1843 = vpop.f32.mrf.mxu0
      %1844 = vmatprep.mubr.f32.mxu0 0.0
      %1845 = vmatmul.mubr.f32.gmra.mxu0 %v1737
      %v1846 = vpop.f32.mrf.mxu0
      %v1847 = vadd.f32 0.0, %v1846
      %v1848 = vpop.f32.mrf.mxu0
      %1849 = vmatprep.mubr.f32.mxu0 0.0
      %1850 = vmatmul.mubr.f32.gmra.mxu0 %v1738
      %v1851 = vpop.f32.mrf.mxu0
      %v1852 = vadd.f32 0.0, %v1851
      %v1853 = vpop.f32.mrf.mxu0
      %1854 = vmatprep.mubr.f32.mxu0 0.0
      %1855 = vmatmul.mubr.f32.gmra.mxu0 %v1739
      %v1856 = vpop.f32.mrf.mxu0
      %v1857 = vadd.f32 0.0, %v1856
      %v1858 = vpop.f32.mrf.mxu0
      %1859 = vmatprep.mubr.f32.mxu0 0.0
      %1860 = vmatmul.mubr.f32.gmra.mxu0 %v1740
      %v1861 = vpop.f32.mrf.mxu0
      %v1862 = vadd.f32 0.0, %v1861
      %v1863 = vpop.f32.mrf.mxu0
      %1864 = vmatprep.mubr.f32.mxu0 0.0
      %1865 = vmatmul.mubr.f32.gmra.mxu0 %v1741
      %v1866 = vpop.f32.mrf.mxu0
      %v1867 = vadd.f32 0.0, %v1866
      %v1868 = vpop.f32.mrf.mxu0
      %1869 = vmatprep.mubr.f32.mxu0 0.0
      %1870 = vmatmul.mubr.f32.gmra.mxu0 %v1742
      %v1871 = vpop.f32.mrf.mxu0
      %v1872 = vadd.f32 0.0, %v1871
      %v1873 = vpop.f32.mrf.mxu0
      %1874 = vmatprep.mubr.f32.mxu0 0.0
      %1875 = vmatmul.mubr.f32.gmra.mxu0 %v1743
      %v1876 = vpop.f32.mrf.mxu0
      %v1877 = vadd.f32 0.0, %v1876
      %v1878 = vpop.f32.mrf.mxu0
      %1879 = vmatprep.mubr.f32.mxu0 0.0
      %1880 = vmatmul.mubr.f32.gmra.mxu0 %v1744
      %v1881 = vpop.f32.mrf.mxu0
      %v1882 = vadd.f32 0.0, %v1881
      %v1883 = vpop.f32.mrf.mxu0
      %1884 = vmatprep.mubr.f32.mxu0 0.0
      %1885 = vmatmul.mubr.f32.gmra.mxu0 %v1745
      %v1886 = vpop.f32.mrf.mxu0
      %v1887 = vadd.f32 0.0, %v1886
      %v1888 = vpop.f32.mrf.mxu0
      %1889 = vmatprep.mubr.f32.mxu0 0.0
      %1890 = vmatmul.mubr.f32.gmra.mxu0 %v1746
      %v1891 = vpop.f32.mrf.mxu0
      %v1892 = vadd.f32 0.0, %v1891
      %v1893 = vpop.f32.mrf.mxu0
      %1894 = vmatprep.mubr.f32.mxu0 0.0
      %1895 = vmatmul.mubr.f32.gmra.mxu0 %v1747
      %v1896 = vpop.f32.mrf.mxu0
      %v1897 = vadd.f32 0.0, %v1896
      %v1898 = vpop.f32.mrf.mxu0
      %1899 = vmatprep.mubr.f32.mxu0 0.0
      %1900 = vmatmul.mubr.f32.gmra.mxu0 %v1748
      %v1901 = vpop.f32.mrf.mxu0
      %v1902 = vadd.f32 0.0, %v1901
      %v1903 = vpop.f32.mrf.mxu0
      %1904 = vmatprep.mubr.f32.mxu0 0.0
      %1905 = vmatmul.mubr.f32.gmra.mxu0 %v1749
      %v1906 = vpop.f32.mrf.mxu0
      %v1907 = vadd.f32 0.0, %v1906
      %v1908 = vpop.f32.mrf.mxu0
      %1909 = vmatprep.mubr.f32.mxu0 0.0
      %1910 = vmatmul.mubr.f32.gmra.mxu0 %v1750
      %v1911 = vpop.f32.mrf.mxu0
      %v1912 = vadd.f32 0.0, %v1911
      %v1913 = vpop.f32.mrf.mxu0
      %1914 = vmatprep.mubr.f32.mxu0 0.0
      %1915 = vmatmul.mubr.f32.gmra.mxu0 %v1751
      %v1916 = vpop.f32.mrf.mxu0
      %v1917 = vadd.f32 0.0, %v1916
      %v1918 = vpop.f32.mrf.mxu0
      %1919 = vmatprep.mubr.f32.mxu0 0.0
      %1920 = vmatmul.mubr.f32.gmra.mxu0 %v1752
      %v1921 = vpop.f32.mrf.mxu0
      %v1922 = vadd.f32 0.0, %v1921
      %v1923 = vpop.f32.mrf.mxu0
      %1924 = vdwg.mxu0
      %v1925 = vadd.f32 %v1717, %v1837
      %v1926 = vadd.f32 %v1718, %v1842
      %v1927 = vadd.f32 %v1719, %v1847
      %v1928 = vadd.f32 %v1720, %v1852
      %v1929 = vadd.f32 %v1721, %v1857
      %v1930 = vadd.f32 %v1722, %v1862
      %v1931 = vadd.f32 %v1723, %v1867
      %v1932 = vadd.f32 %v1724, %v1872
      %v1933 = vadd.f32 %v1725, %v1877
      %v1934 = vadd.f32 %v1726, %v1882
      %v1935 = vadd.f32 %v1727, %v1887
      %v1936 = vadd.f32 %v1728, %v1892
      %v1937 = vadd.f32 %v1729, %v1897
      %v1938 = vadd.f32 %v1730, %v1902
      %v1939 = vadd.f32 %v1731, %v1907
      %v1940 = vadd.f32 %v1732, %v1912
      %v1941 = vadd.f32 %v1733, %v1917
      %v1942 = vadd.f32 %v1734, %v1922
      %v1943 = vld [vmem:[#allocation2 + $0x26] sm:$0xff]
      %v1944 = vld [vmem:[#allocation2 + $0x2e] sm:$0xff]
      %v1945 = vld [vmem:[#allocation2 + $0x36] sm:$0xff]
      %v1946 = vld [vmem:[#allocation2 + $0x3e] sm:$0xff]
      %v1947 = vld [vmem:[#allocation2 + $0x46] sm:$0xff]
      %v1948 = vld [vmem:[#allocation2 + $0x4e] sm:$0xff]
      %v1949 = vld [vmem:[#allocation2 + $0x56] sm:$0xff]
      %v1950 = vld [vmem:[#allocation2 + $0x5e] sm:$0xff]
      %v1951 = vld [vmem:[#allocation2 + $0x66] sm:$0xff]
      %v1952 = vld [vmem:[#allocation2 + $0x6e] sm:$0xff]
      %v1953 = vld [vmem:[#allocation2 + $0x76] sm:$0xff]
      %v1954 = vld [vmem:[#allocation2 + $0x7e] sm:$0xff]
      %v1955 = vld [vmem:[#allocation2 + $0x86] sm:$0xff]
      %v1956 = vld [vmem:[#allocation2 + $0x8e] sm:$0xff]
      %v1957 = vld [vmem:[#allocation2 + $0x96] sm:$0xff]
      %v1958 = vld [vmem:[#allocation2 + $0x9e] sm:$0xff]
      %v1959 = vld [vmem:[#allocation2 + $0xa6] sm:$0xff]
      %v1960 = vld [vmem:[#allocation2 + $0xae] sm:$0xff]
      %s1961 = scalar_lea.vmem %s1, 1024
      %v1962 = vld [vmem:[%s1961] sm:$0xff]
      %v1963 = vld [vmem:[%s1961 + $0x8] sm:$0xff]
      %v1964 = vld [vmem:[%s1961 + $0x10] sm:$0xff]
      %v1965 = vld [vmem:[%s1961 + $0x18] sm:$0xff]
      %v1966 = vld [vmem:[%s1961 + $0x20] sm:$0xff]
      %v1967 = vld [vmem:[%s1961 + $0x28] sm:$0xff]
      %v1968 = vld [vmem:[%s1961 + $0x30] sm:$0xff]
      %v1969 = vld [vmem:[%s1961 + $0x38] sm:$0xff]
      %v1970 = vld [vmem:[%s1961 + $0x40] sm:$0xff]
      %v1971 = vld [vmem:[%s1961 + $0x48] sm:$0xff]
      %v1972 = vld [vmem:[%s1961 + $0x50] sm:$0xff]
      %v1973 = vld [vmem:[%s1961 + $0x58] sm:$0xff]
      %v1974 = vld [vmem:[%s1961 + $0x60] sm:$0xff]
      %v1975 = vld [vmem:[%s1961 + $0x68] sm:$0xff]
      %v1976 = vld [vmem:[%s1961 + $0x70] sm:$0xff]
      %v1977 = vld [vmem:[%s1961 + $0x78] sm:$0xff]
      %1978 = vmatprep.subr.mxu0 0.0
      %1979 = vmatpush1.msra.mxu0 %v1977
      %1980 = vmatprep.subr.mxu0 0.0
      %1981 = vmatpush1.msra.mxu0 %v1976
      %1982 = vmatprep.subr.mxu0 0.0
      %1983 = vmatpush1.msra.mxu0 %v1975
      %1984 = vmatprep.subr.mxu0 0.0
      %1985 = vmatpush1.msra.mxu0 %v1974
      %1986 = vmatprep.subr.mxu0 0.0
      %1987 = vmatpush1.msra.mxu0 %v1973
      %1988 = vmatprep.subr.mxu0 0.0
      %1989 = vmatpush1.msra.mxu0 %v1972
      %1990 = vmatprep.subr.mxu0 0.0
      %1991 = vmatpush1.msra.mxu0 %v1971
      %1992 = vmatprep.subr.mxu0 0.0
      %1993 = vmatpush1.msra.mxu0 %v1970
      %1994 = vmatprep.subr.mxu0 0.0
      %1995 = vmatpush1.msra.mxu0 %v1969
      %1996 = vmatprep.subr.mxu0 0.0
      %1997 = vmatpush1.msra.mxu0 %v1968
      %1998 = vmatprep.subr.mxu0 0.0
      %1999 = vmatpush1.msra.mxu0 %v1967
      %2000 = vmatprep.subr.mxu0 0.0
      %2001 = vmatpush1.msra.mxu0 %v1966
      %2002 = vmatprep.subr.mxu0 0.0
      %2003 = vmatpush1.msra.mxu0 %v1965
      %2004 = vmatprep.subr.mxu0 0.0
      %2005 = vmatpush1.msra.mxu0 %v1964
      %2006 = vmatprep.subr.mxu0 0.0
      %2007 = vmatpush1.msra.mxu0 %v1963
      %2008 = vmatprep.subr.mxu0 0.0
      %2009 = vmatpush1.msra.mxu0 %v1962
      %2010 = vmatprep.subr.mxu0 0.0
      %2011 = vmatpush2.msra.mxu0 0.0
      %2012 = vmatprep.subr.mxu0 0.0
      %2013 = vmatpush2.msra.mxu0 0.0
      %2014 = vmatprep.subr.mxu0 0.0
      %2015 = vmatpush2.msra.mxu0 0.0
      %2016 = vmatprep.subr.mxu0 0.0
      %2017 = vmatpush2.msra.mxu0 0.0
      %2018 = vmatprep.subr.mxu0 0.0
      %2019 = vmatpush2.msra.mxu0 0.0
      %2020 = vmatprep.subr.mxu0 0.0
      %2021 = vmatpush2.msra.mxu0 0.0
      %2022 = vmatprep.subr.mxu0 0.0
      %2023 = vmatpush2.msra.mxu0 0.0
      %2024 = vmatprep.subr.mxu0 0.0
      %2025 = vmatpush2.msra.mxu0 0.0
      %2026 = vmatprep.subr.mxu0 0.0
      %2027 = vmatpush2.msra.mxu0 0.0
      %2028 = vmatprep.subr.mxu0 0.0
      %2029 = vmatpush2.msra.mxu0 0.0
      %2030 = vmatprep.subr.mxu0 0.0
      %2031 = vmatpush2.msra.mxu0 0.0
      %2032 = vmatprep.subr.mxu0 0.0
      %2033 = vmatpush2.msra.mxu0 0.0
      %2034 = vmatprep.subr.mxu0 0.0
      %2035 = vmatpush2.msra.mxu0 0.0
      %2036 = vmatprep.subr.mxu0 0.0
      %2037 = vmatpush2.msra.mxu0 0.0
      %2038 = vmatprep.subr.mxu0 0.0
      %2039 = vmatpush2.msra.mxu0 0.0
      %2040 = vmatprep.subr.mxu0 0.0
      %2041 = vmatpush2.msra.mxu0 0.0
      %2042 = vmatprep.mubr.f32.mxu0 0.0
      %2043 = vmatmul.mubr.f32.gmra.mxu0 %v1943
      %v2044 = vpop.f32.mrf.mxu0
      %v2045 = vadd.f32 0.0, %v2044
      %v2046 = vpop.f32.mrf.mxu0
      %2047 = vmatprep.mubr.f32.mxu0 0.0
      %2048 = vmatmul.mubr.f32.gmra.mxu0 %v1944
      %v2049 = vpop.f32.mrf.mxu0
      %v2050 = vadd.f32 0.0, %v2049
      %v2051 = vpop.f32.mrf.mxu0
      %2052 = vmatprep.mubr.f32.mxu0 0.0
      %2053 = vmatmul.mubr.f32.gmra.mxu0 %v1945
      %v2054 = vpop.f32.mrf.mxu0
      %v2055 = vadd.f32 0.0, %v2054
      %v2056 = vpop.f32.mrf.mxu0
      %2057 = vmatprep.mubr.f32.mxu0 0.0
      %2058 = vmatmul.mubr.f32.gmra.mxu0 %v1946
      %v2059 = vpop.f32.mrf.mxu0
      %v2060 = vadd.f32 0.0, %v2059
      %v2061 = vpop.f32.mrf.mxu0
      %2062 = vmatprep.mubr.f32.mxu0 0.0
      %2063 = vmatmul.mubr.f32.gmra.mxu0 %v1947
      %v2064 = vpop.f32.mrf.mxu0
      %v2065 = vadd.f32 0.0, %v2064
      %v2066 = vpop.f32.mrf.mxu0
      %2067 = vmatprep.mubr.f32.mxu0 0.0
      %2068 = vmatmul.mubr.f32.gmra.mxu0 %v1948
      %v2069 = vpop.f32.mrf.mxu0
      %v2070 = vadd.f32 0.0, %v2069
      %v2071 = vpop.f32.mrf.mxu0
      %2072 = vmatprep.mubr.f32.mxu0 0.0
      %2073 = vmatmul.mubr.f32.gmra.mxu0 %v1949
      %v2074 = vpop.f32.mrf.mxu0
      %v2075 = vadd.f32 0.0, %v2074
      %v2076 = vpop.f32.mrf.mxu0
      %2077 = vmatprep.mubr.f32.mxu0 0.0
      %2078 = vmatmul.mubr.f32.gmra.mxu0 %v1950
      %v2079 = vpop.f32.mrf.mxu0
      %v2080 = vadd.f32 0.0, %v2079
      %v2081 = vpop.f32.mrf.mxu0
      %2082 = vmatprep.mubr.f32.mxu0 0.0
      %2083 = vmatmul.mubr.f32.gmra.mxu0 %v1951
      %v2084 = vpop.f32.mrf.mxu0
      %v2085 = vadd.f32 0.0, %v2084
      %v2086 = vpop.f32.mrf.mxu0
      %2087 = vmatprep.mubr.f32.mxu0 0.0
      %2088 = vmatmul.mubr.f32.gmra.mxu0 %v1952
      %v2089 = vpop.f32.mrf.mxu0
      %v2090 = vadd.f32 0.0, %v2089
      %v2091 = vpop.f32.mrf.mxu0
      %2092 = vmatprep.mubr.f32.mxu0 0.0
      %2093 = vmatmul.mubr.f32.gmra.mxu0 %v1953
      %v2094 = vpop.f32.mrf.mxu0
      %v2095 = vadd.f32 0.0, %v2094
      %v2096 = vpop.f32.mrf.mxu0
      %2097 = vmatprep.mubr.f32.mxu0 0.0
      %2098 = vmatmul.mubr.f32.gmra.mxu0 %v1954
      %v2099 = vpop.f32.mrf.mxu0
      %v2100 = vadd.f32 0.0, %v2099
      %v2101 = vpop.f32.mrf.mxu0
      %2102 = vmatprep.mubr.f32.mxu0 0.0
      %2103 = vmatmul.mubr.f32.gmra.mxu0 %v1955
      %v2104 = vpop.f32.mrf.mxu0
      %v2105 = vadd.f32 0.0, %v2104
      %v2106 = vpop.f32.mrf.mxu0
      %2107 = vmatprep.mubr.f32.mxu0 0.0
      %2108 = vmatmul.mubr.f32.gmra.mxu0 %v1956
      %v2109 = vpop.f32.mrf.mxu0
      %v2110 = vadd.f32 0.0, %v2109
      %v2111 = vpop.f32.mrf.mxu0
      %2112 = vmatprep.mubr.f32.mxu0 0.0
      %2113 = vmatmul.mubr.f32.gmra.mxu0 %v1957
      %v2114 = vpop.f32.mrf.mxu0
      %v2115 = vadd.f32 0.0, %v2114
      %v2116 = vpop.f32.mrf.mxu0
      %2117 = vmatprep.mubr.f32.mxu0 0.0
      %2118 = vmatmul.mubr.f32.gmra.mxu0 %v1958
      %v2119 = vpop.f32.mrf.mxu0
      %v2120 = vadd.f32 0.0, %v2119
      %v2121 = vpop.f32.mrf.mxu0
      %2122 = vmatprep.mubr.f32.mxu0 0.0
      %2123 = vmatmul.mubr.f32.gmra.mxu0 %v1959
      %v2124 = vpop.f32.mrf.mxu0
      %v2125 = vadd.f32 0.0, %v2124
      %v2126 = vpop.f32.mrf.mxu0
      %2127 = vmatprep.mubr.f32.mxu0 0.0
      %2128 = vmatmul.mubr.f32.gmra.mxu0 %v1960
      %v2129 = vpop.f32.mrf.mxu0
      %v2130 = vadd.f32 0.0, %v2129
      %v2131 = vpop.f32.mrf.mxu0
      %2132 = vdwg.mxu0
      %v2133 = vadd.f32 %v1925, %v2045
      %v2134 = vadd.f32 %v1926, %v2050
      %v2135 = vadd.f32 %v1927, %v2055
      %v2136 = vadd.f32 %v1928, %v2060
      %v2137 = vadd.f32 %v1929, %v2065
      %v2138 = vadd.f32 %v1930, %v2070
      %v2139 = vadd.f32 %v1931, %v2075
      %v2140 = vadd.f32 %v1932, %v2080
      %v2141 = vadd.f32 %v1933, %v2085
      %v2142 = vadd.f32 %v1934, %v2090
      %v2143 = vadd.f32 %v1935, %v2095
      %v2144 = vadd.f32 %v1936, %v2100
      %v2145 = vadd.f32 %v1937, %v2105
      %v2146 = vadd.f32 %v1938, %v2110
      %v2147 = vadd.f32 %v1939, %v2115
      %v2148 = vadd.f32 %v1940, %v2120
      %v2149 = vadd.f32 %v1941, %v2125
      %v2150 = vadd.f32 %v1942, %v2130
      %v2151 = vld [vmem:[%s2] sm:$0x1]
      %v2153 = vlaneseq
      %v2154 = vshrl.u32 %v2153, 7
      %v2155 = vsub.s32 0, %v2154
      %v2156 = vrot.slane %v2151, %v2155
      %v2158 = vadd.f32 %v2133, %v2156
      %v2159 = vadd.f32 %v2134, %v2156
      %v2160 = vadd.f32 %v2135, %v2156
      %v2161 = vadd.f32 %v2136, %v2156
      %v2162 = vadd.f32 %v2137, %v2156
      %v2163 = vadd.f32 %v2138, %v2156
      %v2164 = vadd.f32 %v2139, %v2156
      %v2165 = vadd.f32 %v2140, %v2156
      %v2166 = vadd.f32 %v2141, %v2156
      %v2167 = vadd.f32 %v2142, %v2156
      %v2168 = vadd.f32 %v2143, %v2156
      %v2169 = vadd.f32 %v2144, %v2156
      %v2170 = vadd.f32 %v2145, %v2156
      %v2171 = vadd.f32 %v2146, %v2156
      %v2172 = vadd.f32 %v2147, %v2156
      %v2173 = vadd.f32 %v2148, %v2156
      %v2174 = vadd.f32 %v2149, %v2156
      %v2175 = vadd.f32 %v2150, %v2156
      %v2176 = vld [vmem:[%s199] sm:$0xff]
      %v2177 = vld [vmem:[%s199 + $0x8] sm:$0xff]
      %v2178 = vld [vmem:[%s199 + $0x10] sm:$0xff]
      %v2179 = vld [vmem:[%s199 + $0x18] sm:$0xff]
      %v2180 = vld [vmem:[%s199 + $0x20] sm:$0xff]
      %v2181 = vld [vmem:[%s199 + $0x28] sm:$0xff]
      %v2182 = vld [vmem:[%s199 + $0x30] sm:$0xff]
      %v2183 = vld [vmem:[%s199 + $0x38] sm:$0xff]
      %v2184 = vld [vmem:[%s199 + $0x40] sm:$0xff]
      %v2185 = vld [vmem:[%s199 + $0x48] sm:$0xff]
      %v2186 = vld [vmem:[%s199 + $0x50] sm:$0xff]
      %v2187 = vld [vmem:[%s199 + $0x58] sm:$0xff]
      %v2188 = vld [vmem:[%s199 + $0x60] sm:$0xff]
      %v2189 = vld [vmem:[%s199 + $0x68] sm:$0xff]
      %v2190 = vld [vmem:[%s199 + $0x70] sm:$0xff]
      %v2191 = vld [vmem:[%s199 + $0x78] sm:$0xff]
      %v2192 = vld [vmem:[%s199 + $0x80] sm:$0xff]
      %v2193 = vld [vmem:[%s199 + $0x88] sm:$0xff]
      %v2194 = vadd.f32 %v2158, %v2176
      %v2195 = vadd.f32 %v2159, %v2177
      %v2196 = vadd.f32 %v2160, %v2178
      %v2197 = vadd.f32 %v2161, %v2179
      %v2198 = vadd.f32 %v2162, %v2180
      %v2199 = vadd.f32 %v2163, %v2181
      %v2200 = vadd.f32 %v2164, %v2182
      %v2201 = vadd.f32 %v2165, %v2183
      %v2202 = vadd.f32 %v2166, %v2184
      %v2203 = vadd.f32 %v2167, %v2185
      %v2204 = vadd.f32 %v2168, %v2186
      %v2205 = vadd.f32 %v2169, %v2187
      %v2206 = vadd.f32 %v2170, %v2188
      %v2207 = vadd.f32 %v2171, %v2189
      %v2208 = vadd.f32 %v2172, %v2190
      %v2209 = vadd.f32 %v2173, %v2191
      %v2210 = vadd.f32 %v2174, %v2192
      %v2211 = vadd.f32 %v2175, %v2193
      %v2212 = vmax.f32 %v2194, 0.0
      %v2213 = vmax.f32 %v2195, 0.0
      %v2214 = vmax.f32 %v2196, 0.0
      %v2215 = vmax.f32 %v2197, 0.0
      %v2216 = vmax.f32 %v2198, 0.0
      %v2217 = vmax.f32 %v2199, 0.0
      %v2218 = vmax.f32 %v2200, 0.0
      %v2219 = vmax.f32 %v2201, 0.0
      %v2220 = vmax.f32 %v2202, 0.0
      %v2221 = vmax.f32 %v2203, 0.0
      %v2222 = vmax.f32 %v2204, 0.0
      %v2223 = vmax.f32 %v2205, 0.0
      %v2224 = vmax.f32 %v2206, 0.0
      %v2225 = vmax.f32 %v2207, 0.0
      %v2226 = vmax.f32 %v2208, 0.0
      %v2227 = vmax.f32 %v2209, 0.0
      %v2228 = vmax.f32 %v2210, 0.0
      %v2229 = vmax.f32 %v2211, 0.0
      %2230 = vst [vmem:[%s209] sm:$0xff] %v2212
      %2231 = vst [vmem:[%s209 + $0x8] sm:$0xff] %v2213
      %2232 = vst [vmem:[%s209 + $0x10] sm:$0xff] %v2214
      %2233 = vst [vmem:[%s209 + $0x18] sm:$0xff] %v2215
      %2234 = vst [vmem:[%s209 + $0x20] sm:$0xff] %v2216
      %2235 = vst [vmem:[%s209 + $0x28] sm:$0xff] %v2217
      %2236 = vst [vmem:[%s209 + $0x30] sm:$0xff] %v2218
      %2237 = vst [vmem:[%s209 + $0x38] sm:$0xff] %v2219
      %2238 = vst [vmem:[%s209 + $0x40] sm:$0xff] %v2220
      %2239 = vst [vmem:[%s209 + $0x48] sm:$0xff] %v2221
      %2240 = vst [vmem:[%s209 + $0x50] sm:$0xff] %v2222
      %2241 = vst [vmem:[%s209 + $0x58] sm:$0xff] %v2223
      %2242 = vst [vmem:[%s209 + $0x60] sm:$0xff] %v2224
      %2243 = vst [vmem:[%s209 + $0x68] sm:$0xff] %v2225
      %2244 = vst [vmem:[%s209 + $0x70] sm:$0xff] %v2226
      %2245 = vst [vmem:[%s209 + $0x78] sm:$0xff] %v2227
      %2246 = vst [vmem:[%s209 + $0x80] sm:$0xff] %v2228
      %2247 = vst [vmem:[%s209 + $0x88] sm:$0xff] %v2229
      %s2248 = smul.u32 18, %s20
      %p2249 = scmp.lt.s32.totalorder %s19, 1
      %s2250 = scalar_select %p2249, %s19, 1
      %p2251 = scmp.lt.s32.totalorder %s2248, 35
      %s2252 = scalar_select %p2251, %s2248, 35
      %s2253 = smul.addr %s2250, 36
      %s2254 = sadd.s32 %s2252, %s2253
      %s2255 = smul.addr %s2254, 8
      %s2256 = scalar_lea.vmem %s4, %s2255
      // Predicated region
      $region70: #{_lambda_.3} parent=31 // pred_check
        %p2257 = pneg %p117
      $region71: #{_lambda_.3} parent=31 // pred_check_branch
        %2259 = sbr.rel (%p2257) target = $region73
      $region72: #{_lambda_.3} parent=31 // pred_region
        %s2260 = smul.u32 18, %s20
      $region73: #{_lambda_.3} parent=31 // pred_fallthru
        _
    $region32: #{_lambda_.3} parent=5 // pred_fallthru
      _
    %p2261 = scmp.le.s32.totalorder 2, %s10
    // Predicated region
    $region74: #{_lambda_.3} parent=5 // pred_check
      %p2262 = pneg %p2261
    $region75: #{_lambda_.3} parent=5 // pred_check_branch
      %2264 = sbr.rel (%p2262) target = $region77
    $region76: #{_lambda_.3} parent=5 // pred_region
      %s2265 = ssub.s32 %s10, 2
      // Predicated region
      $region78: #{_lambda_.3} parent=76 // pred_check
        %p2266 = pneg %p123
      $region79: #{_lambda_.3} parent=76 // pred_check_branch
        %2268 = sbr.rel (%p2266) target = $region81
      $region80: #{_lambda_.3} parent=76 // pred_region
        %s2269 = smul.u32 18, %s22
        %p2270 = scmp.lt.s32.totalorder %s21, 1
        %s2271 = scalar_select %p2270, %s21, 1
        %p2272 = scmp.lt.s32.totalorder %s2269, 35
        %s2273 = scalar_select %p2272, %s2269, 35
        %s2274 = smul.addr %s2271, 36
        %s2275 = sadd.s32 %s2273, %s2274
        %s2276 = smul.addr %s2275, 8
        %s2277 = scalar_lea.vmem %s4, %s2276
      $region81: #{_lambda_.3} parent=76 // pred_fallthru
        _
    $region77: #{_lambda_.3} parent=5 // pred_fallthru
      _
  $region6: #{_lambda_.3} parent=0 // loop_footer
    %s14 = sadd.s32 1, %s10
  $region7: #{_lambda_.3} parent=0 // loop_footer_branch
    %9 = sbr.rel target = $region3
  $region8: #{_lambda_.3} parent=0 // loop_exit
    _
  %2278 = vsyncmov [#allocation3]
  %s2279 = vpop.sfrf %2278
  %p2280 = scmp.eq.s32.totalorder %s2279, 0
  %p2281 = pneg %p2280
  %2283 = shalt.err (%p2281)

</llo_original>
